<compile_context>
chip_gen: v7x
topology: tpu7x:2x2x1
jax: 0.10.0
libtpu: 0.0.40
codegen_flags: <defaults>
</compile_context>

<pallas_src>
import functools
import math

import jax
import jax.numpy as jnp
from jax.experimental import pallas as pl
from jax.experimental.pallas import tpu as pltpu

# ---- model hyper-parameters (small, consistent with the module's forward) ----
MAX_SEQ = 16          # max_seq == seq_len of the inputs
DIM_MODEL = 32
NUM_HEADS = 4
DIM_HEAD = DIM_MODEL // NUM_HEADS
DIM_FFN = 64
NUM_LAYERS = 2
BATCH = 2
LN_EPS = 1e-5         # nn.LayerNorm default
MASK_BIAS = -1e30     # large finite negative instead of -inf (no NaN hazard)

# packed small-parameter tensor: (N+1, SP_ROWS, SP_W); per-layer row indices
SP_W = 3 * DIM_MODEL  # 96 (widest row: fused qkv bias)
R_LN1_G, R_LN1_B, R_LN2_G, R_LN2_B, R_BQKV, R_BF1, R_BO, R_BF2 = range(8)
SP_ROWS = 8


# ----------------------------- in-kernel helpers ------------------------------
def _erf(x):
    # float32 polynomial erf (Abramowitz & Stegun 7.1.26, |err| < 1.5e-7), kept
    # in-kernel so exact (erf-based) GELU stays on the hot path.
    p = 0.3275911
    a1, a2, a3, a4, a5 = (0.254829592, -0.284496736, 1.421413741,
                          -1.453152027, 1.061405429)
    z = jnp.abs(x)
    t = 1.0 / (1.0 + p * z)
    poly = ((((a5 * t + a4) * t + a3) * t + a2) * t + a1) * t
    y = 1.0 - poly * jnp.exp(-z * z)
    return jnp.where(x >= 0, y, -y)


def _gelu_exact(x):
    # nn.GELU() default == exact (erf) GELU
    return 0.5 * x * (1.0 + _erf(x * (1.0 / math.sqrt(2.0))))


def _layernorm(x, gamma, beta):
    mu = jnp.mean(x, axis=-1, keepdims=True)
    var = jnp.mean(jnp.square(x - mu), axis=-1, keepdims=True)
    inv = jax.lax.rsqrt(var + LN_EPS)
    return (x - mu) * inv * gamma + beta


# --------------------------------- fused kernel --------------------------------
def encoder_kernel(x_ref, bias_ref, pos_ref,
                   wqkv_ref, wo_ref, w1_ref, w2_ref, sp_ref,
                   enc_ref, layers_ref, *, scale):
    S, D = MAX_SEQ, DIM_MODEL
    H, DH, F = NUM_HEADS, DIM_HEAD, DIM_FFN

    # x = dropout(scale * inputs + positional_embedding)  (dropout = identity)
    x = scale * x_ref[0] + pos_ref[...]            # [S, D]
    bias = bias_ref[0]                             # additive mask bias [S, S]

    for l in range(NUM_LAYERS):                    # static unroll (N = 2)
        sp = sp_ref[l]                             # (SP_ROWS, SP_W) packed params

        # ------------- pre-LN 1 + multi-head self attention -------------------
        ln1 = _layernorm(x, sp[R_LN1_G:R_LN1_G + 1, :D], sp[R_LN1_B:R_LN1_B + 1, :D])

        # fused QKV projection: single (S, D) @ (D, 3D) MXU push.
        # 1/sqrt(DH) already folded into the Q columns / Q bias at init time.
        qkv = (jnp.dot(ln1, wqkv_ref[l], preferred_element_type=jnp.float32)
               + sp[R_BQKV:R_BQKV + 1, :])         # (S, 3D)

        # per-head attention on static lane slices of the fused qkv slab
        o_parts = []
        for h in range(H):
            qh = qkv[:, h * DH:(h + 1) * DH]                   # (S, DH), pre-scaled
            kh = qkv[:, D + h * DH:D + (h + 1) * DH]           # (S, DH)
            vh = qkv[:, 2 * D + h * DH:2 * D + (h + 1) * DH]   # (S, DH)
            s = jax.lax.dot_general(qh, kh, (((1,), (1,)), ((), ())),
                                    preferred_element_type=jnp.float32)  # (S, S)
            s = s + bias                           # masked_fill == additive bias
            m = jnp.max(s, axis=-1, keepdims=True)
            e = jnp.exp(s - m)
            p_attn = e * pl.reciprocal(jnp.sum(e, axis=-1, keepdims=True),
                                       approx=True)
            o_parts.append(jnp.dot(p_attn, vh,
                                   preferred_element_type=jnp.float32))  # (S, DH)

        # concat over heads (lane concat) then ONE output-projection matmul
        o_cat = jnp.concatenate(o_parts, axis=-1)                        # (S, D)
        mha = (jnp.dot(o_cat, wo_ref[l], preferred_element_type=jnp.float32)
               + sp[R_BO:R_BO + 1, :D])

        residual = mha + x                         # dropout = identity

        # ----------------------------- pre-LN 2 + FFN --------------------------
        ln2 = _layernorm(residual, sp[R_LN2_G:R_LN2_G + 1, :D],
                         sp[R_LN2_B:R_LN2_B + 1, :D])
        h1 = (jnp.dot(ln2, w1_ref[l], preferred_element_type=jnp.float32)
              + sp[R_BF1:R_BF1 + 1, :F])
        h1 = _gelu_exact(h1)
        h2 = (jnp.dot(h1, w2_ref[l], preferred_element_type=jnp.float32)
              + sp[R_BF2:R_BF2 + 1, :D])
        x = h2 + residual

        layers_ref[l, 0] = x                       # layer_output[l, b]

    spf = sp_ref[NUM_LAYERS]                       # final LayerNorm params
    enc_ref[0] = _layernorm(x, spf[0:1, :D], spf[1:2, :D])


# ------------------------------ pallas wrapper ----------------------------------
def encoder_forward(inputs, mask, params):
    B, S, D = inputs.shape
    N, F = NUM_LAYERS, DIM_FFN

    # TODO(synk): reference computes self.scale = torch.sqrt(torch.Tensor(dim_model))
    # (an uninitialized length-512 tensor, a bug); we use the intended scalar sqrt(D).
    scale = math.sqrt(float(D))
    # additive mask bias precomputed once in the wrapper (0 keep / -1e30 masked)
    bias = jnp.where(mask == 0.0, jnp.float32(MASK_BIAS), jnp.float32(0.0))

    def full(shape):
        return pl.BlockSpec(shape, lambda b, _n=len(shape): (0,) * _n)

    in_specs = [
        pl.BlockSpec((1, S, D), lambda b: (b, 0, 0)),    # inputs
        pl.BlockSpec((1, S, S), lambda b: (b, 0, 0)),    # additive mask bias
        full((S, D)),                                    # positional embedding
        full((N, D, 3 * D)),                             # fused QKV weights
        full((N, D, D)),                                 # Wo (unsplit)
        full((N, D, F)),                                 # FFN1 weight
        full((N, F, D)),                                 # FFN2 weight
        full((N + 1, SP_ROWS, SP_W)),                    # packed small params
    ]
    out_specs = (
        pl.BlockSpec((1, S, D), lambda b: (b, 0, 0)),        # encoded
        pl.BlockSpec((N, 1, S, D), lambda b: (0, b, 0, 0)),  # layer_output
    )

    encoded, layer_output = pl.pallas_call(
        functools.partial(encoder_kernel, scale=scale),
        out_shape=(jax.ShapeDtypeStruct((B, S, D), jnp.float32),
                   jax.ShapeDtypeStruct((N, B, S, D), jnp.float32)),
        grid=(B,),
        in_specs=in_specs,
        out_specs=out_specs,
        compiler_params=pltpu.CompilerParams(dimension_semantics=("parallel",)),
    )(inputs, bias, params["pos"], params["wqkv"], params["wo"],
      params["w_ffn1"], params["w_ffn2"], params["smallp"])
    return encoded, layer_output


# ------------------------------ parameter init -----------------------------------
def init_params(key):
    D, F, S, H, DH, N = DIM_MODEL, DIM_FFN, MAX_SEQ, NUM_HEADS, DIM_HEAD, NUM_LAYERS
    keys = jax.random.split(key, 1 + N)

    def lin(kk, fan_in, fan_out):
        bound = 1.0 / math.sqrt(fan_in)
        return jax.random.uniform(kk, (fan_in, fan_out), jnp.float32, -bound, bound)

    # TODO(synk): reference's pos_x = arange(max_seq).repeat(batch) only broadcasts
    # for batch == 1; we implement the intended per-position embedding add.
    pos = 0.02 * jax.random.normal(keys[0], (S, D), jnp.float32)

    inv_dot = 1.0 / math.sqrt(float(DH))

    def pad_row(v):
        return jnp.pad(v, (0, SP_W - v.shape[0]))

    raw_layers = []
    wqkv_l, wo_l, w1_l, w2_l, sp_l = [], [], [], [], []
    for i in range(N):
        k = jax.random.split(keys[1 + i], 12)
        # per-head Linear(D, DH) weights concatenated along columns
        # (head h -> columns h*DH:(h+1)*DH), matching the PyTorch concat order.
        wq = lin(k[0], D, D); bq = 0.01 * jax.random.normal(k[1], (D,), jnp.float32)
        wk = lin(k[2], D, D); bk = 0.01 * jax.random.normal(k[3], (D,), jnp.float32)
        wv = lin(k[4], D, D); bv = 0.01 * jax.random.normal(k[5], (D,), jnp.float32)
        wo = lin(k[6], D, D); bo = 0.01 * jax.random.normal(k[7], (D,), jnp.float32)
        w1 = lin(k[8], D, F); b1 = 0.01 * jax.random.normal(k[9], (F,), jnp.float32)
        w2 = lin(k[10], F, D); b2 = 0.01 * jax.random.normal(k[11], (D,), jnp.float32)
        ln1_g = jnp.ones(D, jnp.float32); ln1_b = jnp.zeros(D, jnp.float32)
        ln2_g = jnp.ones(D, jnp.float32); ln2_b = jnp.zeros(D, jnp.float32)

        raw_layers.append(dict(wq=wq, bq=bq, wk=wk, bk=bk, wv=wv, bv=bv,
                               wo=wo, bo=bo, w1=w1, b1=b1, w2=w2, b2=b2,
                               ln1_g=ln1_g, ln1_b=ln1_b, ln2_g=ln2_g, ln2_b=ln2_b))

        # fused QKV weight (D, 3D) = [Q | K | V]; 1/sqrt(DH) folded into Q
        wqkv_l.append(jnp.concatenate([wq * inv_dot, wk, wv], axis=1))
        wo_l.append(wo)
        w1_l.append(w1)
        w2_l.append(w2)

        bqkv = jnp.concatenate([bq * inv_dot, bk, bv])        # (3D,)
        rows = [pad_row(ln1_g), pad_row(ln1_b), pad_row(ln2_g), pad_row(ln2_b),
                bqkv, pad_row(b1), pad_row(bo), pad_row(b2)]
        sp_l.append(jnp.stack(rows))                          # (8, 3D)

    lnf_g = jnp.ones(D, jnp.float32); lnf_b = jnp.zeros(D, jnp.float32)
    sp_final = jnp.zeros((SP_ROWS, SP_W), jnp.float32)
    sp_final = sp_final.at[0, :D].set(lnf_g).at[1, :D].set(lnf_b)
    sp_l.append(sp_final)

    kernel_params = {
        "pos": pos,
        "wqkv": jnp.stack(wqkv_l),     # (N, D, 3D)
        "wo": jnp.stack(wo_l),         # (N, D, D)
        "w_ffn1": jnp.stack(w1_l),     # (N, D, F)
        "w_ffn2": jnp.stack(w2_l),     # (N, F, D)
        "smallp": jnp.stack(sp_l),     # (N+1, 8, 3D)
    }
    raw_params = {"pos": pos, "layers": raw_layers, "lnf_g": lnf_g, "lnf_b": lnf_b}
    return kernel_params, raw_params


# ------------------------- pure-JAX reference (for checking) ---------------------
def _ref_layernorm(x, g, b):
    mu = jnp.mean(x, axis=-1, keepdims=True)
    var = jnp.mean(jnp.square(x - mu), axis=-1, keepdims=True)
    return (x - mu) * jax.lax.rsqrt(var + LN_EPS) * g + b


def encoder_reference(inputs, mask, raw):
    B, S, D = inputs.shape
    x = math.sqrt(float(D)) * inputs + raw["pos"][None]
    outs = []
    for l in range(NUM_LAYERS):
        p = raw["layers"][l]
        ln1 = _ref_layernorm(x, p["ln1_g"], p["ln1_b"])
        heads = []
        for h in range(NUM_HEADS):
            sl = slice(h * DIM_HEAD, (h + 1) * DIM_HEAD)
            q = jnp.einsum("bsd,de->bse", ln1, p["wq"][:, sl]) + p["bq"][sl]
            k = jnp.einsum("bsd,de->bse", ln1, p["wk"][:, sl]) + p["bk"][sl]
            v = jnp.einsum("bsd,de->bse", ln1, p["wv"][:, sl]) + p["bv"][sl]
            s = jnp.einsum("bqd,bkd->bqk", q, k) / math.sqrt(float(DIM_HEAD))
            s = jnp.where(mask == 0.0, -jnp.inf, s)
            a = jax.nn.softmax(s, axis=-1)
            heads.append(jnp.einsum("bqk,bkd->bqd", a, v))
        cat = jnp.concatenate(heads, axis=-1)
        mha = jnp.einsum("bsd,de->bse", cat, p["wo"]) + p["bo"]
        res = mha + x
        ln2 = _ref_layernorm(res, p["ln2_g"], p["ln2_b"])
        h1 = jax.nn.gelu(jnp.einsum("bsd,df->bsf", ln2, p["w1"]) + p["b1"],
                         approximate=False)
        x = jnp.einsum("bsf,fd->bsd", h1, p["w2"]) + p["b2"] + res
        outs.append(x)
    enc = _ref_layernorm(x, raw["lnf_g"], raw["lnf_b"])
    return enc, jnp.stack(outs, axis=0)


# ----------------------------------- main ----------------------------------------
if __name__ == "__main__":
    key = jax.random.PRNGKey(0)
    k_in, k_p = jax.random.split(key)

    inputs = jax.random.normal(k_in, (BATCH, MAX_SEQ, DIM_MODEL), jnp.float32)

    # padding mask [B, S, S]: batch 0 fully valid, batch 1 has last 4 tokens padded
    col = jnp.arange(MAX_SEQ)
    lens = [MAX_SEQ, MAX_SEQ - 4]
    mask = jnp.stack(
        [jnp.broadcast_to((col < L), (MAX_SEQ, MAX_SEQ)).astype(jnp.float32)
         for L in lens], axis=0)

    kernel_params, raw_params = init_params(k_p)

    encoded, layer_output = encoder_forward(inputs, mask, kernel_params)
    jax.block_until_ready((encoded, layer_output))

    assert encoded.shape == (BATCH, MAX_SEQ, DIM_MODEL)
    assert layer_output.shape == (NUM_LAYERS, BATCH, MAX_SEQ, DIM_MODEL)
    assert bool(jnp.all(jnp.isfinite(encoded)))
    assert bool(jnp.all(jnp.isfinite(layer_output)))

    # numerical check vs. a pure-JAX reference of the same (pre-LN) forward pass
    ref_enc, ref_layers = encoder_reference(inputs, mask, raw_params)
    assert bool(jnp.allclose(encoded, ref_enc, atol=2e-2, rtol=2e-2))
    assert bool(jnp.allclose(layer_output, ref_layers, atol=2e-2, rtol=2e-2))

    print("KERNEL_OK")
</pallas_src>

<mosaic_0001>
module attributes {stable_mosaic.version = 11 : i64} {
  func.func @encoder_kernel(%arg0: i32, %arg1: memref<1x16x32xf32, #tpu.memory_space<vmem>>, %arg2: memref<1x16x16xf32, #tpu.memory_space<vmem>>, %arg3: memref<16x32xf32, #tpu.memory_space<vmem>>, %arg4: memref<2x32x96xf32, #tpu.memory_space<vmem>>, %arg5: memref<2x32x32xf32, #tpu.memory_space<vmem>>, %arg6: memref<2x32x64xf32, #tpu.memory_space<vmem>>, %arg7: memref<2x64x32xf32, #tpu.memory_space<vmem>>, %arg8: memref<3x8x96xf32, #tpu.memory_space<vmem>>, %arg9: memref<1x16x32xf32, #tpu.memory_space<vmem>>, %arg10: memref<2x1x16x32xf32, #tpu.memory_space<vmem>>) attributes {dimension_semantics = [#tpu.dimension_semantics<parallel>], iteration_bounds = array<i64: 2>, scalar_prefetch = 0 : i64, scratch_operands = 0 : i64, tpu.core_type = #tpu.core_type<tc>, window_params = [{transform_indices = @transform_0, window_bounds = array<i64: 1, 16, 32>}, {transform_indices = @transform_1, window_bounds = array<i64: 1, 16, 16>}, {pipeline_mode = #tpu.pipeline_mode<synchronous>, transform_indices = @transform_2, window_bounds = array<i64: 16, 32>}, {pipeline_mode = #tpu.pipeline_mode<synchronous>, transform_indices = @transform_3, window_bounds = array<i64: 2, 32, 96>}, {pipeline_mode = #tpu.pipeline_mode<synchronous>, transform_indices = @transform_4, window_bounds = array<i64: 2, 32, 32>}, {pipeline_mode = #tpu.pipeline_mode<synchronous>, transform_indices = @transform_5, window_bounds = array<i64: 2, 32, 64>}, {pipeline_mode = #tpu.pipeline_mode<synchronous>, transform_indices = @transform_6, window_bounds = array<i64: 2, 64, 32>}, {pipeline_mode = #tpu.pipeline_mode<synchronous>, transform_indices = @transform_7, window_bounds = array<i64: 3, 8, 96>}, {transform_indices = @transform_8, window_bounds = array<i64: 1, 16, 32>}, {transform_indices = @transform_9, window_bounds = array<i64: 2, 1, 16, 32>}]} {
    %c0 = arith.constant 0 : index
    %c0_0 = arith.constant 0 : index
    %c0_1 = arith.constant 0 : index
    %0 = vector.load %arg1[%c0, %c0_0, %c0_1] : memref<1x16x32xf32, #tpu.memory_space<vmem>>, vector<1x16x32xf32>
    %1 = vector.shape_cast %0 : vector<1x16x32xf32> to vector<16x32xf32>
    %cst = arith.constant 5.65685415 : f32
    %2 = vector.broadcast %cst : f32 to vector<16x32xf32>
    %3 = arith.mulf %2, %1 : vector<16x32xf32>
    %c0_2 = arith.constant 0 : index
    %c0_3 = arith.constant 0 : index
    %4 = vector.load %arg3[%c0_2, %c0_3] : memref<16x32xf32, #tpu.memory_space<vmem>>, vector<16x32xf32>
    %5 = arith.addf %3, %4 : vector<16x32xf32>
    %c0_4 = arith.constant 0 : index
    %c0_5 = arith.constant 0 : index
    %c0_6 = arith.constant 0 : index
    %6 = vector.load %arg2[%c0_4, %c0_5, %c0_6] : memref<1x16x16xf32, #tpu.memory_space<vmem>>, vector<1x16x16xf32>
    %7 = vector.shape_cast %6 : vector<1x16x16xf32> to vector<16x16xf32>
    %c0_7 = arith.constant 0 : index
    %c0_8 = arith.constant 0 : index
    %c0_9 = arith.constant 0 : index
    %8 = vector.load %arg8[%c0_7, %c0_8, %c0_9] : memref<3x8x96xf32, #tpu.memory_space<vmem>>, vector<1x8x96xf32>
    %9 = vector.shape_cast %8 : vector<1x8x96xf32> to vector<8x96xf32>
    %10 = vector.extract_strided_slice %9 {offsets = [0, 0], sizes = [1, 32], strides = [1, 1]} : vector<8x96xf32> to vector<1x32xf32>
    %11 = vector.extract_strided_slice %9 {offsets = [1, 0], sizes = [1, 32], strides = [1, 1]} : vector<8x96xf32> to vector<1x32xf32>
    %cst_10 = arith.constant dense<0.000000e+00> : vector<16xf32>
    %12 = vector.multi_reduction <add>, %5, %cst_10 [1] : vector<16x32xf32> to vector<16xf32>
    %13 = vector.shape_cast %12 : vector<16xf32> to vector<16x1xf32>
    %cst_11 = arith.constant 3.200000e+01 : f32
    %14 = vector.broadcast %cst_11 : f32 to vector<16x1xf32>
    %15 = arith.divf %13, %14 : vector<16x1xf32>
    %16 = vector.broadcast %15 : vector<16x1xf32> to vector<16x32xf32>
    %17 = arith.subf %5, %16 : vector<16x32xf32>
    %18 = arith.mulf %17, %17 : vector<16x32xf32>
    %cst_12 = arith.constant dense<0.000000e+00> : vector<16xf32>
    %19 = vector.multi_reduction <add>, %18, %cst_12 [1] : vector<16x32xf32> to vector<16xf32>
    %20 = vector.shape_cast %19 : vector<16xf32> to vector<16x1xf32>
    %cst_13 = arith.constant 3.200000e+01 : f32
    %21 = vector.broadcast %cst_13 : f32 to vector<16x1xf32>
    %22 = arith.divf %20, %21 : vector<16x1xf32>
    %cst_14 = arith.constant 9.99999974E-6 : f32
    %23 = vector.broadcast %cst_14 : f32 to vector<16x1xf32>
    %24 = arith.addf %22, %23 : vector<16x1xf32>
    %25 = math.rsqrt %24 : vector<16x1xf32>
    %26 = vector.broadcast %15 : vector<16x1xf32> to vector<16x32xf32>
    %27 = arith.subf %5, %26 : vector<16x32xf32>
    %28 = vector.broadcast %25 : vector<16x1xf32> to vector<16x32xf32>
    %29 = arith.mulf %27, %28 : vector<16x32xf32>
    %30 = vector.broadcast %10 : vector<1x32xf32> to vector<16x32xf32>
    %31 = arith.mulf %29, %30 : vector<16x32xf32>
    %32 = vector.broadcast %11 : vector<1x32xf32> to vector<16x32xf32>
    %33 = arith.addf %31, %32 : vector<16x32xf32>
    %c0_15 = arith.constant 0 : index
    %c0_16 = arith.constant 0 : index
    %c0_17 = arith.constant 0 : index
    %34 = vector.load %arg4[%c0_15, %c0_16, %c0_17] : memref<2x32x96xf32, #tpu.memory_space<vmem>>, vector<1x32x96xf32>
    %35 = vector.shape_cast %34 : vector<1x32x96xf32> to vector<32x96xf32>
    %cst_18 = arith.constant dense<0.000000e+00> : vector<16x96xf32>
    %36 = tpu.matmul %33, %35, %cst_18 {dimension_numbers = #tpu.dot_dimension_numbers<[1], [0], [0], [1], [0, 0, 1, 1], [], []>} : vector<16x32xf32>, vector<32x96xf32>, vector<16x96xf32> -> vector<16x96xf32>
    %37 = vector.extract_strided_slice %9 {offsets = [4, 0], sizes = [1, 96], strides = [1, 1]} : vector<8x96xf32> to vector<1x96xf32>
    %38 = vector.broadcast %37 : vector<1x96xf32> to vector<16x96xf32>
    %39 = arith.addf %36, %38 : vector<16x96xf32>
    %40 = vector.extract_strided_slice %39 {offsets = [0, 0], sizes = [16, 8], strides = [1, 1]} : vector<16x96xf32> to vector<16x8xf32>
    %41 = vector.extract_strided_slice %39 {offsets = [0, 32], sizes = [16, 8], strides = [1, 1]} : vector<16x96xf32> to vector<16x8xf32>
    %42 = vector.extract_strided_slice %39 {offsets = [0, 64], sizes = [16, 8], strides = [1, 1]} : vector<16x96xf32> to vector<16x8xf32>
    %cst_19 = arith.constant dense<0.000000e+00> : vector<16x16xf32>
    %43 = tpu.matmul %40, %41, %cst_19 {dimension_numbers = #tpu.dot_dimension_numbers<[1], [1], [0], [0], [0, 0, 1, 0], [], []>} : vector<16x8xf32>, vector<16x8xf32>, vector<16x16xf32> -> vector<16x16xf32>
    %44 = arith.addf %43, %7 : vector<16x16xf32>
    %cst_20 = arith.constant dense<0xFF800000> : vector<16xf32>
    %45 = vector.multi_reduction <maximumf>, %44, %cst_20 [1] : vector<16x16xf32> to vector<16xf32>
    %46 = vector.shape_cast %45 : vector<16xf32> to vector<16x1xf32>
    %47 = vector.broadcast %46 : vector<16x1xf32> to vector<16x16xf32>
    %48 = arith.subf %44, %47 : vector<16x16xf32>
    %49 = math.exp %48 : vector<16x16xf32>
    %cst_21 = arith.constant dense<0.000000e+00> : vector<16xf32>
    %50 = vector.multi_reduction <add>, %49, %cst_21 [1] : vector<16x16xf32> to vector<16xf32>
    %51 = vector.shape_cast %50 : vector<16xf32> to vector<16x1xf32>
    %52 = tpu.reciprocal %51 {approx = true} : vector<16x1xf32> -> vector<16x1xf32>
    %53 = vector.broadcast %52 : vector<16x1xf32> to vector<16x16xf32>
    %54 = arith.mulf %49, %53 : vector<16x16xf32>
    %cst_22 = arith.constant dense<0.000000e+00> : vector<16x8xf32>
    %55 = tpu.matmul %54, %42, %cst_22 {dimension_numbers = #tpu.dot_dimension_numbers<[1], [0], [0], [1], [0, 0, 1, 1], [], []>} : vector<16x16xf32>, vector<16x8xf32>, vector<16x8xf32> -> vector<16x8xf32>
    %56 = vector.extract_strided_slice %39 {offsets = [0, 8], sizes = [16, 8], strides = [1, 1]} : vector<16x96xf32> to vector<16x8xf32>
    %57 = vector.extract_strided_slice %39 {offsets = [0, 40], sizes = [16, 8], strides = [1, 1]} : vector<16x96xf32> to vector<16x8xf32>
    %58 = vector.extract_strided_slice %39 {offsets = [0, 72], sizes = [16, 8], strides = [1, 1]} : vector<16x96xf32> to vector<16x8xf32>
    %cst_23 = arith.constant dense<0.000000e+00> : vector<16x16xf32>
    %59 = tpu.matmul %56, %57, %cst_23 {dimension_numbers = #tpu.dot_dimension_numbers<[1], [1], [0], [0], [0, 0, 1, 0], [], []>} : vector<16x8xf32>, vector<16x8xf32>, vector<16x16xf32> -> vector<16x16xf32>
    %60 = arith.addf %59, %7 : vector<16x16xf32>
    %cst_24 = arith.constant dense<0xFF800000> : vector<16xf32>
    %61 = vector.multi_reduction <maximumf>, %60, %cst_24 [1] : vector<16x16xf32> to vector<16xf32>
    %62 = vector.shape_cast %61 : vector<16xf32> to vector<16x1xf32>
    %63 = vector.broadcast %62 : vector<16x1xf32> to vector<16x16xf32>
    %64 = arith.subf %60, %63 : vector<16x16xf32>
    %65 = math.exp %64 : vector<16x16xf32>
    %cst_25 = arith.constant dense<0.000000e+00> : vector<16xf32>
    %66 = vector.multi_reduction <add>, %65, %cst_25 [1] : vector<16x16xf32> to vector<16xf32>
    %67 = vector.shape_cast %66 : vector<16xf32> to vector<16x1xf32>
    %68 = tpu.reciprocal %67 {approx = true} : vector<16x1xf32> -> vector<16x1xf32>
    %69 = vector.broadcast %68 : vector<16x1xf32> to vector<16x16xf32>
    %70 = arith.mulf %65, %69 : vector<16x16xf32>
    %cst_26 = arith.constant dense<0.000000e+00> : vector<16x8xf32>
    %71 = tpu.matmul %70, %58, %cst_26 {dimension_numbers = #tpu.dot_dimension_numbers<[1], [0], [0], [1], [0, 0, 1, 1], [], []>} : vector<16x16xf32>, vector<16x8xf32>, vector<16x8xf32> -> vector<16x8xf32>
    %72 = vector.extract_strided_slice %39 {offsets = [0, 16], sizes = [16, 8], strides = [1, 1]} : vector<16x96xf32> to vector<16x8xf32>
    %73 = vector.extract_strided_slice %39 {offsets = [0, 48], sizes = [16, 8], strides = [1, 1]} : vector<16x96xf32> to vector<16x8xf32>
    %74 = vector.extract_strided_slice %39 {offsets = [0, 80], sizes = [16, 8], strides = [1, 1]} : vector<16x96xf32> to vector<16x8xf32>
    %cst_27 = arith.constant dense<0.000000e+00> : vector<16x16xf32>
    %75 = tpu.matmul %72, %73, %cst_27 {dimension_numbers = #tpu.dot_dimension_numbers<[1], [1], [0], [0], [0, 0, 1, 0], [], []>} : vector<16x8xf32>, vector<16x8xf32>, vector<16x16xf32> -> vector<16x16xf32>
    %76 = arith.addf %75, %7 : vector<16x16xf32>
    %cst_28 = arith.constant dense<0xFF800000> : vector<16xf32>
    %77 = vector.multi_reduction <maximumf>, %76, %cst_28 [1] : vector<16x16xf32> to vector<16xf32>
    %78 = vector.shape_cast %77 : vector<16xf32> to vector<16x1xf32>
    %79 = vector.broadcast %78 : vector<16x1xf32> to vector<16x16xf32>
    %80 = arith.subf %76, %79 : vector<16x16xf32>
    %81 = math.exp %80 : vector<16x16xf32>
    %cst_29 = arith.constant dense<0.000000e+00> : vector<16xf32>
    %82 = vector.multi_reduction <add>, %81, %cst_29 [1] : vector<16x16xf32> to vector<16xf32>
    %83 = vector.shape_cast %82 : vector<16xf32> to vector<16x1xf32>
    %84 = tpu.reciprocal %83 {approx = true} : vector<16x1xf32> -> vector<16x1xf32>
    %85 = vector.broadcast %84 : vector<16x1xf32> to vector<16x16xf32>
    %86 = arith.mulf %81, %85 : vector<16x16xf32>
    %cst_30 = arith.constant dense<0.000000e+00> : vector<16x8xf32>
    %87 = tpu.matmul %86, %74, %cst_30 {dimension_numbers = #tpu.dot_dimension_numbers<[1], [0], [0], [1], [0, 0, 1, 1], [], []>} : vector<16x16xf32>, vector<16x8xf32>, vector<16x8xf32> -> vector<16x8xf32>
    %88 = vector.extract_strided_slice %39 {offsets = [0, 24], sizes = [16, 8], strides = [1, 1]} : vector<16x96xf32> to vector<16x8xf32>
    %89 = vector.extract_strided_slice %39 {offsets = [0, 56], sizes = [16, 8], strides = [1, 1]} : vector<16x96xf32> to vector<16x8xf32>
    %90 = vector.extract_strided_slice %39 {offsets = [0, 88], sizes = [16, 8], strides = [1, 1]} : vector<16x96xf32> to vector<16x8xf32>
    %cst_31 = arith.constant dense<0.000000e+00> : vector<16x16xf32>
    %91 = tpu.matmul %88, %89, %cst_31 {dimension_numbers = #tpu.dot_dimension_numbers<[1], [1], [0], [0], [0, 0, 1, 0], [], []>} : vector<16x8xf32>, vector<16x8xf32>, vector<16x16xf32> -> vector<16x16xf32>
    %92 = arith.addf %91, %7 : vector<16x16xf32>
    %cst_32 = arith.constant dense<0xFF800000> : vector<16xf32>
    %93 = vector.multi_reduction <maximumf>, %92, %cst_32 [1] : vector<16x16xf32> to vector<16xf32>
    %94 = vector.shape_cast %93 : vector<16xf32> to vector<16x1xf32>
    %95 = vector.broadcast %94 : vector<16x1xf32> to vector<16x16xf32>
    %96 = arith.subf %92, %95 : vector<16x16xf32>
    %97 = math.exp %96 : vector<16x16xf32>
    %cst_33 = arith.constant dense<0.000000e+00> : vector<16xf32>
    %98 = vector.multi_reduction <add>, %97, %cst_33 [1] : vector<16x16xf32> to vector<16xf32>
    %99 = vector.shape_cast %98 : vector<16xf32> to vector<16x1xf32>
    %100 = tpu.reciprocal %99 {approx = true} : vector<16x1xf32> -> vector<16x1xf32>
    %101 = vector.broadcast %100 : vector<16x1xf32> to vector<16x16xf32>
    %102 = arith.mulf %97, %101 : vector<16x16xf32>
    %cst_34 = arith.constant dense<0.000000e+00> : vector<16x8xf32>
    %103 = tpu.matmul %102, %90, %cst_34 {dimension_numbers = #tpu.dot_dimension_numbers<[1], [0], [0], [1], [0, 0, 1, 1], [], []>} : vector<16x16xf32>, vector<16x8xf32>, vector<16x8xf32> -> vector<16x8xf32>
    %104 = tpu.concatenate %55, %71, %87, %103 in 1 : vector<16x8xf32>, vector<16x8xf32>, vector<16x8xf32>, vector<16x8xf32> -> vector<16x32xf32>
    %c0_35 = arith.constant 0 : index
    %c0_36 = arith.constant 0 : index
    %c0_37 = arith.constant 0 : index
    %105 = vector.load %arg5[%c0_35, %c0_36, %c0_37] : memref<2x32x32xf32, #tpu.memory_space<vmem>>, vector<1x32x32xf32>
    %106 = vector.shape_cast %105 : vector<1x32x32xf32> to vector<32x32xf32>
    %cst_38 = arith.constant dense<0.000000e+00> : vector<16x32xf32>
    %107 = tpu.matmul %104, %106, %cst_38 {dimension_numbers = #tpu.dot_dimension_numbers<[1], [0], [0], [1], [0, 0, 1, 1], [], []>} : vector<16x32xf32>, vector<32x32xf32>, vector<16x32xf32> -> vector<16x32xf32>
    %108 = vector.extract_strided_slice %9 {offsets = [6, 0], sizes = [1, 32], strides = [1, 1]} : vector<8x96xf32> to vector<1x32xf32>
    %109 = vector.broadcast %108 : vector<1x32xf32> to vector<16x32xf32>
    %110 = arith.addf %107, %109 : vector<16x32xf32>
    %111 = arith.addf %110, %5 : vector<16x32xf32>
    %112 = vector.extract_strided_slice %9 {offsets = [2, 0], sizes = [1, 32], strides = [1, 1]} : vector<8x96xf32> to vector<1x32xf32>
    %113 = vector.extract_strided_slice %9 {offsets = [3, 0], sizes = [1, 32], strides = [1, 1]} : vector<8x96xf32> to vector<1x32xf32>
    %cst_39 = arith.constant dense<0.000000e+00> : vector<16xf32>
    %114 = vector.multi_reduction <add>, %111, %cst_39 [1] : vector<16x32xf32> to vector<16xf32>
    %115 = vector.shape_cast %114 : vector<16xf32> to vector<16x1xf32>
    %cst_40 = arith.constant 3.200000e+01 : f32
    %116 = vector.broadcast %cst_40 : f32 to vector<16x1xf32>
    %117 = arith.divf %115, %116 : vector<16x1xf32>
    %118 = vector.broadcast %117 : vector<16x1xf32> to vector<16x32xf32>
    %119 = arith.subf %111, %118 : vector<16x32xf32>
    %120 = arith.mulf %119, %119 : vector<16x32xf32>
    %cst_41 = arith.constant dense<0.000000e+00> : vector<16xf32>
    %121 = vector.multi_reduction <add>, %120, %cst_41 [1] : vector<16x32xf32> to vector<16xf32>
    %122 = vector.shape_cast %121 : vector<16xf32> to vector<16x1xf32>
    %cst_42 = arith.constant 3.200000e+01 : f32
    %123 = vector.broadcast %cst_42 : f32 to vector<16x1xf32>
    %124 = arith.divf %122, %123 : vector<16x1xf32>
    %cst_43 = arith.constant 9.99999974E-6 : f32
    %125 = vector.broadcast %cst_43 : f32 to vector<16x1xf32>
    %126 = arith.addf %124, %125 : vector<16x1xf32>
    %127 = math.rsqrt %126 : vector<16x1xf32>
    %128 = vector.broadcast %117 : vector<16x1xf32> to vector<16x32xf32>
    %129 = arith.subf %111, %128 : vector<16x32xf32>
    %130 = vector.broadcast %127 : vector<16x1xf32> to vector<16x32xf32>
    %131 = arith.mulf %129, %130 : vector<16x32xf32>
    %132 = vector.broadcast %112 : vector<1x32xf32> to vector<16x32xf32>
    %133 = arith.mulf %131, %132 : vector<16x32xf32>
    %134 = vector.broadcast %113 : vector<1x32xf32> to vector<16x32xf32>
    %135 = arith.addf %133, %134 : vector<16x32xf32>
    %c0_44 = arith.constant 0 : index
    %c0_45 = arith.constant 0 : index
    %c0_46 = arith.constant 0 : index
    %136 = vector.load %arg6[%c0_44, %c0_45, %c0_46] : memref<2x32x64xf32, #tpu.memory_space<vmem>>, vector<1x32x64xf32>
    %137 = vector.shape_cast %136 : vector<1x32x64xf32> to vector<32x64xf32>
    %cst_47 = arith.constant dense<0.000000e+00> : vector<16x64xf32>
    %138 = tpu.matmul %135, %137, %cst_47 {dimension_numbers = #tpu.dot_dimension_numbers<[1], [0], [0], [1], [0, 0, 1, 1], [], []>} : vector<16x32xf32>, vector<32x64xf32>, vector<16x64xf32> -> vector<16x64xf32>
    %139 = vector.extract_strided_slice %9 {offsets = [5, 0], sizes = [1, 64], strides = [1, 1]} : vector<8x96xf32> to vector<1x64xf32>
    %140 = vector.broadcast %139 : vector<1x64xf32> to vector<16x64xf32>
    %141 = arith.addf %138, %140 : vector<16x64xf32>
    %cst_48 = arith.constant 5.000000e-01 : f32
    %142 = vector.broadcast %cst_48 : f32 to vector<16x64xf32>
    %143 = arith.mulf %142, %141 : vector<16x64xf32>
    %cst_49 = arith.constant 0.707106769 : f32
    %144 = vector.broadcast %cst_49 : f32 to vector<16x64xf32>
    %145 = arith.mulf %141, %144 : vector<16x64xf32>
    %146 = math.absf %145 : vector<16x64xf32>
    %cst_50 = arith.constant 0.327591091 : f32
    %147 = vector.broadcast %cst_50 : f32 to vector<16x64xf32>
    %148 = arith.mulf %147, %146 : vector<16x64xf32>
    %cst_51 = arith.constant 1.000000e+00 : f32
    %149 = vector.broadcast %cst_51 : f32 to vector<16x64xf32>
    %150 = arith.addf %149, %148 : vector<16x64xf32>
    %cst_52 = arith.constant 1.000000e+00 : f32
    %151 = vector.broadcast %cst_52 : f32 to vector<16x64xf32>
    %152 = arith.divf %151, %150 : vector<16x64xf32>
    %cst_53 = arith.constant 1.06140542 : f32
    %153 = vector.broadcast %cst_53 : f32 to vector<16x64xf32>
    %154 = arith.mulf %153, %152 : vector<16x64xf32>
    %cst_54 = arith.constant -1.45315206 : f32
    %155 = vector.broadcast %cst_54 : f32 to vector<16x64xf32>
    %156 = arith.addf %154, %155 : vector<16x64xf32>
    %157 = arith.mulf %156, %152 : vector<16x64xf32>
    %cst_55 = arith.constant 1.42141378 : f32
    %158 = vector.broadcast %cst_55 : f32 to vector<16x64xf32>
    %159 = arith.addf %157, %158 : vector<16x64xf32>
    %160 = arith.mulf %159, %152 : vector<16x64xf32>
    %cst_56 = arith.constant -0.284496725 : f32
    %161 = vector.broadcast %cst_56 : f32 to vector<16x64xf32>
    %162 = arith.addf %160, %161 : vector<16x64xf32>
    %163 = arith.mulf %162, %152 : vector<16x64xf32>
    %cst_57 = arith.constant 0.254829586 : f32
    %164 = vector.broadcast %cst_57 : f32 to vector<16x64xf32>
    %165 = arith.addf %163, %164 : vector<16x64xf32>
    %166 = arith.mulf %165, %152 : vector<16x64xf32>
    %cst_58 = arith.constant 0.000000e+00 : f32
    %167 = vector.broadcast %cst_58 : f32 to vector<16x64xf32>
    %168 = arith.subf %167, %146 : vector<16x64xf32>
    %169 = arith.mulf %168, %146 : vector<16x64xf32>
    %170 = math.exp %169 : vector<16x64xf32>
    %171 = arith.mulf %166, %170 : vector<16x64xf32>
    %cst_59 = arith.constant 1.000000e+00 : f32
    %172 = vector.broadcast %cst_59 : f32 to vector<16x64xf32>
    %173 = arith.subf %172, %171 : vector<16x64xf32>
    %cst_60 = arith.constant 0.000000e+00 : f32
    %174 = vector.broadcast %cst_60 : f32 to vector<16x64xf32>
    %175 = arith.cmpf oge, %145, %174 : vector<16x64xf32>
    %cst_61 = arith.constant 0.000000e+00 : f32
    %176 = vector.broadcast %cst_61 : f32 to vector<16x64xf32>
    %177 = arith.subf %176, %173 : vector<16x64xf32>
    %178 = arith.select %175, %173, %177 : vector<16x64xi1>, vector<16x64xf32>
    %cst_62 = arith.constant 1.000000e+00 : f32
    %179 = vector.broadcast %cst_62 : f32 to vector<16x64xf32>
    %180 = arith.addf %179, %178 : vector<16x64xf32>
    %181 = arith.mulf %143, %180 : vector<16x64xf32>
    %c0_63 = arith.constant 0 : index
    %c0_64 = arith.constant 0 : index
    %c0_65 = arith.constant 0 : index
    %182 = vector.load %arg7[%c0_63, %c0_64, %c0_65] : memref<2x64x32xf32, #tpu.memory_space<vmem>>, vector<1x64x32xf32>
    %183 = vector.shape_cast %182 : vector<1x64x32xf32> to vector<64x32xf32>
    %cst_66 = arith.constant dense<0.000000e+00> : vector<16x32xf32>
    %184 = tpu.matmul %181, %183, %cst_66 {dimension_numbers = #tpu.dot_dimension_numbers<[1], [0], [0], [1], [0, 0, 1, 1], [], []>} : vector<16x64xf32>, vector<64x32xf32>, vector<16x32xf32> -> vector<16x32xf32>
    %185 = vector.extract_strided_slice %9 {offsets = [7, 0], sizes = [1, 32], strides = [1, 1]} : vector<8x96xf32> to vector<1x32xf32>
    %186 = vector.broadcast %185 : vector<1x32xf32> to vector<16x32xf32>
    %187 = arith.addf %184, %186 : vector<16x32xf32>
    %188 = arith.addf %187, %111 : vector<16x32xf32>
    %c0_67 = arith.constant 0 : index
    %c0_68 = arith.constant 0 : index
    %c0_69 = arith.constant 0 : index
    %c0_70 = arith.constant 0 : index
    %189 = vector.load %arg10[%c0_67, %c0_68, %c0_69, %c0_70] : memref<2x1x16x32xf32, #tpu.memory_space<vmem>>, vector<1x1x16x32xf32>
    %190 = vector.shape_cast %189 : vector<1x1x16x32xf32> to vector<16x32xf32>
    %191 = vector.shape_cast %188 : vector<16x32xf32> to vector<1x1x16x32xf32>
    tpu.vector_store %arg10[%c0_67, %c0_68, %c0_69, %c0_70], %191 {strides = array<i32>} : memref<2x1x16x32xf32, #tpu.memory_space<vmem>>, vector<1x1x16x32xf32>,
    %c1 = arith.constant 1 : index
    %c0_71 = arith.constant 0 : index
    %c0_72 = arith.constant 0 : index
    %192 = vector.load %arg8[%c1, %c0_71, %c0_72] : memref<3x8x96xf32, #tpu.memory_space<vmem>>, vector<1x8x96xf32>
    %193 = vector.shape_cast %192 : vector<1x8x96xf32> to vector<8x96xf32>
    %194 = vector.extract_strided_slice %193 {offsets = [0, 0], sizes = [1, 32], strides = [1, 1]} : vector<8x96xf32> to vector<1x32xf32>
    %195 = vector.extract_strided_slice %193 {offsets = [1, 0], sizes = [1, 32], strides = [1, 1]} : vector<8x96xf32> to vector<1x32xf32>
    %cst_73 = arith.constant dense<0.000000e+00> : vector<16xf32>
    %196 = vector.multi_reduction <add>, %188, %cst_73 [1] : vector<16x32xf32> to vector<16xf32>
    %197 = vector.shape_cast %196 : vector<16xf32> to vector<16x1xf32>
    %cst_74 = arith.constant 3.200000e+01 : f32
    %198 = vector.broadcast %cst_74 : f32 to vector<16x1xf32>
    %199 = arith.divf %197, %198 : vector<16x1xf32>
    %200 = vector.broadcast %199 : vector<16x1xf32> to vector<16x32xf32>
    %201 = arith.subf %188, %200 : vector<16x32xf32>
    %202 = arith.mulf %201, %201 : vector<16x32xf32>
    %cst_75 = arith.constant dense<0.000000e+00> : vector<16xf32>
    %203 = vector.multi_reduction <add>, %202, %cst_75 [1] : vector<16x32xf32> to vector<16xf32>
    %204 = vector.shape_cast %203 : vector<16xf32> to vector<16x1xf32>
    %cst_76 = arith.constant 3.200000e+01 : f32
    %205 = vector.broadcast %cst_76 : f32 to vector<16x1xf32>
    %206 = arith.divf %204, %205 : vector<16x1xf32>
    %cst_77 = arith.constant 9.99999974E-6 : f32
    %207 = vector.broadcast %cst_77 : f32 to vector<16x1xf32>
    %208 = arith.addf %206, %207 : vector<16x1xf32>
    %209 = math.rsqrt %208 : vector<16x1xf32>
    %210 = vector.broadcast %199 : vector<16x1xf32> to vector<16x32xf32>
    %211 = arith.subf %188, %210 : vector<16x32xf32>
    %212 = vector.broadcast %209 : vector<16x1xf32> to vector<16x32xf32>
    %213 = arith.mulf %211, %212 : vector<16x32xf32>
    %214 = vector.broadcast %194 : vector<1x32xf32> to vector<16x32xf32>
    %215 = arith.mulf %213, %214 : vector<16x32xf32>
    %216 = vector.broadcast %195 : vector<1x32xf32> to vector<16x32xf32>
    %217 = arith.addf %215, %216 : vector<16x32xf32>
    %c1_78 = arith.constant 1 : index
    %c0_79 = arith.constant 0 : index
    %c0_80 = arith.constant 0 : index
    %218 = vector.load %arg4[%c1_78, %c0_79, %c0_80] : memref<2x32x96xf32, #tpu.memory_space<vmem>>, vector<1x32x96xf32>
    %219 = vector.shape_cast %218 : vector<1x32x96xf32> to vector<32x96xf32>
    %cst_81 = arith.constant dense<0.000000e+00> : vector<16x96xf32>
    %220 = tpu.matmul %217, %219, %cst_81 {dimension_numbers = #tpu.dot_dimension_numbers<[1], [0], [0], [1], [0, 0, 1, 1], [], []>} : vector<16x32xf32>, vector<32x96xf32>, vector<16x96xf32> -> vector<16x96xf32>
    %221 = vector.extract_strided_slice %193 {offsets = [4, 0], sizes = [1, 96], strides = [1, 1]} : vector<8x96xf32> to vector<1x96xf32>
    %222 = vector.broadcast %221 : vector<1x96xf32> to vector<16x96xf32>
    %223 = arith.addf %220, %222 : vector<16x96xf32>
    %224 = vector.extract_strided_slice %223 {offsets = [0, 0], sizes = [16, 8], strides = [1, 1]} : vector<16x96xf32> to vector<16x8xf32>
    %225 = vector.extract_strided_slice %223 {offsets = [0, 32], sizes = [16, 8], strides = [1, 1]} : vector<16x96xf32> to vector<16x8xf32>
    %226 = vector.extract_strided_slice %223 {offsets = [0, 64], sizes = [16, 8], strides = [1, 1]} : vector<16x96xf32> to vector<16x8xf32>
    %cst_82 = arith.constant dense<0.000000e+00> : vector<16x16xf32>
    %227 = tpu.matmul %224, %225, %cst_82 {dimension_numbers = #tpu.dot_dimension_numbers<[1], [1], [0], [0], [0, 0, 1, 0], [], []>} : vector<16x8xf32>, vector<16x8xf32>, vector<16x16xf32> -> vector<16x16xf32>
    %228 = arith.addf %227, %7 : vector<16x16xf32>
    %cst_83 = arith.constant dense<0xFF800000> : vector<16xf32>
    %229 = vector.multi_reduction <maximumf>, %228, %cst_83 [1] : vector<16x16xf32> to vector<16xf32>
    %230 = vector.shape_cast %229 : vector<16xf32> to vector<16x1xf32>
    %231 = vector.broadcast %230 : vector<16x1xf32> to vector<16x16xf32>
    %232 = arith.subf %228, %231 : vector<16x16xf32>
    %233 = math.exp %232 : vector<16x16xf32>
    %cst_84 = arith.constant dense<0.000000e+00> : vector<16xf32>
    %234 = vector.multi_reduction <add>, %233, %cst_84 [1] : vector<16x16xf32> to vector<16xf32>
    %235 = vector.shape_cast %234 : vector<16xf32> to vector<16x1xf32>
    %236 = tpu.reciprocal %235 {approx = true} : vector<16x1xf32> -> vector<16x1xf32>
    %237 = vector.broadcast %236 : vector<16x1xf32> to vector<16x16xf32>
    %238 = arith.mulf %233, %237 : vector<16x16xf32>
    %cst_85 = arith.constant dense<0.000000e+00> : vector<16x8xf32>
    %239 = tpu.matmul %238, %226, %cst_85 {dimension_numbers = #tpu.dot_dimension_numbers<[1], [0], [0], [1], [0, 0, 1, 1], [], []>} : vector<16x16xf32>, vector<16x8xf32>, vector<16x8xf32> -> vector<16x8xf32>
    %240 = vector.extract_strided_slice %223 {offsets = [0, 8], sizes = [16, 8], strides = [1, 1]} : vector<16x96xf32> to vector<16x8xf32>
    %241 = vector.extract_strided_slice %223 {offsets = [0, 40], sizes = [16, 8], strides = [1, 1]} : vector<16x96xf32> to vector<16x8xf32>
    %242 = vector.extract_strided_slice %223 {offsets = [0, 72], sizes = [16, 8], strides = [1, 1]} : vector<16x96xf32> to vector<16x8xf32>
    %cst_86 = arith.constant dense<0.000000e+00> : vector<16x16xf32>
    %243 = tpu.matmul %240, %241, %cst_86 {dimension_numbers = #tpu.dot_dimension_numbers<[1], [1], [0], [0], [0, 0, 1, 0], [], []>} : vector<16x8xf32>, vector<16x8xf32>, vector<16x16xf32> -> vector<16x16xf32>
    %244 = arith.addf %243, %7 : vector<16x16xf32>
    %cst_87 = arith.constant dense<0xFF800000> : vector<16xf32>
    %245 = vector.multi_reduction <maximumf>, %244, %cst_87 [1] : vector<16x16xf32> to vector<16xf32>
    %246 = vector.shape_cast %245 : vector<16xf32> to vector<16x1xf32>
    %247 = vector.broadcast %246 : vector<16x1xf32> to vector<16x16xf32>
    %248 = arith.subf %244, %247 : vector<16x16xf32>
    %249 = math.exp %248 : vector<16x16xf32>
    %cst_88 = arith.constant dense<0.000000e+00> : vector<16xf32>
    %250 = vector.multi_reduction <add>, %249, %cst_88 [1] : vector<16x16xf32> to vector<16xf32>
    %251 = vector.shape_cast %250 : vector<16xf32> to vector<16x1xf32>
    %252 = tpu.reciprocal %251 {approx = true} : vector<16x1xf32> -> vector<16x1xf32>
    %253 = vector.broadcast %252 : vector<16x1xf32> to vector<16x16xf32>
    %254 = arith.mulf %249, %253 : vector<16x16xf32>
    %cst_89 = arith.constant dense<0.000000e+00> : vector<16x8xf32>
    %255 = tpu.matmul %254, %242, %cst_89 {dimension_numbers = #tpu.dot_dimension_numbers<[1], [0], [0], [1], [0, 0, 1, 1], [], []>} : vector<16x16xf32>, vector<16x8xf32>, vector<16x8xf32> -> vector<16x8xf32>
    %256 = vector.extract_strided_slice %223 {offsets = [0, 16], sizes = [16, 8], strides = [1, 1]} : vector<16x96xf32> to vector<16x8xf32>
    %257 = vector.extract_strided_slice %223 {offsets = [0, 48], sizes = [16, 8], strides = [1, 1]} : vector<16x96xf32> to vector<16x8xf32>
    %258 = vector.extract_strided_slice %223 {offsets = [0, 80], sizes = [16, 8], strides = [1, 1]} : vector<16x96xf32> to vector<16x8xf32>
    %cst_90 = arith.constant dense<0.000000e+00> : vector<16x16xf32>
    %259 = tpu.matmul %256, %257, %cst_90 {dimension_numbers = #tpu.dot_dimension_numbers<[1], [1], [0], [0], [0, 0, 1, 0], [], []>} : vector<16x8xf32>, vector<16x8xf32>, vector<16x16xf32> -> vector<16x16xf32>
    %260 = arith.addf %259, %7 : vector<16x16xf32>
    %cst_91 = arith.constant dense<0xFF800000> : vector<16xf32>
    %261 = vector.multi_reduction <maximumf>, %260, %cst_91 [1] : vector<16x16xf32> to vector<16xf32>
    %262 = vector.shape_cast %261 : vector<16xf32> to vector<16x1xf32>
    %263 = vector.broadcast %262 : vector<16x1xf32> to vector<16x16xf32>
    %264 = arith.subf %260, %263 : vector<16x16xf32>
    %265 = math.exp %264 : vector<16x16xf32>
    %cst_92 = arith.constant dense<0.000000e+00> : vector<16xf32>
    %266 = vector.multi_reduction <add>, %265, %cst_92 [1] : vector<16x16xf32> to vector<16xf32>
    %267 = vector.shape_cast %266 : vector<16xf32> to vector<16x1xf32>
    %268 = tpu.reciprocal %267 {approx = true} : vector<16x1xf32> -> vector<16x1xf32>
    %269 = vector.broadcast %268 : vector<16x1xf32> to vector<16x16xf32>
    %270 = arith.mulf %265, %269 : vector<16x16xf32>
    %cst_93 = arith.constant dense<0.000000e+00> : vector<16x8xf32>
    %271 = tpu.matmul %270, %258, %cst_93 {dimension_numbers = #tpu.dot_dimension_numbers<[1], [0], [0], [1], [0, 0, 1, 1], [], []>} : vector<16x16xf32>, vector<16x8xf32>, vector<16x8xf32> -> vector<16x8xf32>
    %272 = vector.extract_strided_slice %223 {offsets = [0, 24], sizes = [16, 8], strides = [1, 1]} : vector<16x96xf32> to vector<16x8xf32>
    %273 = vector.extract_strided_slice %223 {offsets = [0, 56], sizes = [16, 8], strides = [1, 1]} : vector<16x96xf32> to vector<16x8xf32>
    %274 = vector.extract_strided_slice %223 {offsets = [0, 88], sizes = [16, 8], strides = [1, 1]} : vector<16x96xf32> to vector<16x8xf32>
    %cst_94 = arith.constant dense<0.000000e+00> : vector<16x16xf32>
    %275 = tpu.matmul %272, %273, %cst_94 {dimension_numbers = #tpu.dot_dimension_numbers<[1], [1], [0], [0], [0, 0, 1, 0], [], []>} : vector<16x8xf32>, vector<16x8xf32>, vector<16x16xf32> -> vector<16x16xf32>
    %276 = arith.addf %275, %7 : vector<16x16xf32>
    %cst_95 = arith.constant dense<0xFF800000> : vector<16xf32>
    %277 = vector.multi_reduction <maximumf>, %276, %cst_95 [1] : vector<16x16xf32> to vector<16xf32>
    %278 = vector.shape_cast %277 : vector<16xf32> to vector<16x1xf32>
    %279 = vector.broadcast %278 : vector<16x1xf32> to vector<16x16xf32>
    %280 = arith.subf %276, %279 : vector<16x16xf32>
    %281 = math.exp %280 : vector<16x16xf32>
    %cst_96 = arith.constant dense<0.000000e+00> : vector<16xf32>
    %282 = vector.multi_reduction <add>, %281, %cst_96 [1] : vector<16x16xf32> to vector<16xf32>
    %283 = vector.shape_cast %282 : vector<16xf32> to vector<16x1xf32>
    %284 = tpu.reciprocal %283 {approx = true} : vector<16x1xf32> -> vector<16x1xf32>
    %285 = vector.broadcast %284 : vector<16x1xf32> to vector<16x16xf32>
    %286 = arith.mulf %281, %285 : vector<16x16xf32>
    %cst_97 = arith.constant dense<0.000000e+00> : vector<16x8xf32>
    %287 = tpu.matmul %286, %274, %cst_97 {dimension_numbers = #tpu.dot_dimension_numbers<[1], [0], [0], [1], [0, 0, 1, 1], [], []>} : vector<16x16xf32>, vector<16x8xf32>, vector<16x8xf32> -> vector<16x8xf32>
    %288 = tpu.concatenate %239, %255, %271, %287 in 1 : vector<16x8xf32>, vector<16x8xf32>, vector<16x8xf32>, vector<16x8xf32> -> vector<16x32xf32>
    %c1_98 = arith.constant 1 : index
    %c0_99 = arith.constant 0 : index
    %c0_100 = arith.constant 0 : index
    %289 = vector.load %arg5[%c1_98, %c0_99, %c0_100] : memref<2x32x32xf32, #tpu.memory_space<vmem>>, vector<1x32x32xf32>
    %290 = vector.shape_cast %289 : vector<1x32x32xf32> to vector<32x32xf32>
    %cst_101 = arith.constant dense<0.000000e+00> : vector<16x32xf32>
    %291 = tpu.matmul %288, %290, %cst_101 {dimension_numbers = #tpu.dot_dimension_numbers<[1], [0], [0], [1], [0, 0, 1, 1], [], []>} : vector<16x32xf32>, vector<32x32xf32>, vector<16x32xf32> -> vector<16x32xf32>
    %292 = vector.extract_strided_slice %193 {offsets = [6, 0], sizes = [1, 32], strides = [1, 1]} : vector<8x96xf32> to vector<1x32xf32>
    %293 = vector.broadcast %292 : vector<1x32xf32> to vector<16x32xf32>
    %294 = arith.addf %291, %293 : vector<16x32xf32>
    %295 = arith.addf %294, %188 : vector<16x32xf32>
    %296 = vector.extract_strided_slice %193 {offsets = [2, 0], sizes = [1, 32], strides = [1, 1]} : vector<8x96xf32> to vector<1x32xf32>
    %297 = vector.extract_strided_slice %193 {offsets = [3, 0], sizes = [1, 32], strides = [1, 1]} : vector<8x96xf32> to vector<1x32xf32>
    %cst_102 = arith.constant dense<0.000000e+00> : vector<16xf32>
    %298 = vector.multi_reduction <add>, %295, %cst_102 [1] : vector<16x32xf32> to vector<16xf32>
    %299 = vector.shape_cast %298 : vector<16xf32> to vector<16x1xf32>
    %cst_103 = arith.constant 3.200000e+01 : f32
    %300 = vector.broadcast %cst_103 : f32 to vector<16x1xf32>
    %301 = arith.divf %299, %300 : vector<16x1xf32>
    %302 = vector.broadcast %301 : vector<16x1xf32> to vector<16x32xf32>
    %303 = arith.subf %295, %302 : vector<16x32xf32>
    %304 = arith.mulf %303, %303 : vector<16x32xf32>
    %cst_104 = arith.constant dense<0.000000e+00> : vector<16xf32>
    %305 = vector.multi_reduction <add>, %304, %cst_104 [1] : vector<16x32xf32> to vector<16xf32>
    %306 = vector.shape_cast %305 : vector<16xf32> to vector<16x1xf32>
    %cst_105 = arith.constant 3.200000e+01 : f32
    %307 = vector.broadcast %cst_105 : f32 to vector<16x1xf32>
    %308 = arith.divf %306, %307 : vector<16x1xf32>
    %cst_106 = arith.constant 9.99999974E-6 : f32
    %309 = vector.broadcast %cst_106 : f32 to vector<16x1xf32>
    %310 = arith.addf %308, %309 : vector<16x1xf32>
    %311 = math.rsqrt %310 : vector<16x1xf32>
    %312 = vector.broadcast %301 : vector<16x1xf32> to vector<16x32xf32>
    %313 = arith.subf %295, %312 : vector<16x32xf32>
    %314 = vector.broadcast %311 : vector<16x1xf32> to vector<16x32xf32>
    %315 = arith.mulf %313, %314 : vector<16x32xf32>
    %316 = vector.broadcast %296 : vector<1x32xf32> to vector<16x32xf32>
    %317 = arith.mulf %315, %316 : vector<16x32xf32>
    %318 = vector.broadcast %297 : vector<1x32xf32> to vector<16x32xf32>
    %319 = arith.addf %317, %318 : vector<16x32xf32>
    %c1_107 = arith.constant 1 : index
    %c0_108 = arith.constant 0 : index
    %c0_109 = arith.constant 0 : index
    %320 = vector.load %arg6[%c1_107, %c0_108, %c0_109] : memref<2x32x64xf32, #tpu.memory_space<vmem>>, vector<1x32x64xf32>
    %321 = vector.shape_cast %320 : vector<1x32x64xf32> to vector<32x64xf32>
    %cst_110 = arith.constant dense<0.000000e+00> : vector<16x64xf32>
    %322 = tpu.matmul %319, %321, %cst_110 {dimension_numbers = #tpu.dot_dimension_numbers<[1], [0], [0], [1], [0, 0, 1, 1], [], []>} : vector<16x32xf32>, vector<32x64xf32>, vector<16x64xf32> -> vector<16x64xf32>
    %323 = vector.extract_strided_slice %193 {offsets = [5, 0], sizes = [1, 64], strides = [1, 1]} : vector<8x96xf32> to vector<1x64xf32>
    %324 = vector.broadcast %323 : vector<1x64xf32> to vector<16x64xf32>
    %325 = arith.addf %322, %324 : vector<16x64xf32>
    %cst_111 = arith.constant 5.000000e-01 : f32
    %326 = vector.broadcast %cst_111 : f32 to vector<16x64xf32>
    %327 = arith.mulf %326, %325 : vector<16x64xf32>
    %cst_112 = arith.constant 0.707106769 : f32
    %328 = vector.broadcast %cst_112 : f32 to vector<16x64xf32>
    %329 = arith.mulf %325, %328 : vector<16x64xf32>
    %330 = math.absf %329 : vector<16x64xf32>
    %cst_113 = arith.constant 0.327591091 : f32
    %331 = vector.broadcast %cst_113 : f32 to vector<16x64xf32>
    %332 = arith.mulf %331, %330 : vector<16x64xf32>
    %cst_114 = arith.constant 1.000000e+00 : f32
    %333 = vector.broadcast %cst_114 : f32 to vector<16x64xf32>
    %334 = arith.addf %333, %332 : vector<16x64xf32>
    %cst_115 = arith.constant 1.000000e+00 : f32
    %335 = vector.broadcast %cst_115 : f32 to vector<16x64xf32>
    %336 = arith.divf %335, %334 : vector<16x64xf32>
    %cst_116 = arith.constant 1.06140542 : f32
    %337 = vector.broadcast %cst_116 : f32 to vector<16x64xf32>
    %338 = arith.mulf %337, %336 : vector<16x64xf32>
    %cst_117 = arith.constant -1.45315206 : f32
    %339 = vector.broadcast %cst_117 : f32 to vector<16x64xf32>
    %340 = arith.addf %338, %339 : vector<16x64xf32>
    %341 = arith.mulf %340, %336 : vector<16x64xf32>
    %cst_118 = arith.constant 1.42141378 : f32
    %342 = vector.broadcast %cst_118 : f32 to vector<16x64xf32>
    %343 = arith.addf %341, %342 : vector<16x64xf32>
    %344 = arith.mulf %343, %336 : vector<16x64xf32>
    %cst_119 = arith.constant -0.284496725 : f32
    %345 = vector.broadcast %cst_119 : f32 to vector<16x64xf32>
    %346 = arith.addf %344, %345 : vector<16x64xf32>
    %347 = arith.mulf %346, %336 : vector<16x64xf32>
    %cst_120 = arith.constant 0.254829586 : f32
    %348 = vector.broadcast %cst_120 : f32 to vector<16x64xf32>
    %349 = arith.addf %347, %348 : vector<16x64xf32>
    %350 = arith.mulf %349, %336 : vector<16x64xf32>
    %cst_121 = arith.constant 0.000000e+00 : f32
    %351 = vector.broadcast %cst_121 : f32 to vector<16x64xf32>
    %352 = arith.subf %351, %330 : vector<16x64xf32>
    %353 = arith.mulf %352, %330 : vector<16x64xf32>
    %354 = math.exp %353 : vector<16x64xf32>
    %355 = arith.mulf %350, %354 : vector<16x64xf32>
    %cst_122 = arith.constant 1.000000e+00 : f32
    %356 = vector.broadcast %cst_122 : f32 to vector<16x64xf32>
    %357 = arith.subf %356, %355 : vector<16x64xf32>
    %cst_123 = arith.constant 0.000000e+00 : f32
    %358 = vector.broadcast %cst_123 : f32 to vector<16x64xf32>
    %359 = arith.cmpf oge, %329, %358 : vector<16x64xf32>
    %cst_124 = arith.constant 0.000000e+00 : f32
    %360 = vector.broadcast %cst_124 : f32 to vector<16x64xf32>
    %361 = arith.subf %360, %357 : vector<16x64xf32>
    %362 = arith.select %359, %357, %361 : vector<16x64xi1>, vector<16x64xf32>
    %cst_125 = arith.constant 1.000000e+00 : f32
    %363 = vector.broadcast %cst_125 : f32 to vector<16x64xf32>
    %364 = arith.addf %363, %362 : vector<16x64xf32>
    %365 = arith.mulf %327, %364 : vector<16x64xf32>
    %c1_126 = arith.constant 1 : index
    %c0_127 = arith.constant 0 : index
    %c0_128 = arith.constant 0 : index
    %366 = vector.load %arg7[%c1_126, %c0_127, %c0_128] : memref<2x64x32xf32, #tpu.memory_space<vmem>>, vector<1x64x32xf32>
    %367 = vector.shape_cast %366 : vector<1x64x32xf32> to vector<64x32xf32>
    %cst_129 = arith.constant dense<0.000000e+00> : vector<16x32xf32>
    %368 = tpu.matmul %365, %367, %cst_129 {dimension_numbers = #tpu.dot_dimension_numbers<[1], [0], [0], [1], [0, 0, 1, 1], [], []>} : vector<16x64xf32>, vector<64x32xf32>, vector<16x32xf32> -> vector<16x32xf32>
    %369 = vector.extract_strided_slice %193 {offsets = [7, 0], sizes = [1, 32], strides = [1, 1]} : vector<8x96xf32> to vector<1x32xf32>
    %370 = vector.broadcast %369 : vector<1x32xf32> to vector<16x32xf32>
    %371 = arith.addf %368, %370 : vector<16x32xf32>
    %372 = arith.addf %371, %295 : vector<16x32xf32>
    %c1_130 = arith.constant 1 : index
    %c0_131 = arith.constant 0 : index
    %c0_132 = arith.constant 0 : index
    %c0_133 = arith.constant 0 : index
    %373 = vector.load %arg10[%c1_130, %c0_131, %c0_132, %c0_133] : memref<2x1x16x32xf32, #tpu.memory_space<vmem>>, vector<1x1x16x32xf32>
    %374 = vector.shape_cast %373 : vector<1x1x16x32xf32> to vector<16x32xf32>
    %375 = vector.shape_cast %372 : vector<16x32xf32> to vector<1x1x16x32xf32>
    tpu.vector_store %arg10[%c1_130, %c0_131, %c0_132, %c0_133], %375 {strides = array<i32>} : memref<2x1x16x32xf32, #tpu.memory_space<vmem>>, vector<1x1x16x32xf32>,
    %c2 = arith.constant 2 : index
    %c0_134 = arith.constant 0 : index
    %c0_135 = arith.constant 0 : index
    %376 = vector.load %arg8[%c2, %c0_134, %c0_135] : memref<3x8x96xf32, #tpu.memory_space<vmem>>, vector<1x8x96xf32>
    %377 = vector.shape_cast %376 : vector<1x8x96xf32> to vector<8x96xf32>
    %378 = vector.extract_strided_slice %377 {offsets = [0, 0], sizes = [1, 32], strides = [1, 1]} : vector<8x96xf32> to vector<1x32xf32>
    %379 = vector.extract_strided_slice %377 {offsets = [1, 0], sizes = [1, 32], strides = [1, 1]} : vector<8x96xf32> to vector<1x32xf32>
    %cst_136 = arith.constant dense<0.000000e+00> : vector<16xf32>
    %380 = vector.multi_reduction <add>, %372, %cst_136 [1] : vector<16x32xf32> to vector<16xf32>
    %381 = vector.shape_cast %380 : vector<16xf32> to vector<16x1xf32>
    %cst_137 = arith.constant 3.200000e+01 : f32
    %382 = vector.broadcast %cst_137 : f32 to vector<16x1xf32>
    %383 = arith.divf %381, %382 : vector<16x1xf32>
    %384 = vector.broadcast %383 : vector<16x1xf32> to vector<16x32xf32>
    %385 = arith.subf %372, %384 : vector<16x32xf32>
    %386 = arith.mulf %385, %385 : vector<16x32xf32>
    %cst_138 = arith.constant dense<0.000000e+00> : vector<16xf32>
    %387 = vector.multi_reduction <add>, %386, %cst_138 [1] : vector<16x32xf32> to vector<16xf32>
    %388 = vector.shape_cast %387 : vector<16xf32> to vector<16x1xf32>
    %cst_139 = arith.constant 3.200000e+01 : f32
    %389 = vector.broadcast %cst_139 : f32 to vector<16x1xf32>
    %390 = arith.divf %388, %389 : vector<16x1xf32>
    %cst_140 = arith.constant 9.99999974E-6 : f32
    %391 = vector.broadcast %cst_140 : f32 to vector<16x1xf32>
    %392 = arith.addf %390, %391 : vector<16x1xf32>
    %393 = math.rsqrt %392 : vector<16x1xf32>
    %394 = vector.broadcast %383 : vector<16x1xf32> to vector<16x32xf32>
    %395 = arith.subf %372, %394 : vector<16x32xf32>
    %396 = vector.broadcast %393 : vector<16x1xf32> to vector<16x32xf32>
    %397 = arith.mulf %395, %396 : vector<16x32xf32>
    %398 = vector.broadcast %378 : vector<1x32xf32> to vector<16x32xf32>
    %399 = arith.mulf %397, %398 : vector<16x32xf32>
    %400 = vector.broadcast %379 : vector<1x32xf32> to vector<16x32xf32>
    %401 = arith.addf %399, %400 : vector<16x32xf32>
    %c0_141 = arith.constant 0 : index
    %c0_142 = arith.constant 0 : index
    %c0_143 = arith.constant 0 : index
    %402 = vector.load %arg9[%c0_141, %c0_142, %c0_143] : memref<1x16x32xf32, #tpu.memory_space<vmem>>, vector<1x16x32xf32>
    %403 = vector.shape_cast %402 : vector<1x16x32xf32> to vector<16x32xf32>
    %404 = vector.shape_cast %401 : vector<16x32xf32> to vector<1x16x32xf32>
    tpu.vector_store %arg9[%c0_141, %c0_142, %c0_143], %404 {strides = array<i32>} : memref<1x16x32xf32, #tpu.memory_space<vmem>>, vector<1x16x32xf32>,
    return
  }
  func.func @transform_0(%arg0: i32) -> (i32, i32, i32) {
    %c0_i32 = arith.constant 0 : i32
    %c0_i32_0 = arith.constant 0 : i32
    %c0_i32_1 = arith.constant 0 : i32
    return %arg0, %c0_i32, %c0_i32_0 : i32, i32, i32
  }
  func.func @transform_1(%arg0: i32) -> (i32, i32, i32) {
    %c0_i32 = arith.constant 0 : i32
    %c0_i32_0 = arith.constant 0 : i32
    %c0_i32_1 = arith.constant 0 : i32
    return %arg0, %c0_i32, %c0_i32_0 : i32, i32, i32
  }
  func.func @transform_2(%arg0: i32) -> (i32, i32) {
    %c0_i32 = arith.constant 0 : i32
    %c0_i32_0 = arith.constant 0 : i32
    %c0_i32_1 = arith.constant 0 : i32
    return %c0_i32, %c0_i32_0 : i32, i32
  }
  func.func @transform_3(%arg0: i32) -> (i32, i32, i32) {
    %c0_i32 = arith.constant 0 : i32
    %c0_i32_0 = arith.constant 0 : i32
    %c0_i32_1 = arith.constant 0 : i32
    %c0_i32_2 = arith.constant 0 : i32
    return %c0_i32, %c0_i32_0, %c0_i32_1 : i32, i32, i32
  }
  func.func @transform_4(%arg0: i32) -> (i32, i32, i32) {
    %c0_i32 = arith.constant 0 : i32
    %c0_i32_0 = arith.constant 0 : i32
    %c0_i32_1 = arith.constant 0 : i32
    %c0_i32_2 = arith.constant 0 : i32
    return %c0_i32, %c0_i32_0, %c0_i32_1 : i32, i32, i32
  }
  func.func @transform_5(%arg0: i32) -> (i32, i32, i32) {
    %c0_i32 = arith.constant 0 : i32
    %c0_i32_0 = arith.constant 0 : i32
    %c0_i32_1 = arith.constant 0 : i32
    %c0_i32_2 = arith.constant 0 : i32
    return %c0_i32, %c0_i32_0, %c0_i32_1 : i32, i32, i32
  }
  func.func @transform_6(%arg0: i32) -> (i32, i32, i32) {
    %c0_i32 = arith.constant 0 : i32
    %c0_i32_0 = arith.constant 0 : i32
    %c0_i32_1 = arith.constant 0 : i32
    %c0_i32_2 = arith.constant 0 : i32
    return %c0_i32, %c0_i32_0, %c0_i32_1 : i32, i32, i32
  }
  func.func @transform_7(%arg0: i32) -> (i32, i32, i32) {
    %c0_i32 = arith.constant 0 : i32
    %c0_i32_0 = arith.constant 0 : i32
    %c0_i32_1 = arith.constant 0 : i32
    %c0_i32_2 = arith.constant 0 : i32
    return %c0_i32, %c0_i32_0, %c0_i32_1 : i32, i32, i32
  }
  func.func @transform_8(%arg0: i32) -> (i32, i32, i32) {
    %c0_i32 = arith.constant 0 : i32
    %c0_i32_0 = arith.constant 0 : i32
    %c0_i32_1 = arith.constant 0 : i32
    return %arg0, %c0_i32, %c0_i32_0 : i32, i32, i32
  }
  func.func @transform_9(%arg0: i32) -> (i32, i32, i32, i32) {
    %c0_i32 = arith.constant 0 : i32
    %c0_i32_0 = arith.constant 0 : i32
    %c0_i32_1 = arith.constant 0 : i32
    %c0_i32_2 = arith.constant 0 : i32
    return %c0_i32, %arg0, %c0_i32_0, %c0_i32_1 : i32, i32, i32, i32
  }
}

</mosaic_0001>

<llo_original>
// kernel: tpu_custom_call.1
$region0: #{tpu_custom_call.1}
  #allocation0 [shape = 'u32[]', space=smem, size = 0x4, offset = 0x4, fixed_abs, tag = 'smem constant byte address 0x4 - core index']
  #allocation1 [shape = 'u32[144,128]{1,0:T(1,128)}', space=vmem, size = 0x12000, scoped, tag = 'internal scratch']
  #allocation11 [shape = 's32[]', space=sflag, size = 0x4, offset = 0, fixed_abs, tag = 'sflag constant byte address 0x0 - dummy sync flag']
  %s0 = inlined_call_operand.hbm [shape: f32[2,16,32], index: 0, kind: input, shape index: {}]
  %s1 = inlined_call_operand.hbm [shape: f32[2,16,16], index: 1, kind: input, shape index: {}]
  %s2 = inlined_call_operand.hbm [shape: f32[16,32], index: 2, kind: input, shape index: {}]
  %s3 = inlined_call_operand.vmem [shape: f32[2,32,96], index: 3, kind: input, shape index: {}]
  %s4 = inlined_call_operand.vmem [shape: f32[2,32,32], index: 4, kind: input, shape index: {}]
  %s5 = inlined_call_operand.vmem [shape: f32[2,32,64], index: 5, kind: input, shape index: {}]
  %s6 = inlined_call_operand.vmem [shape: f32[2,64,32], index: 6, kind: input, shape index: {}]
  %s7 = inlined_call_operand.vmem [shape: f32[3,8,96], index: 7, kind: input, shape index: {}]
  %s8 = inlined_call_operand.hbm [shape: f32[2,16,32], index: 8, kind: output, shape index: {0}]
  %s9 = inlined_call_operand.hbm [shape: f32[2,2,16,32], index: 9, kind: output, shape index: {1}]
  %10 = xla_tuple %s8, %s9
  %s11 = sld [smem:[#allocation0]]
  $region85: #{tpu_custom_call.1} parent=0
    _
  %s13 = ssub.s32 1, %s11
  %s14 = scalar_select 0, %s13, %s11
  $region1: #{tpu_custom_call.1} parent=0
    #allocation2 [shape = 'u8[16384]{0}', space=vmem, size = 0x4000, scoped, tag = 'input window, operand 0']
    #allocation3 [shape = 's32[2]{0}', space=sflag, size = 0x8, scoped, tag = 'scoped memory for tpu_custom_call.1']
    #allocation4 [shape = 's32[2]{0}', space=sflag, size = 0x8, scoped, tag = 'scoped memory for tpu_custom_call.1']
    #allocation5 [shape = 'u8[16384]{0}', space=vmem, size = 0x4000, scoped, tag = 'input window, operand 1']
    #allocation6 [shape = 's32[2]{0}', space=sflag, size = 0x8, scoped, tag = 'scoped memory for tpu_custom_call.1']
    #allocation7 [shape = 'u8[8192]{0}', space=vmem, size = 0x2000, scoped, tag = 'input window, operand 2, single buffered']
    #allocation8 [shape = 'u8[16384]{0}', space=vmem, size = 0x4000, scoped, tag = 'output window, operand 0']
    #allocation9 [shape = 'u8[32768]{0}', space=vmem, size = 0x8000, scoped, tag = 'output window, operand 1']
    #allocation10 [shape = 's32[2]{0}', space=sflag, size = 0x8, scoped, tag = 'scoped memory for tpu_custom_call.1']
    %15 = vsyncpa [#allocation3], 0
    %s16 = scalar_lea.sflag [#allocation3], 1
    %17 = vsyncpa %s16, 0
    %18 = vsyncpa [#allocation6], 0
    %s19 = scalar_lea.sflag [#allocation6], 1
    %20 = vsyncpa %s19, 0
    %21 = vsyncpa [#allocation4], 0
    %s22 = scalar_lea.sflag [#allocation4], 1
    %23 = vsyncpa %s22, 0
    %24 = vsyncpa [#allocation10], 0
    %s25 = scalar_lea.sflag [#allocation10], 1
    %26 = vsyncpa %s25, 0
    loop: start=0, step=1, limit=4
    $region2: #{tpu_custom_call.1} parent=1 // loop_pre_header
      _
    $region3: #{tpu_custom_call.1} parent=1 // loop_header
      %s28 = sphi 0, %s32
      %p29 = scmp.ge.s32.totalorder %s28, 4
      %s38 = sphi 0, %s40
      %s41 = sphi 0, %s38
      %s42 = sphi 0, %s41
      %s58 = sphi 0, %s42
      %s64 = sphi 0, %s66
      %s67 = sphi 0, %s64
      %s68 = sphi 0, %s67
      %s84 = sphi 0, %s68
      %s88 = sphi 0, %s88
      %s90 = sphi 0, %s88
      %s91 = sphi 0, %s90
      %s105 = sphi 0, %s91
      %s109 = sphi 0, %s109
      %s111 = sphi 0, %s109
      %s112 = sphi 0, %s111
      %s126 = sphi 0, %s112
      %s130 = sphi 0, %s130
      %s132 = sphi 0, %s130
      %s133 = sphi 0, %s132
      %s147 = sphi 0, %s133
      %s151 = sphi 0, %s151
      %s153 = sphi 0, %s151
      %s154 = sphi 0, %s153
      %s168 = sphi 0, %s154
      %s172 = sphi 0, %s172
      %s174 = sphi 0, %s172
      %s175 = sphi 0, %s174
      %s189 = sphi 0, %s175
      %s193 = sphi 0, %s193
      %s195 = sphi 0, %s193
      %s196 = sphi 0, %s195
      %s210 = sphi 0, %s196
      %s216 = sphi 0, %s218
      %s219 = sphi 0, %s216
      %s220 = sphi 0, %s219
      %s236 = sphi 0, %s220
      %s242 = sphi 0, %s244
      %s245 = sphi 0, %s242
      %s246 = sphi 0, %s245
      %s262 = sphi 0, %s246
    $region4: #{tpu_custom_call.1} parent=1 // loop_header_branch
      %31 = sbr.rel (%p29) target = $region8
    $region5: #{tpu_custom_call.1} parent=1 // loop_body
      %s33 = ssub.s32 %s28, 1
      %s34 = ssub.s32 %s28, 2
      %s35 = sadd.s32 %s28, 1
      %s36 = ssub.s32 %s28, %s35
      %p37 = scmp.eq.s32.totalorder %s36, 0
      %s39 = sadd.s32 %s38, 1
      %s40 = scalar_select %p37, %s38, %s39
      %p43 = pneg %p37
      %p44 = scmp.eq.s32.totalorder %s28, 1
      %p45 = por %p43, %p44
      %p46 = scmp.ne.s32.totalorder %s38, %s41
      %p47 = scmp.eq.s32.totalorder %s28, 0
      %p48 = por %p46, %p47
      %p49 = scmp.ne.s32.totalorder %s38, %s41
      %p50 = scmp.eq.s32.totalorder %s33, 1
      %p51 = por %p49, %p50
      %p52 = scmp.ne.s32.totalorder %s41, %s42
      %p53 = scmp.eq.s32.totalorder %s33, 0
      %p54 = por %p52, %p53
      %p55 = scmp.ne.s32.totalorder %s41, %s42
      %p56 = scmp.eq.s32.totalorder %s34, 1
      %p57 = por %p55, %p56
      %p59 = scmp.ne.s32.totalorder %s42, %s58
      %p60 = scmp.eq.s32.totalorder %s34, 0
      %p61 = por %p59, %p60
      %s62 = ssub.s32 %s28, %s35
      %p63 = scmp.eq.s32.totalorder %s62, 0
      %s65 = sadd.s32 %s64, 1
      %s66 = scalar_select %p63, %s64, %s65
      %p69 = pneg %p63
      %p70 = scmp.eq.s32.totalorder %s28, 1
      %p71 = por %p69, %p70
      %p72 = scmp.ne.s32.totalorder %s64, %s67
      %p73 = scmp.eq.s32.totalorder %s28, 0
      %p74 = por %p72, %p73
      %p75 = scmp.ne.s32.totalorder %s64, %s67
      %p76 = scmp.eq.s32.totalorder %s33, 1
      %p77 = por %p75, %p76
      %p78 = scmp.ne.s32.totalorder %s67, %s68
      %p79 = scmp.eq.s32.totalorder %s33, 0
      %p80 = por %p78, %p79
      %p81 = scmp.ne.s32.totalorder %s67, %s68
      %p82 = scmp.eq.s32.totalorder %s34, 1
      %p83 = por %p81, %p82
      %p85 = scmp.ne.s32.totalorder %s68, %s84
      %p86 = scmp.eq.s32.totalorder %s34, 0
      %p87 = por %p85, %p86
      %s89 = sadd.s32 %s88, 1
      %p92 = scmp.eq.s32.totalorder %s28, 1
      %p93 = scmp.ne.s32.totalorder %s88, %s90
      %p94 = scmp.eq.s32.totalorder %s28, 0
      %p95 = por %p93, %p94
      %p96 = scmp.ne.s32.totalorder %s88, %s90
      %p97 = scmp.eq.s32.totalorder %s33, 1
      %p98 = por %p96, %p97
      %p99 = scmp.ne.s32.totalorder %s90, %s91
      %p100 = scmp.eq.s32.totalorder %s33, 0
      %p101 = por %p99, %p100
      %p102 = scmp.ne.s32.totalorder %s90, %s91
      %p103 = scmp.eq.s32.totalorder %s34, 1
      %p104 = por %p102, %p103
      %p106 = scmp.ne.s32.totalorder %s91, %s105
      %p107 = scmp.eq.s32.totalorder %s34, 0
      %p108 = por %p106, %p107
      %s110 = sadd.s32 %s109, 1
      %p113 = scmp.eq.s32.totalorder %s28, 1
      %p114 = scmp.ne.s32.totalorder %s109, %s111
      %p115 = scmp.eq.s32.totalorder %s28, 0
      %p116 = por %p114, %p115
      %p117 = scmp.ne.s32.totalorder %s109, %s111
      %p118 = scmp.eq.s32.totalorder %s33, 1
      %p119 = por %p117, %p118
      %p120 = scmp.ne.s32.totalorder %s111, %s112
      %p121 = scmp.eq.s32.totalorder %s33, 0
      %p122 = por %p120, %p121
      %p123 = scmp.ne.s32.totalorder %s111, %s112
      %p124 = scmp.eq.s32.totalorder %s34, 1
      %p125 = por %p123, %p124
      %p127 = scmp.ne.s32.totalorder %s112, %s126
      %p128 = scmp.eq.s32.totalorder %s34, 0
      %p129 = por %p127, %p128
      %s131 = sadd.s32 %s130, 1
      %p134 = scmp.eq.s32.totalorder %s28, 1
      %p135 = scmp.ne.s32.totalorder %s130, %s132
      %p136 = scmp.eq.s32.totalorder %s28, 0
      %p137 = por %p135, %p136
      %p138 = scmp.ne.s32.totalorder %s130, %s132
      %p139 = scmp.eq.s32.totalorder %s33, 1
      %p140 = por %p138, %p139
      %p141 = scmp.ne.s32.totalorder %s132, %s133
      %p142 = scmp.eq.s32.totalorder %s33, 0
      %p143 = por %p141, %p142
      %p144 = scmp.ne.s32.totalorder %s132, %s133
      %p145 = scmp.eq.s32.totalorder %s34, 1
      %p146 = por %p144, %p145
      %p148 = scmp.ne.s32.totalorder %s133, %s147
      %p149 = scmp.eq.s32.totalorder %s34, 0
      %p150 = por %p148, %p149
      %s152 = sadd.s32 %s151, 1
      %p155 = scmp.eq.s32.totalorder %s28, 1
      %p156 = scmp.ne.s32.totalorder %s151, %s153
      %p157 = scmp.eq.s32.totalorder %s28, 0
      %p158 = por %p156, %p157
      %p159 = scmp.ne.s32.totalorder %s151, %s153
      %p160 = scmp.eq.s32.totalorder %s33, 1
      %p161 = por %p159, %p160
      %p162 = scmp.ne.s32.totalorder %s153, %s154
      %p163 = scmp.eq.s32.totalorder %s33, 0
      %p164 = por %p162, %p163
      %p165 = scmp.ne.s32.totalorder %s153, %s154
      %p166 = scmp.eq.s32.totalorder %s34, 1
      %p167 = por %p165, %p166
      %p169 = scmp.ne.s32.totalorder %s154, %s168
      %p170 = scmp.eq.s32.totalorder %s34, 0
      %p171 = por %p169, %p170
      %s173 = sadd.s32 %s172, 1
      %p176 = scmp.eq.s32.totalorder %s28, 1
      %p177 = scmp.ne.s32.totalorder %s172, %s174
      %p178 = scmp.eq.s32.totalorder %s28, 0
      %p179 = por %p177, %p178
      %p180 = scmp.ne.s32.totalorder %s172, %s174
      %p181 = scmp.eq.s32.totalorder %s33, 1
      %p182 = por %p180, %p181
      %p183 = scmp.ne.s32.totalorder %s174, %s175
      %p184 = scmp.eq.s32.totalorder %s33, 0
      %p185 = por %p183, %p184
      %p186 = scmp.ne.s32.totalorder %s174, %s175
      %p187 = scmp.eq.s32.totalorder %s34, 1
      %p188 = por %p186, %p187
      %p190 = scmp.ne.s32.totalorder %s175, %s189
      %p191 = scmp.eq.s32.totalorder %s34, 0
      %p192 = por %p190, %p191
      %s194 = sadd.s32 %s193, 1
      %p197 = scmp.eq.s32.totalorder %s28, 1
      %p198 = scmp.ne.s32.totalorder %s193, %s195
      %p199 = scmp.eq.s32.totalorder %s28, 0
      %p200 = por %p198, %p199
      %p201 = scmp.ne.s32.totalorder %s193, %s195
      %p202 = scmp.eq.s32.totalorder %s33, 1
      %p203 = por %p201, %p202
      %p204 = scmp.ne.s32.totalorder %s195, %s196
      %p205 = scmp.eq.s32.totalorder %s33, 0
      %p206 = por %p204, %p205
      %p207 = scmp.ne.s32.totalorder %s195, %s196
      %p208 = scmp.eq.s32.totalorder %s34, 1
      %p209 = por %p207, %p208
      %p211 = scmp.ne.s32.totalorder %s196, %s210
      %p212 = scmp.eq.s32.totalorder %s34, 0
      %p213 = por %p211, %p212
      %s214 = ssub.s32 %s28, %s35
      %p215 = scmp.eq.s32.totalorder %s214, 0
      %s217 = sadd.s32 %s216, 1
      %s218 = scalar_select %p215, %s216, %s217
      %p221 = pneg %p215
      %p222 = scmp.eq.s32.totalorder %s28, 1
      %p223 = por %p221, %p222
      %p224 = scmp.ne.s32.totalorder %s216, %s219
      %p225 = scmp.eq.s32.totalorder %s28, 0
      %p226 = por %p224, %p225
      %p227 = scmp.ne.s32.totalorder %s216, %s219
      %p228 = scmp.eq.s32.totalorder %s33, 1
      %p229 = por %p227, %p228
      %p230 = scmp.ne.s32.totalorder %s219, %s220
      %p231 = scmp.eq.s32.totalorder %s33, 0
      %p232 = por %p230, %p231
      %p233 = scmp.ne.s32.totalorder %s219, %s220
      %p234 = scmp.eq.s32.totalorder %s34, 1
      %p235 = por %p233, %p234
      %p237 = scmp.ne.s32.totalorder %s220, %s236
      %p238 = scmp.eq.s32.totalorder %s34, 0
      %p239 = por %p237, %p238
      %s240 = ssub.s32 %s28, %s35
      %p241 = scmp.eq.s32.totalorder %s240, 0
      %s243 = sadd.s32 %s242, 1
      %s244 = scalar_select %p241, %s242, %s243
      %p247 = pneg %p241
      %p248 = scmp.eq.s32.totalorder %s28, 1
      %p249 = por %p247, %p248
      %p250 = scmp.ne.s32.totalorder %s242, %s245
      %p251 = scmp.eq.s32.totalorder %s28, 0
      %p252 = por %p250, %p251
      %p253 = scmp.ne.s32.totalorder %s242, %s245
      %p254 = scmp.eq.s32.totalorder %s33, 1
      %p255 = por %p253, %p254
      %p256 = scmp.ne.s32.totalorder %s245, %s246
      %p257 = scmp.eq.s32.totalorder %s33, 0
      %p258 = por %p256, %p257
      %p259 = scmp.ne.s32.totalorder %s245, %s246
      %p260 = scmp.eq.s32.totalorder %s34, 1
      %p261 = por %p259, %p260
      %p263 = scmp.ne.s32.totalorder %s246, %s262
      %p264 = scmp.eq.s32.totalorder %s34, 0
      %p265 = por %p263, %p264
      %p266 = scmp.le.s32.totalorder 1, %s28
      %p267 = scmp.lt.s32.totalorder %s28, 3
      %p268 = pnand %p266, %p267
      %p269 = pneg %p268
      // Predicated region
      $region9: #{tpu_custom_call.1} parent=5 // pred_check
        _
      $region10: #{tpu_custom_call.1} parent=5 // pred_check_branch
        %271 = sbr.rel (%p268) target = $region12
      $region11: #{tpu_custom_call.1} parent=5 // pred_region
        %s272 = ssub.s32 %s28, 1
        // Predicated region
        $region13: #{tpu_custom_call.1} parent=11 // pred_check
          %p273 = pneg %p101
        $region14: #{tpu_custom_call.1} parent=11 // pred_check_branch
          %275 = sbr.rel (%p273) target = $region16
        $region15: #{tpu_custom_call.1} parent=11 // pred_region
          %s277 = ssub.s32 256, 256
          %278 = vsyncadd [#allocation6], %s277
          %s279 = sshll.u32 [#allocation7], 4
          %s280 = int_to_ptr.vmem [resolvable:$true] %s279
          %285 = dma.hbm_to_vmem [thread:$0]  %s2, 256, %s280, [#allocation6], 128, 128, 8
        $region16: #{tpu_custom_call.1} parent=11 // pred_fallthru
          _
        // Predicated region
        $region17: #{tpu_custom_call.1} parent=11 // pred_check
          %p286 = pneg %p122
        $region18: #{tpu_custom_call.1} parent=11 // pred_check_branch
          %288 = sbr.rel (%p286) target = $region20
        $region19: #{tpu_custom_call.1} parent=11 // pred_region
          _
        $region20: #{tpu_custom_call.1} parent=11 // pred_fallthru
          _
        // Predicated region
        $region21: #{tpu_custom_call.1} parent=11 // pred_check
          %p289 = pneg %p143
        $region22: #{tpu_custom_call.1} parent=11 // pred_check_branch
          %291 = sbr.rel (%p289) target = $region24
        $region23: #{tpu_custom_call.1} parent=11 // pred_region
          _
        $region24: #{tpu_custom_call.1} parent=11 // pred_fallthru
          _
        // Predicated region
        $region25: #{tpu_custom_call.1} parent=11 // pred_check
          %p292 = pneg %p164
        $region26: #{tpu_custom_call.1} parent=11 // pred_check_branch
          %294 = sbr.rel (%p292) target = $region28
        $region27: #{tpu_custom_call.1} parent=11 // pred_region
          _
        $region28: #{tpu_custom_call.1} parent=11 // pred_fallthru
          _
        // Predicated region
        $region29: #{tpu_custom_call.1} parent=11 // pred_check
          %p295 = pneg %p185
        $region30: #{tpu_custom_call.1} parent=11 // pred_check_branch
          %297 = sbr.rel (%p295) target = $region32
        $region31: #{tpu_custom_call.1} parent=11 // pred_region
          _
        $region32: #{tpu_custom_call.1} parent=11 // pred_fallthru
          _
        // Predicated region
        $region33: #{tpu_custom_call.1} parent=11 // pred_check
          %p298 = pneg %p206
        $region34: #{tpu_custom_call.1} parent=11 // pred_check_branch
          %300 = sbr.rel (%p298) target = $region36
        $region35: #{tpu_custom_call.1} parent=11 // pred_region
          _
        $region36: #{tpu_custom_call.1} parent=11 // pred_fallthru
          _
      $region12: #{tpu_custom_call.1} parent=5 // pred_fallthru
        _
      %p301 = scmp.lt.s32.totalorder %s28, 2
      // Predicated region
      $region37: #{tpu_custom_call.1} parent=5 // pred_check
        %p302 = pneg %p301
      $region38: #{tpu_custom_call.1} parent=5 // pred_check_branch
        %304 = sbr.rel (%p302) target = $region40
      $region39: #{tpu_custom_call.1} parent=5 // pred_region
        // Predicated region
        $region41: #{tpu_custom_call.1} parent=39 // pred_check
          %p305 = pneg %p48
        $region42: #{tpu_custom_call.1} parent=39 // pred_check_branch
          %307 = sbr.rel (%p305) target = $region44
        $region43: #{tpu_custom_call.1} parent=39 // pred_region
          %s308 = sand.u32 %s38, 1
          %s309 = scalar_lea.sflag [#allocation3], %s308
          %s310 = sand.u32 %s38, 1
          %s311 = smul.addr %s310, 16
          %s312 = scalar_lea.vmem [#allocation2], %s311
          %s314 = ssub.s32 256, 256
          %315 = vsyncadd %s309, %s314
          %s316 = smul.addr %s28, 2
          %s317 = smul.addr %s316, 128
          %s318 = scalar_lea.hbm %s0, %s317
          %s319 = sshll.u32 %s312, 4
          %s320 = int_to_ptr.vmem [resolvable:$true] %s319
          %325 = dma.hbm_to_vmem [thread:$0]  %s318, 256, %s320, %s309, 128, 128, 8
        $region44: #{tpu_custom_call.1} parent=39 // pred_fallthru
          _
        // Predicated region
        $region45: #{tpu_custom_call.1} parent=39 // pred_check
          %p326 = pneg %p74
        $region46: #{tpu_custom_call.1} parent=39 // pred_check_branch
          %328 = sbr.rel (%p326) target = $region48
        $region47: #{tpu_custom_call.1} parent=39 // pred_region
          %s329 = sand.u32 %s28, 1
          %s330 = scalar_lea.sflag [#allocation6], %s329
          %s331 = sand.u32 %s64, 1
          %s332 = smul.addr %s331, 16
          %s333 = scalar_lea.vmem [#allocation5], %s332
          %s335 = ssub.s32 256, 256
          %336 = vsyncadd %s330, %s335
          %s337 = smul.addr %s28, 2
          %s338 = smul.addr %s337, 128
          %s339 = scalar_lea.hbm %s1, %s338
          %s340 = sshll.u32 %s333, 4
          %s341 = int_to_ptr.vmem [resolvable:$true] %s340
          %346 = dma.hbm_to_vmem [thread:$0]  %s339, 256, %s341, %s330, 128, 128, 8
        $region48: #{tpu_custom_call.1} parent=39 // pred_fallthru
          _
      $region40: #{tpu_custom_call.1} parent=5 // pred_fallthru
        _
      %p347 = scmp.le.s32.totalorder 1, %s28
      %p348 = scmp.lt.s32.totalorder %s28, 3
      %p349 = pnand %p347, %p348
      %p350 = pneg %p349
      // Predicated region
      $region49: #{tpu_custom_call.1} parent=5 // pred_check
        _
      $region50: #{tpu_custom_call.1} parent=5 // pred_check_branch
        %352 = sbr.rel (%p349) target = $region52
      $region51: #{tpu_custom_call.1} parent=5 // pred_region
        %s353 = ssub.s32 %s28, 1
        %s354 = sand.u32 %s41, 1
        %s355 = scalar_lea.sflag [#allocation3], %s354
        %s356 = sand.u32 %s41, 1
        %s357 = smul.addr %s356, 16
        %s358 = scalar_lea.vmem [#allocation2], %s357
        // Predicated region
        $region53: #{tpu_custom_call.1} parent=51 // pred_check
          %p359 = pneg %p54
        $region54: #{tpu_custom_call.1} parent=51 // pred_check_branch
          %361 = sbr.rel (%p359) target = $region56
        $region55: #{tpu_custom_call.1} parent=51 // pred_region
          %362 = dma.done %s355, 256
        $region56: #{tpu_custom_call.1} parent=51 // pred_fallthru
          _
        %s363 = sand.u32 %s33, 1
        %s364 = scalar_lea.sflag [#allocation6], %s363
        %s365 = sand.u32 %s67, 1
        %s366 = smul.addr %s365, 16
        %s367 = scalar_lea.vmem [#allocation5], %s366
        // Predicated region
        $region57: #{tpu_custom_call.1} parent=51 // pred_check
          %p368 = pneg %p80
        $region58: #{tpu_custom_call.1} parent=51 // pred_check_branch
          %370 = sbr.rel (%p368) target = $region60
        $region59: #{tpu_custom_call.1} parent=51 // pred_region
          %371 = dma.done %s364, 256
        $region60: #{tpu_custom_call.1} parent=51 // pred_fallthru
          _
        // Predicated region
        $region61: #{tpu_custom_call.1} parent=51 // pred_check
          %p372 = pneg %p101
        $region62: #{tpu_custom_call.1} parent=51 // pred_check_branch
          %374 = sbr.rel (%p372) target = $region64
        $region63: #{tpu_custom_call.1} parent=51 // pred_region
          %375 = dma.done [#allocation6], 256
        $region64: #{tpu_custom_call.1} parent=51 // pred_fallthru
          _
        %s376 = sand.u32 %s41, 1
        %s377 = scalar_lea.sflag [#allocation3], %s376
        %s378 = sand.u32 %s41, 1
        %s379 = smul.addr %s378, 16
        %s380 = scalar_lea.vmem [#allocation2], %s379
        %p381 = pneg %p54
        %p382 = pneg %p51
        %s383 = sand.u32 %s33, 1
        %s384 = scalar_lea.sflag [#allocation6], %s383
        %s385 = sand.u32 %s67, 1
        %s386 = smul.addr %s385, 16
        %s387 = scalar_lea.vmem [#allocation5], %s386
        %p388 = pneg %p80
        %p389 = pneg %p77
        %p390 = pneg %p101
        %p391 = pneg %p98
        %p392 = pneg %p122
        %p393 = pneg %p119
        %p394 = pneg %p143
        %p395 = pneg %p140
        %p396 = pneg %p164
        %p397 = pneg %p161
        %p398 = pneg %p185
        %p399 = pneg %p182
        %p400 = pneg %p206
        %p401 = pneg %p203
        %p402 = pneg %p232
        %p403 = pneg %p229
        %s404 = sand.u32 %s219, 1
        %s405 = scalar_lea.sflag [#allocation4], %s404
        %s406 = sand.u32 %s219, 1
        %s407 = smul.addr %s406, 16
        %s408 = scalar_lea.vmem [#allocation8], %s407
        %p409 = pneg %p258
        %p410 = pneg %p255
        %s411 = sand.u32 %s245, 1
        %s412 = scalar_lea.sflag [#allocation10], %s411
        %s413 = sand.u32 %s245, 1
        %s414 = smul.addr %s413, 32
        %s415 = scalar_lea.vmem [#allocation9], %s414
        %v416 = vld [vmem:[%s358] sm:$0xff]
        %v417 = vld [vmem:[%s358 + $0x8] sm:$0xff]
        %v418 = vmul.f32 %v416, 5.656854
        %v419 = vmul.f32 %v417, 5.656854
        %v420 = vld [vmem:[#allocation7] sm:$0xff]
        %v421 = vld [vmem:[#allocation7 + $0x8] sm:$0xff]
        %v422 = vadd.f32 %v418, %v420
        %v423 = vadd.f32 %v419, %v421
        %v424 = vld [vmem:[%s367] sm:$0xff]
        %v425 = vld [vmem:[%s367 + $0x8] sm:$0xff]
        %v426 = vld [vmem:[%s7] sm:$0xff]
        %vm427 = vcmask 261120
        %v428 = vsel %vm427, %v422, 0.0
        %429 = vadd.xlane.f32.xlu0 %v428
        %v430 = vpop.xlane.xlu0 %429
        %v431 = vsel %vm427, %v423, 0.0
        %432 = vadd.xlane.f32.xlu0 %v431
        %v433 = vpop.xlane.xlu0 %432
        %v434 = vrcp.pop 32.0
        %v435 = vmul.f32 %v430, %v434
        %v436 = vmul.f32 %v433, %v434
        %v437 = vsub.f32 %v422, %v435
        %v438 = vsub.f32 %v423, %v436
        %v439 = vmul.f32 %v437, %v437
        %v440 = vmul.f32 %v438, %v438
        %v441 = vsel %vm427, %v439, 0.0
        %442 = vadd.xlane.f32.xlu0 %v441
        %v443 = vpop.xlane.xlu0 %442
        %v444 = vsel %vm427, %v440, 0.0
        %445 = vadd.xlane.f32.xlu0 %v444
        %v446 = vpop.xlane.xlu0 %445
        %v447 = vmul.f32 %v443, %v434
        %v448 = vmul.f32 %v446, %v434
        %v449 = vadd.f32 %v447, 1e-05
        %v450 = vadd.f32 %v448, 1e-05
        %v451 = vrsqrt.pop %v449
        %v452 = vrsqrt.pop %v450
        %v453 = vmul.f32 %v437, %v451
        %v454 = vmul.f32 %v438, %v452
        %v455 = vlaneseq
        %v456 = vshrl.u32 %v455, 7
        %v457 = vsub.s32 0, %v456
        %v458 = vrot.slane %v426, %v457
        %v459 = vmul.f32 %v453, %v458
        %v460 = vmul.f32 %v454, %v458
        %v461 = vlaneseq
        %v462 = vshrl.u32 %v461, 7
        %v463 = vsub.s32 1, %v462
        %v464 = vrot.slane %v426, %v463
        %v465 = vadd.f32 %v459, %v464
        %v466 = vadd.f32 %v460, %v464
        %v467 = vld [vmem:[%s3] sm:$0xff]
        %v468 = vld [vmem:[%s3 + $0x8] sm:$0xff]
        %v469 = vld [vmem:[%s3 + $0x10] sm:$0xff]
        %v470 = vld [vmem:[%s3 + $0x18] sm:$0xff]
        %v471 = vlaneseq
        %v472 = vshrl.u32 %v471, 7
        %v473 = vsub.s32 4, %v472
        %v474 = vrot.slane %v426, %v473
        %v476 = vsel %vm427, %v465, 0
        %v479 = vsel %vm427, %v466, 0
        %481 = vmatprep.subr.mxu0 0.0
        %482 = vmatpush1.msra.mxu0 %v467
        %483 = vmatprep.subr.mxu0 0.0
        %484 = vmatpush1.msra.mxu0 %v468
        %485 = vmatprep.subr.mxu0 0.0
        %486 = vmatpush1.msra.mxu0 %v469
        %487 = vmatprep.subr.mxu0 0.0
        %488 = vmatpush1.msra.mxu0 %v470
        %489 = vmatprep.subr.mxu0 0.0
        %490 = vmatpush1.msra.mxu0 0.0
        %491 = vmatprep.subr.mxu0 0.0
        %492 = vmatpush1.msra.mxu0 0.0
        %493 = vmatprep.subr.mxu0 0.0
        %494 = vmatpush1.msra.mxu0 0.0
        %495 = vmatprep.subr.mxu0 0.0
        %496 = vmatpush1.msra.mxu0 0.0
        %497 = vmatprep.subr.mxu0 0.0
        %498 = vmatpush1.msra.mxu0 0.0
        %499 = vmatprep.subr.mxu0 0.0
        %500 = vmatpush1.msra.mxu0 0.0
        %501 = vmatprep.subr.mxu0 0.0
        %502 = vmatpush1.msra.mxu0 0.0
        %503 = vmatprep.subr.mxu0 0.0
        %504 = vmatpush1.msra.mxu0 0.0
        %505 = vmatprep.subr.mxu0 0.0
        %506 = vmatpush1.msra.mxu0 0.0
        %507 = vmatprep.subr.mxu0 0.0
        %508 = vmatpush1.msra.mxu0 0.0
        %509 = vmatprep.subr.mxu0 0.0
        %510 = vmatpush1.msra.mxu0 0.0
        %511 = vmatprep.subr.mxu0 0.0
        %512 = vmatpush1.msra.mxu0 0.0
        %513 = vmatprep.subr.mxu0 0.0
        %514 = vmatpush1.msra.mxu0 0.0
        %515 = vmatprep.subr.mxu0 0.0
        %516 = vmatpush1.msra.mxu0 0.0
        %517 = vmatprep.subr.mxu0 0.0
        %518 = vmatpush1.msra.mxu0 0.0
        %519 = vmatprep.subr.mxu0 0.0
        %520 = vmatpush1.msra.mxu0 0.0
        %521 = vmatprep.subr.mxu0 0.0
        %522 = vmatpush1.msra.mxu0 0.0
        %523 = vmatprep.subr.mxu0 0.0
        %524 = vmatpush1.msra.mxu0 0.0
        %525 = vmatprep.subr.mxu0 0.0
        %526 = vmatpush1.msra.mxu0 0.0
        %527 = vmatprep.subr.mxu0 0.0
        %528 = vmatpush1.msra.mxu0 0.0
        %529 = vmatprep.subr.mxu0 0.0
        %530 = vmatpush1.msra.mxu0 0.0
        %531 = vmatprep.subr.mxu0 0.0
        %532 = vmatpush1.msra.mxu0 0.0
        %533 = vmatprep.subr.mxu0 0.0
        %534 = vmatpush1.msra.mxu0 0.0
        %535 = vmatprep.subr.mxu0 0.0
        %536 = vmatpush1.msra.mxu0 0.0
        %537 = vmatprep.subr.mxu0 0.0
        %538 = vmatpush1.msra.mxu0 0.0
        %539 = vmatprep.subr.mxu0 0.0
        %540 = vmatpush1.msra.mxu0 0.0
        %541 = vmatprep.subr.mxu0 0.0
        %542 = vmatpush1.msra.mxu0 0.0
        %543 = vmatprep.subr.mxu0 0.0
        %544 = vmatpush1.msra.mxu0 0.0
        %545 = vmatprep.mubr.f32.mxu0 0.0
        %546 = vmatmul.mubr.f32.gmra.mrb[0].mxu0 %v476
        %v547 = vpop.f32.mrb[0].mxu0
        %v548 = vadd.f32 %v474, %v547
        %v549 = vpop.f32.mrb[0].mxu0
        %550 = vmatprep.mubr.f32.mxu0 0.0
        %551 = vmatmul.mubr.f32.gmra.mrb[0].mxu0 %v479
        %v552 = vpop.f32.mrb[0].mxu0
        %v553 = vadd.f32 %v474, %v552
        %v554 = vpop.f32.mrb[0].mxu0
        %555 = vdwg.mxu0
        %558 = vrot.lane.b32.xlu0 %v548, 96
        %v559 = vpop.permute.xlu0 %558
        %560 = vrot.lane.b32.xlu0 %v553, 96
        %v561 = vpop.permute.xlu0 %560
        %vm562 = vcmask 64512
        %v563 = vsel %vm562, %v548, 0
        %v565 = vsel %vm562, %v553, 0
        %v567 = vsel %vm562, %v559, 0
        %v569 = vsel %vm562, %v561, 0
        %571 = vmatprep.subr.mxu0 0.0
        %572 = vmatpush1.xpose.msra.mxu0 %v567
        %573 = vmatprep.subr.mxu0 0.0
        %574 = vmatpush1.xpose.msra.mxu0 %v569
        %575 = vmatprep.subr.mxu0 0.0
        %576 = vmatpush1.xpose.msra.mxu0 0.0
        %577 = vmatprep.subr.mxu0 0.0
        %578 = vmatpush1.xpose.msra.mxu0 0.0
        %579 = vmatprep.subr.mxu0 0.0
        %580 = vmatpush1.xpose.msra.mxu0 0.0
        %581 = vmatprep.subr.mxu0 0.0
        %582 = vmatpush1.xpose.msra.mxu0 0.0
        %583 = vmatprep.subr.mxu0 0.0
        %584 = vmatpush1.xpose.msra.mxu0 0.0
        %585 = vmatprep.subr.mxu0 0.0
        %586 = vmatpush1.xpose.msra.mxu0 0.0
        %587 = vmatprep.subr.mxu0 0.0
        %588 = vmatpush1.xpose.msra.mxu0 0.0
        %589 = vmatprep.subr.mxu0 0.0
        %590 = vmatpush1.xpose.msra.mxu0 0.0
        %591 = vmatprep.subr.mxu0 0.0
        %592 = vmatpush1.xpose.msra.mxu0 0.0
        %593 = vmatprep.subr.mxu0 0.0
        %594 = vmatpush1.xpose.msra.mxu0 0.0
        %595 = vmatprep.subr.mxu0 0.0
        %596 = vmatpush1.xpose.msra.mxu0 0.0
        %597 = vmatprep.subr.mxu0 0.0
        %598 = vmatpush1.xpose.msra.mxu0 0.0
        %599 = vmatprep.subr.mxu0 0.0
        %600 = vmatpush1.xpose.msra.mxu0 0.0
        %601 = vmatprep.subr.mxu0 0.0
        %602 = vmatpush1.xpose.msra.mxu0 0.0
        %603 = vmatprep.subr.mxu0 0.0
        %604 = vmatpush1.xpose.msra.mxu0 0.0
        %605 = vmatprep.subr.mxu0 0.0
        %606 = vmatpush1.xpose.msra.mxu0 0.0
        %607 = vmatprep.subr.mxu0 0.0
        %608 = vmatpush1.xpose.msra.mxu0 0.0
        %609 = vmatprep.subr.mxu0 0.0
        %610 = vmatpush1.xpose.msra.mxu0 0.0
        %611 = vmatprep.subr.mxu0 0.0
        %612 = vmatpush1.xpose.msra.mxu0 0.0
        %613 = vmatprep.subr.mxu0 0.0
        %614 = vmatpush1.xpose.msra.mxu0 0.0
        %615 = vmatprep.subr.mxu0 0.0
        %616 = vmatpush1.xpose.msra.mxu0 0.0
        %617 = vmatprep.subr.mxu0 0.0
        %618 = vmatpush1.xpose.msra.mxu0 0.0
        %619 = vmatprep.subr.mxu0 0.0
        %620 = vmatpush1.xpose.msra.mxu0 0.0
        %621 = vmatprep.subr.mxu0 0.0
        %622 = vmatpush1.xpose.msra.mxu0 0.0
        %623 = vmatprep.subr.mxu0 0.0
        %624 = vmatpush1.xpose.msra.mxu0 0.0
        %625 = vmatprep.subr.mxu0 0.0
        %626 = vmatpush1.xpose.msra.mxu0 0.0
        %627 = vmatprep.subr.mxu0 0.0
        %628 = vmatpush1.xpose.msra.mxu0 0.0
        %629 = vmatprep.subr.mxu0 0.0
        %630 = vmatpush1.xpose.msra.mxu0 0.0
        %631 = vmatprep.subr.mxu0 0.0
        %632 = vmatpush1.xpose.msra.mxu0 0.0
        %633 = vmatprep.subr.mxu0 0.0
        %634 = vmatpush1.xpose.msra.mxu0 0.0
        %635 = vmatprep.mubr.f32.mxu0 0.0
        %636 = vmatmul.mubr.f32.gmra.mrb[0].mxu0 %v563
        %v637 = vpop.f32.mrb[0].mxu0
        %v638 = vadd.f32 %v424, %v637
        %v639 = vpop.f32.mrb[0].mxu0
        %640 = vmatprep.mubr.f32.mxu0 0.0
        %641 = vmatmul.mubr.f32.gmra.mrb[0].mxu0 %v565
        %v642 = vpop.f32.mrb[0].mxu0
        %v643 = vadd.f32 %v425, %v642
        %v644 = vpop.f32.mrb[0].mxu0
        %645 = vdwg.mxu0
        %vm646 = vcmask 130048
        %v647 = vsel %vm646, %v638, -inf
        %648 = vmax.xlane.f32.xlu0 %v647
        %v649 = vpop.xlane.xlu0 %648
        %v650 = vsel %vm646, %v643, -inf
        %651 = vmax.xlane.f32.xlu0 %v650
        %v652 = vpop.xlane.xlu0 %651
        %v653 = vsub.f32 %v638, %v649
        %v654 = vsub.f32 %v643, %v652
        %v655 = vmul.f32 %v653, 1.442695
        %v656 = vpow.pop %v655
        %v657 = vmul.f32 %v654, 1.442695
        %v658 = vpow.pop %v657
        %v659 = vsel %vm646, %v656, 0.0
        %660 = vadd.xlane.f32.xlu0 %v659
        %v661 = vpop.xlane.xlu0 %660
        %v662 = vsel %vm646, %v658, 0.0
        %663 = vadd.xlane.f32.xlu0 %v662
        %v664 = vpop.xlane.xlu0 %663
        %v665 = vrcp.pop %v661
        %v666 = vrcp.pop %v664
        %v667 = vmul.f32 %v656, %v665
        %v668 = vmul.f32 %v658, %v666
        %669 = vrot.lane.b32.xlu0 %v548, 64
        %v670 = vpop.permute.xlu0 %669
        %671 = vrot.lane.b32.xlu0 %v553, 64
        %v672 = vpop.permute.xlu0 %671
        %v676 = vsel %vm646, %v667, 0
        %v679 = vsel %vm646, %v668, 0
        %681 = vmatprep.subr.mxu0 0.0
        %682 = vmatpush1.msra.mxu0 %v670
        %683 = vmatprep.subr.mxu0 0.0
        %684 = vmatpush1.msra.mxu0 %v672
        %685 = vmatprep.subr.mxu0 0.0
        %686 = vmatpush1.msra.mxu0 0.0
        %687 = vmatprep.subr.mxu0 0.0
        %688 = vmatpush1.msra.mxu0 0.0
        %689 = vmatprep.subr.mxu0 0.0
        %690 = vmatpush1.msra.mxu0 0.0
        %691 = vmatprep.subr.mxu0 0.0
        %692 = vmatpush1.msra.mxu0 0.0
        %693 = vmatprep.subr.mxu0 0.0
        %694 = vmatpush1.msra.mxu0 0.0
        %695 = vmatprep.subr.mxu0 0.0
        %696 = vmatpush1.msra.mxu0 0.0
        %697 = vmatprep.subr.mxu0 0.0
        %698 = vmatpush1.msra.mxu0 0.0
        %699 = vmatprep.subr.mxu0 0.0
        %700 = vmatpush1.msra.mxu0 0.0
        %701 = vmatprep.subr.mxu0 0.0
        %702 = vmatpush1.msra.mxu0 0.0
        %703 = vmatprep.subr.mxu0 0.0
        %704 = vmatpush1.msra.mxu0 0.0
        %705 = vmatprep.subr.mxu0 0.0
        %706 = vmatpush1.msra.mxu0 0.0
        %707 = vmatprep.subr.mxu0 0.0
        %708 = vmatpush1.msra.mxu0 0.0
        %709 = vmatprep.subr.mxu0 0.0
        %710 = vmatpush1.msra.mxu0 0.0
        %711 = vmatprep.subr.mxu0 0.0
        %712 = vmatpush1.msra.mxu0 0.0
        %713 = vmatprep.subr.mxu0 0.0
        %714 = vmatpush1.msra.mxu0 0.0
        %715 = vmatprep.subr.mxu0 0.0
        %716 = vmatpush1.msra.mxu0 0.0
        %717 = vmatprep.subr.mxu0 0.0
        %718 = vmatpush1.msra.mxu0 0.0
        %719 = vmatprep.subr.mxu0 0.0
        %720 = vmatpush1.msra.mxu0 0.0
        %721 = vmatprep.subr.mxu0 0.0
        %722 = vmatpush1.msra.mxu0 0.0
        %723 = vmatprep.subr.mxu0 0.0
        %724 = vmatpush1.msra.mxu0 0.0
        %725 = vmatprep.subr.mxu0 0.0
        %726 = vmatpush1.msra.mxu0 0.0
        %727 = vmatprep.subr.mxu0 0.0
        %728 = vmatpush1.msra.mxu0 0.0
        %729 = vmatprep.subr.mxu0 0.0
        %730 = vmatpush1.msra.mxu0 0.0
        %731 = vmatprep.subr.mxu0 0.0
        %732 = vmatpush1.msra.mxu0 0.0
        %733 = vmatprep.subr.mxu0 0.0
        %734 = vmatpush1.msra.mxu0 0.0
        %735 = vmatprep.subr.mxu0 0.0
        %736 = vmatpush1.msra.mxu0 0.0
        %737 = vmatprep.subr.mxu0 0.0
        %738 = vmatpush1.msra.mxu0 0.0
        %739 = vmatprep.subr.mxu0 0.0
        %740 = vmatpush1.msra.mxu0 0.0
        %741 = vmatprep.subr.mxu0 0.0
        %742 = vmatpush1.msra.mxu0 0.0
        %743 = vmatprep.subr.mxu0 0.0
        %744 = vmatpush1.msra.mxu0 0.0
        %745 = vmatprep.mubr.f32.mxu0 0.0
        %746 = vmatmul.mubr.f32.gmra.mrb[0].mxu0 %v676
        %v747 = vpop.f32.mrb[0].mxu0
        %v748 = vadd.f32 0.0, %v747
        %v749 = vpop.f32.mrb[0].mxu0
        %750 = vmatprep.mubr.f32.mxu0 0.0
        %751 = vmatmul.mubr.f32.gmra.mrb[0].mxu0 %v679
        %v752 = vpop.f32.mrb[0].mxu0
        %v753 = vadd.f32 0.0, %v752
        %v754 = vpop.f32.mrb[0].mxu0
        %755 = vdwg.mxu0
        %756 = vrot.lane.b32.xlu0 %v548, 120
        %v757 = vpop.permute.xlu0 %756
        %758 = vrot.lane.b32.xlu0 %v553, 120
        %v759 = vpop.permute.xlu0 %758
        %760 = vrot.lane.b32.xlu0 %v548, 88
        %v761 = vpop.permute.xlu0 %760
        %762 = vrot.lane.b32.xlu0 %v553, 88
        %v763 = vpop.permute.xlu0 %762
        %v764 = vsel %vm562, %v757, 0
        %v766 = vsel %vm562, %v759, 0
        %v768 = vsel %vm562, %v761, 0
        %v770 = vsel %vm562, %v763, 0
        %772 = vmatprep.subr.mxu0 0.0
        %773 = vmatpush1.xpose.msra.mxu0 %v768
        %774 = vmatprep.subr.mxu0 0.0
        %775 = vmatpush1.xpose.msra.mxu0 %v770
        %776 = vmatprep.subr.mxu0 0.0
        %777 = vmatpush1.xpose.msra.mxu0 0.0
        %778 = vmatprep.subr.mxu0 0.0
        %779 = vmatpush1.xpose.msra.mxu0 0.0
        %780 = vmatprep.subr.mxu0 0.0
        %781 = vmatpush1.xpose.msra.mxu0 0.0
        %782 = vmatprep.subr.mxu0 0.0
        %783 = vmatpush1.xpose.msra.mxu0 0.0
        %784 = vmatprep.subr.mxu0 0.0
        %785 = vmatpush1.xpose.msra.mxu0 0.0
        %786 = vmatprep.subr.mxu0 0.0
        %787 = vmatpush1.xpose.msra.mxu0 0.0
        %788 = vmatprep.subr.mxu0 0.0
        %789 = vmatpush1.xpose.msra.mxu0 0.0
        %790 = vmatprep.subr.mxu0 0.0
        %791 = vmatpush1.xpose.msra.mxu0 0.0
        %792 = vmatprep.subr.mxu0 0.0
        %793 = vmatpush1.xpose.msra.mxu0 0.0
        %794 = vmatprep.subr.mxu0 0.0
        %795 = vmatpush1.xpose.msra.mxu0 0.0
        %796 = vmatprep.subr.mxu0 0.0
        %797 = vmatpush1.xpose.msra.mxu0 0.0
        %798 = vmatprep.subr.mxu0 0.0
        %799 = vmatpush1.xpose.msra.mxu0 0.0
        %800 = vmatprep.subr.mxu0 0.0
        %801 = vmatpush1.xpose.msra.mxu0 0.0
        %802 = vmatprep.subr.mxu0 0.0
        %803 = vmatpush1.xpose.msra.mxu0 0.0
        %804 = vmatprep.subr.mxu0 0.0
        %805 = vmatpush1.xpose.msra.mxu0 0.0
        %806 = vmatprep.subr.mxu0 0.0
        %807 = vmatpush1.xpose.msra.mxu0 0.0
        %808 = vmatprep.subr.mxu0 0.0
        %809 = vmatpush1.xpose.msra.mxu0 0.0
        %810 = vmatprep.subr.mxu0 0.0
        %811 = vmatpush1.xpose.msra.mxu0 0.0
        %812 = vmatprep.subr.mxu0 0.0
        %813 = vmatpush1.xpose.msra.mxu0 0.0
        %814 = vmatprep.subr.mxu0 0.0
        %815 = vmatpush1.xpose.msra.mxu0 0.0
        %816 = vmatprep.subr.mxu0 0.0
        %817 = vmatpush1.xpose.msra.mxu0 0.0
        %818 = vmatprep.subr.mxu0 0.0
        %819 = vmatpush1.xpose.msra.mxu0 0.0
        %820 = vmatprep.subr.mxu0 0.0
        %821 = vmatpush1.xpose.msra.mxu0 0.0
        %822 = vmatprep.subr.mxu0 0.0
        %823 = vmatpush1.xpose.msra.mxu0 0.0
        %824 = vmatprep.subr.mxu0 0.0
        %825 = vmatpush1.xpose.msra.mxu0 0.0
        %826 = vmatprep.subr.mxu0 0.0
        %827 = vmatpush1.xpose.msra.mxu0 0.0
        %828 = vmatprep.subr.mxu0 0.0
        %829 = vmatpush1.xpose.msra.mxu0 0.0
        %830 = vmatprep.subr.mxu0 0.0
        %831 = vmatpush1.xpose.msra.mxu0 0.0
        %832 = vmatprep.subr.mxu0 0.0
        %833 = vmatpush1.xpose.msra.mxu0 0.0
        %834 = vmatprep.subr.mxu0 0.0
        %835 = vmatpush1.xpose.msra.mxu0 0.0
        %836 = vmatprep.mubr.f32.mxu0 0.0
        %837 = vmatmul.mubr.f32.gmra.mrb[0].mxu0 %v764
        %v838 = vpop.f32.mrb[0].mxu0
        %v839 = vadd.f32 %v424, %v838
        %v840 = vpop.f32.mrb[0].mxu0
        %841 = vmatprep.mubr.f32.mxu0 0.0
        %842 = vmatmul.mubr.f32.gmra.mrb[0].mxu0 %v766
        %v843 = vpop.f32.mrb[0].mxu0
        %v844 = vadd.f32 %v425, %v843
        %v845 = vpop.f32.mrb[0].mxu0
        %846 = vdwg.mxu0
        %v847 = vsel %vm646, %v839, -inf
        %848 = vmax.xlane.f32.xlu0 %v847
        %v849 = vpop.xlane.xlu0 %848
        %v850 = vsel %vm646, %v844, -inf
        %851 = vmax.xlane.f32.xlu0 %v850
        %v852 = vpop.xlane.xlu0 %851
        %v853 = vsub.f32 %v839, %v849
        %v854 = vsub.f32 %v844, %v852
        %v855 = vmul.f32 %v853, 1.442695
        %v856 = vpow.pop %v855
        %v857 = vmul.f32 %v854, 1.442695
        %v858 = vpow.pop %v857
        %v859 = vsel %vm646, %v856, 0.0
        %860 = vadd.xlane.f32.xlu0 %v859
        %v861 = vpop.xlane.xlu0 %860
        %v862 = vsel %vm646, %v858, 0.0
        %863 = vadd.xlane.f32.xlu0 %v862
        %v864 = vpop.xlane.xlu0 %863
        %v865 = vrcp.pop %v861
        %v866 = vrcp.pop %v864
        %v867 = vmul.f32 %v856, %v865
        %v868 = vmul.f32 %v858, %v866
        %869 = vrot.lane.b32.xlu0 %v548, 56
        %v870 = vpop.permute.xlu0 %869
        %871 = vrot.lane.b32.xlu0 %v553, 56
        %v872 = vpop.permute.xlu0 %871
        %v876 = vsel %vm646, %v867, 0
        %v879 = vsel %vm646, %v868, 0
        %881 = vmatprep.subr.mxu0 0.0
        %882 = vmatpush1.msra.mxu0 %v870
        %883 = vmatprep.subr.mxu0 0.0
        %884 = vmatpush1.msra.mxu0 %v872
        %885 = vmatprep.subr.mxu0 0.0
        %886 = vmatpush1.msra.mxu0 0.0
        %887 = vmatprep.subr.mxu0 0.0
        %888 = vmatpush1.msra.mxu0 0.0
        %889 = vmatprep.subr.mxu0 0.0
        %890 = vmatpush1.msra.mxu0 0.0
        %891 = vmatprep.subr.mxu0 0.0
        %892 = vmatpush1.msra.mxu0 0.0
        %893 = vmatprep.subr.mxu0 0.0
        %894 = vmatpush1.msra.mxu0 0.0
        %895 = vmatprep.subr.mxu0 0.0
        %896 = vmatpush1.msra.mxu0 0.0
        %897 = vmatprep.subr.mxu0 0.0
        %898 = vmatpush1.msra.mxu0 0.0
        %899 = vmatprep.subr.mxu0 0.0
        %900 = vmatpush1.msra.mxu0 0.0
        %901 = vmatprep.subr.mxu0 0.0
        %902 = vmatpush1.msra.mxu0 0.0
        %903 = vmatprep.subr.mxu0 0.0
        %904 = vmatpush1.msra.mxu0 0.0
        %905 = vmatprep.subr.mxu0 0.0
        %906 = vmatpush1.msra.mxu0 0.0
        %907 = vmatprep.subr.mxu0 0.0
        %908 = vmatpush1.msra.mxu0 0.0
        %909 = vmatprep.subr.mxu0 0.0
        %910 = vmatpush1.msra.mxu0 0.0
        %911 = vmatprep.subr.mxu0 0.0
        %912 = vmatpush1.msra.mxu0 0.0
        %913 = vmatprep.subr.mxu0 0.0
        %914 = vmatpush1.msra.mxu0 0.0
        %915 = vmatprep.subr.mxu0 0.0
        %916 = vmatpush1.msra.mxu0 0.0
        %917 = vmatprep.subr.mxu0 0.0
        %918 = vmatpush1.msra.mxu0 0.0
        %919 = vmatprep.subr.mxu0 0.0
        %920 = vmatpush1.msra.mxu0 0.0
        %921 = vmatprep.subr.mxu0 0.0
        %922 = vmatpush1.msra.mxu0 0.0
        %923 = vmatprep.subr.mxu0 0.0
        %924 = vmatpush1.msra.mxu0 0.0
        %925 = vmatprep.subr.mxu0 0.0
        %926 = vmatpush1.msra.mxu0 0.0
        %927 = vmatprep.subr.mxu0 0.0
        %928 = vmatpush1.msra.mxu0 0.0
        %929 = vmatprep.subr.mxu0 0.0
        %930 = vmatpush1.msra.mxu0 0.0
        %931 = vmatprep.subr.mxu0 0.0
        %932 = vmatpush1.msra.mxu0 0.0
        %933 = vmatprep.subr.mxu0 0.0
        %934 = vmatpush1.msra.mxu0 0.0
        %935 = vmatprep.subr.mxu0 0.0
        %936 = vmatpush1.msra.mxu0 0.0
        %937 = vmatprep.subr.mxu0 0.0
        %938 = vmatpush1.msra.mxu0 0.0
        %939 = vmatprep.subr.mxu0 0.0
        %940 = vmatpush1.msra.mxu0 0.0
        %941 = vmatprep.subr.mxu0 0.0
        %942 = vmatpush1.msra.mxu0 0.0
        %943 = vmatprep.subr.mxu0 0.0
        %944 = vmatpush1.msra.mxu0 0.0
        %945 = vmatprep.mubr.f32.mxu0 0.0
        %946 = vmatmul.mubr.f32.gmra.mrb[0].mxu0 %v876
        %v947 = vpop.f32.mrb[0].mxu0
        %v948 = vadd.f32 0.0, %v947
        %v949 = vpop.f32.mrb[0].mxu0
        %950 = vmatprep.mubr.f32.mxu0 0.0
        %951 = vmatmul.mubr.f32.gmra.mrb[0].mxu0 %v879
        %v952 = vpop.f32.mrb[0].mxu0
        %v953 = vadd.f32 0.0, %v952
        %v954 = vpop.f32.mrb[0].mxu0
        %955 = vdwg.mxu0
        %956 = vrot.lane.b32.xlu0 %v548, 112
        %v957 = vpop.permute.xlu0 %956
        %958 = vrot.lane.b32.xlu0 %v553, 112
        %v959 = vpop.permute.xlu0 %958
        %960 = vrot.lane.b32.xlu0 %v548, 80
        %v961 = vpop.permute.xlu0 %960
        %962 = vrot.lane.b32.xlu0 %v553, 80
        %v963 = vpop.permute.xlu0 %962
        %v964 = vsel %vm562, %v957, 0
        %v966 = vsel %vm562, %v959, 0
        %v968 = vsel %vm562, %v961, 0
        %v970 = vsel %vm562, %v963, 0
        %972 = vmatprep.subr.mxu0 0.0
        %973 = vmatpush1.xpose.msra.mxu0 %v968
        %974 = vmatprep.subr.mxu0 0.0
        %975 = vmatpush1.xpose.msra.mxu0 %v970
        %976 = vmatprep.subr.mxu0 0.0
        %977 = vmatpush1.xpose.msra.mxu0 0.0
        %978 = vmatprep.subr.mxu0 0.0
        %979 = vmatpush1.xpose.msra.mxu0 0.0
        %980 = vmatprep.subr.mxu0 0.0
        %981 = vmatpush1.xpose.msra.mxu0 0.0
        %982 = vmatprep.subr.mxu0 0.0
        %983 = vmatpush1.xpose.msra.mxu0 0.0
        %984 = vmatprep.subr.mxu0 0.0
        %985 = vmatpush1.xpose.msra.mxu0 0.0
        %986 = vmatprep.subr.mxu0 0.0
        %987 = vmatpush1.xpose.msra.mxu0 0.0
        %988 = vmatprep.subr.mxu0 0.0
        %989 = vmatpush1.xpose.msra.mxu0 0.0
        %990 = vmatprep.subr.mxu0 0.0
        %991 = vmatpush1.xpose.msra.mxu0 0.0
        %992 = vmatprep.subr.mxu0 0.0
        %993 = vmatpush1.xpose.msra.mxu0 0.0
        %994 = vmatprep.subr.mxu0 0.0
        %995 = vmatpush1.xpose.msra.mxu0 0.0
        %996 = vmatprep.subr.mxu0 0.0
        %997 = vmatpush1.xpose.msra.mxu0 0.0
        %998 = vmatprep.subr.mxu0 0.0
        %999 = vmatpush1.xpose.msra.mxu0 0.0
        %1000 = vmatprep.subr.mxu0 0.0
        %1001 = vmatpush1.xpose.msra.mxu0 0.0
        %1002 = vmatprep.subr.mxu0 0.0
        %1003 = vmatpush1.xpose.msra.mxu0 0.0
        %1004 = vmatprep.subr.mxu0 0.0
        %1005 = vmatpush1.xpose.msra.mxu0 0.0
        %1006 = vmatprep.subr.mxu0 0.0
        %1007 = vmatpush1.xpose.msra.mxu0 0.0
        %1008 = vmatprep.subr.mxu0 0.0
        %1009 = vmatpush1.xpose.msra.mxu0 0.0
        %1010 = vmatprep.subr.mxu0 0.0
        %1011 = vmatpush1.xpose.msra.mxu0 0.0
        %1012 = vmatprep.subr.mxu0 0.0
        %1013 = vmatpush1.xpose.msra.mxu0 0.0
        %1014 = vmatprep.subr.mxu0 0.0
        %1015 = vmatpush1.xpose.msra.mxu0 0.0
        %1016 = vmatprep.subr.mxu0 0.0
        %1017 = vmatpush1.xpose.msra.mxu0 0.0
        %1018 = vmatprep.subr.mxu0 0.0
        %1019 = vmatpush1.xpose.msra.mxu0 0.0
        %1020 = vmatprep.subr.mxu0 0.0
        %1021 = vmatpush1.xpose.msra.mxu0 0.0
        %1022 = vmatprep.subr.mxu0 0.0
        %1023 = vmatpush1.xpose.msra.mxu0 0.0
        %1024 = vmatprep.subr.mxu0 0.0
        %1025 = vmatpush1.xpose.msra.mxu0 0.0
        %1026 = vmatprep.subr.mxu0 0.0
        %1027 = vmatpush1.xpose.msra.mxu0 0.0
        %1028 = vmatprep.subr.mxu0 0.0
        %1029 = vmatpush1.xpose.msra.mxu0 0.0
        %1030 = vmatprep.subr.mxu0 0.0
        %1031 = vmatpush1.xpose.msra.mxu0 0.0
        %1032 = vmatprep.subr.mxu0 0.0
        %1033 = vmatpush1.xpose.msra.mxu0 0.0
        %1034 = vmatprep.subr.mxu0 0.0
        %1035 = vmatpush1.xpose.msra.mxu0 0.0
        %1036 = vmatprep.mubr.f32.mxu0 0.0
        %1037 = vmatmul.mubr.f32.gmra.mrb[0].mxu0 %v964
        %v1038 = vpop.f32.mrb[0].mxu0
        %v1039 = vadd.f32 %v424, %v1038
        %v1040 = vpop.f32.mrb[0].mxu0
        %1041 = vmatprep.mubr.f32.mxu0 0.0
        %1042 = vmatmul.mubr.f32.gmra.mrb[0].mxu0 %v966
        %v1043 = vpop.f32.mrb[0].mxu0
        %v1044 = vadd.f32 %v425, %v1043
        %v1045 = vpop.f32.mrb[0].mxu0
        %1046 = vdwg.mxu0
        %v1047 = vsel %vm646, %v1039, -inf
        %1048 = vmax.xlane.f32.xlu0 %v1047
        %v1049 = vpop.xlane.xlu0 %1048
        %v1050 = vsel %vm646, %v1044, -inf
        %1051 = vmax.xlane.f32.xlu0 %v1050
        %v1052 = vpop.xlane.xlu0 %1051
        %v1053 = vsub.f32 %v1039, %v1049
        %v1054 = vsub.f32 %v1044, %v1052
        %v1055 = vmul.f32 %v1053, 1.442695
        %v1056 = vpow.pop %v1055
        %v1057 = vmul.f32 %v1054, 1.442695
        %v1058 = vpow.pop %v1057
        %v1059 = vsel %vm646, %v1056, 0.0
        %1060 = vadd.xlane.f32.xlu0 %v1059
        %v1061 = vpop.xlane.xlu0 %1060
        %v1062 = vsel %vm646, %v1058, 0.0
        %1063 = vadd.xlane.f32.xlu0 %v1062
        %v1064 = vpop.xlane.xlu0 %1063
        %v1065 = vrcp.pop %v1061
        %v1066 = vrcp.pop %v1064
        %v1067 = vmul.f32 %v1056, %v1065
        %v1068 = vmul.f32 %v1058, %v1066
        %1069 = vrot.lane.b32.xlu0 %v548, 48
        %v1070 = vpop.permute.xlu0 %1069
        %1071 = vrot.lane.b32.xlu0 %v553, 48
        %v1072 = vpop.permute.xlu0 %1071
        %v1076 = vsel %vm646, %v1067, 0
        %v1079 = vsel %vm646, %v1068, 0
        %1081 = vmatprep.subr.mxu0 0.0
        %1082 = vmatpush1.msra.mxu0 %v1070
        %1083 = vmatprep.subr.mxu0 0.0
        %1084 = vmatpush1.msra.mxu0 %v1072
        %1085 = vmatprep.subr.mxu0 0.0
        %1086 = vmatpush1.msra.mxu0 0.0
        %1087 = vmatprep.subr.mxu0 0.0
        %1088 = vmatpush1.msra.mxu0 0.0
        %1089 = vmatprep.subr.mxu0 0.0
        %1090 = vmatpush1.msra.mxu0 0.0
        %1091 = vmatprep.subr.mxu0 0.0
        %1092 = vmatpush1.msra.mxu0 0.0
        %1093 = vmatprep.subr.mxu0 0.0
        %1094 = vmatpush1.msra.mxu0 0.0
        %1095 = vmatprep.subr.mxu0 0.0
        %1096 = vmatpush1.msra.mxu0 0.0
        %1097 = vmatprep.subr.mxu0 0.0
        %1098 = vmatpush1.msra.mxu0 0.0
        %1099 = vmatprep.subr.mxu0 0.0
        %1100 = vmatpush1.msra.mxu0 0.0
        %1101 = vmatprep.subr.mxu0 0.0
        %1102 = vmatpush1.msra.mxu0 0.0
        %1103 = vmatprep.subr.mxu0 0.0
        %1104 = vmatpush1.msra.mxu0 0.0
        %1105 = vmatprep.subr.mxu0 0.0
        %1106 = vmatpush1.msra.mxu0 0.0
        %1107 = vmatprep.subr.mxu0 0.0
        %1108 = vmatpush1.msra.mxu0 0.0
        %1109 = vmatprep.subr.mxu0 0.0
        %1110 = vmatpush1.msra.mxu0 0.0
        %1111 = vmatprep.subr.mxu0 0.0
        %1112 = vmatpush1.msra.mxu0 0.0
        %1113 = vmatprep.subr.mxu0 0.0
        %1114 = vmatpush1.msra.mxu0 0.0
        %1115 = vmatprep.subr.mxu0 0.0
        %1116 = vmatpush1.msra.mxu0 0.0
        %1117 = vmatprep.subr.mxu0 0.0
        %1118 = vmatpush1.msra.mxu0 0.0
        %1119 = vmatprep.subr.mxu0 0.0
        %1120 = vmatpush1.msra.mxu0 0.0
        %1121 = vmatprep.subr.mxu0 0.0
        %1122 = vmatpush1.msra.mxu0 0.0
        %1123 = vmatprep.subr.mxu0 0.0
        %1124 = vmatpush1.msra.mxu0 0.0
        %1125 = vmatprep.subr.mxu0 0.0
        %1126 = vmatpush1.msra.mxu0 0.0
        %1127 = vmatprep.subr.mxu0 0.0
        %1128 = vmatpush1.msra.mxu0 0.0
        %1129 = vmatprep.subr.mxu0 0.0
        %1130 = vmatpush1.msra.mxu0 0.0
        %1131 = vmatprep.subr.mxu0 0.0
        %1132 = vmatpush1.msra.mxu0 0.0
        %1133 = vmatprep.subr.mxu0 0.0
        %1134 = vmatpush1.msra.mxu0 0.0
        %1135 = vmatprep.subr.mxu0 0.0
        %1136 = vmatpush1.msra.mxu0 0.0
        %1137 = vmatprep.subr.mxu0 0.0
        %1138 = vmatpush1.msra.mxu0 0.0
        %1139 = vmatprep.subr.mxu0 0.0
        %1140 = vmatpush1.msra.mxu0 0.0
        %1141 = vmatprep.subr.mxu0 0.0
        %1142 = vmatpush1.msra.mxu0 0.0
        %1143 = vmatprep.subr.mxu0 0.0
        %1144 = vmatpush1.msra.mxu0 0.0
        %1145 = vmatprep.mubr.f32.mxu0 0.0
        %1146 = vmatmul.mubr.f32.gmra.mrb[0].mxu0 %v1076
        %v1147 = vpop.f32.mrb[0].mxu0
        %v1148 = vadd.f32 0.0, %v1147
        %v1149 = vpop.f32.mrb[0].mxu0
        %1150 = vmatprep.mubr.f32.mxu0 0.0
        %1151 = vmatmul.mubr.f32.gmra.mrb[0].mxu0 %v1079
        %v1152 = vpop.f32.mrb[0].mxu0
        %v1153 = vadd.f32 0.0, %v1152
        %v1154 = vpop.f32.mrb[0].mxu0
        %1155 = vdwg.mxu0
        %1156 = vrot.lane.b32.xlu0 %v548, 104
        %v1157 = vpop.permute.xlu0 %1156
        %1158 = vrot.lane.b32.xlu0 %v553, 104
        %v1159 = vpop.permute.xlu0 %1158
        %1160 = vrot.lane.b32.xlu0 %v548, 72
        %v1161 = vpop.permute.xlu0 %1160
        %1162 = vrot.lane.b32.xlu0 %v553, 72
        %v1163 = vpop.permute.xlu0 %1162
        %v1164 = vsel %vm562, %v1157, 0
        %v1166 = vsel %vm562, %v1159, 0
        %v1168 = vsel %vm562, %v1161, 0
        %v1170 = vsel %vm562, %v1163, 0
        %1172 = vmatprep.subr.mxu0 0.0
        %1173 = vmatpush1.xpose.msra.mxu0 %v1168
        %1174 = vmatprep.subr.mxu0 0.0
        %1175 = vmatpush1.xpose.msra.mxu0 %v1170
        %1176 = vmatprep.subr.mxu0 0.0
        %1177 = vmatpush1.xpose.msra.mxu0 0.0
        %1178 = vmatprep.subr.mxu0 0.0
        %1179 = vmatpush1.xpose.msra.mxu0 0.0
        %1180 = vmatprep.subr.mxu0 0.0
        %1181 = vmatpush1.xpose.msra.mxu0 0.0
        %1182 = vmatprep.subr.mxu0 0.0
        %1183 = vmatpush1.xpose.msra.mxu0 0.0
        %1184 = vmatprep.subr.mxu0 0.0
        %1185 = vmatpush1.xpose.msra.mxu0 0.0
        %1186 = vmatprep.subr.mxu0 0.0
        %1187 = vmatpush1.xpose.msra.mxu0 0.0
        %1188 = vmatprep.subr.mxu0 0.0
        %1189 = vmatpush1.xpose.msra.mxu0 0.0
        %1190 = vmatprep.subr.mxu0 0.0
        %1191 = vmatpush1.xpose.msra.mxu0 0.0
        %1192 = vmatprep.subr.mxu0 0.0
        %1193 = vmatpush1.xpose.msra.mxu0 0.0
        %1194 = vmatprep.subr.mxu0 0.0
        %1195 = vmatpush1.xpose.msra.mxu0 0.0
        %1196 = vmatprep.subr.mxu0 0.0
        %1197 = vmatpush1.xpose.msra.mxu0 0.0
        %1198 = vmatprep.subr.mxu0 0.0
        %1199 = vmatpush1.xpose.msra.mxu0 0.0
        %1200 = vmatprep.subr.mxu0 0.0
        %1201 = vmatpush1.xpose.msra.mxu0 0.0
        %1202 = vmatprep.subr.mxu0 0.0
        %1203 = vmatpush1.xpose.msra.mxu0 0.0
        %1204 = vmatprep.subr.mxu0 0.0
        %1205 = vmatpush1.xpose.msra.mxu0 0.0
        %1206 = vmatprep.subr.mxu0 0.0
        %1207 = vmatpush1.xpose.msra.mxu0 0.0
        %1208 = vmatprep.subr.mxu0 0.0
        %1209 = vmatpush1.xpose.msra.mxu0 0.0
        %1210 = vmatprep.subr.mxu0 0.0
        %1211 = vmatpush1.xpose.msra.mxu0 0.0
        %1212 = vmatprep.subr.mxu0 0.0
        %1213 = vmatpush1.xpose.msra.mxu0 0.0
        %1214 = vmatprep.subr.mxu0 0.0
        %1215 = vmatpush1.xpose.msra.mxu0 0.0
        %1216 = vmatprep.subr.mxu0 0.0
        %1217 = vmatpush1.xpose.msra.mxu0 0.0
        %1218 = vmatprep.subr.mxu0 0.0
        %1219 = vmatpush1.xpose.msra.mxu0 0.0
        %1220 = vmatprep.subr.mxu0 0.0
        %1221 = vmatpush1.xpose.msra.mxu0 0.0
        %1222 = vmatprep.subr.mxu0 0.0
        %1223 = vmatpush1.xpose.msra.mxu0 0.0
        %1224 = vmatprep.subr.mxu0 0.0
        %1225 = vmatpush1.xpose.msra.mxu0 0.0
        %1226 = vmatprep.subr.mxu0 0.0
        %1227 = vmatpush1.xpose.msra.mxu0 0.0
        %1228 = vmatprep.subr.mxu0 0.0
        %1229 = vmatpush1.xpose.msra.mxu0 0.0
        %1230 = vmatprep.subr.mxu0 0.0
        %1231 = vmatpush1.xpose.msra.mxu0 0.0
        %1232 = vmatprep.subr.mxu0 0.0
        %1233 = vmatpush1.xpose.msra.mxu0 0.0
        %1234 = vmatprep.subr.mxu0 0.0
        %1235 = vmatpush1.xpose.msra.mxu0 0.0
        %1236 = vmatprep.mubr.f32.mxu0 0.0
        %1237 = vmatmul.mubr.f32.gmra.mrb[0].mxu0 %v1164
        %v1238 = vpop.f32.mrb[0].mxu0
        %v1239 = vadd.f32 %v424, %v1238
        %v1240 = vpop.f32.mrb[0].mxu0
        %1241 = vmatprep.mubr.f32.mxu0 0.0
        %1242 = vmatmul.mubr.f32.gmra.mrb[0].mxu0 %v1166
        %v1243 = vpop.f32.mrb[0].mxu0
        %v1244 = vadd.f32 %v425, %v1243
        %v1245 = vpop.f32.mrb[0].mxu0
        %1246 = vdwg.mxu0
        %v1247 = vsel %vm646, %v1239, -inf
        %1248 = vmax.xlane.f32.xlu0 %v1247
        %v1249 = vpop.xlane.xlu0 %1248
        %v1250 = vsel %vm646, %v1244, -inf
        %1251 = vmax.xlane.f32.xlu0 %v1250
        %v1252 = vpop.xlane.xlu0 %1251
        %v1253 = vsub.f32 %v1239, %v1249
        %v1254 = vsub.f32 %v1244, %v1252
        %v1255 = vmul.f32 %v1253, 1.442695
        %v1256 = vpow.pop %v1255
        %v1257 = vmul.f32 %v1254, 1.442695
        %v1258 = vpow.pop %v1257
        %v1259 = vsel %vm646, %v1256, 0.0
        %1260 = vadd.xlane.f32.xlu0 %v1259
        %v1261 = vpop.xlane.xlu0 %1260
        %v1262 = vsel %vm646, %v1258, 0.0
        %1263 = vadd.xlane.f32.xlu0 %v1262
        %v1264 = vpop.xlane.xlu0 %1263
        %v1265 = vrcp.pop %v1261
        %v1266 = vrcp.pop %v1264
        %v1267 = vmul.f32 %v1256, %v1265
        %v1268 = vmul.f32 %v1258, %v1266
        %1269 = vrot.lane.b32.xlu0 %v548, 40
        %v1270 = vpop.permute.xlu0 %1269
        %1271 = vrot.lane.b32.xlu0 %v553, 40
        %v1272 = vpop.permute.xlu0 %1271
        %v1276 = vsel %vm646, %v1267, 0
        %v1279 = vsel %vm646, %v1268, 0
        %1281 = vmatprep.subr.mxu0 0.0
        %1282 = vmatpush1.msra.mxu0 %v1270
        %1283 = vmatprep.subr.mxu0 0.0
        %1284 = vmatpush1.msra.mxu0 %v1272
        %1285 = vmatprep.subr.mxu0 0.0
        %1286 = vmatpush1.msra.mxu0 0.0
        %1287 = vmatprep.subr.mxu0 0.0
        %1288 = vmatpush1.msra.mxu0 0.0
        %1289 = vmatprep.subr.mxu0 0.0
        %1290 = vmatpush1.msra.mxu0 0.0
        %1291 = vmatprep.subr.mxu0 0.0
        %1292 = vmatpush1.msra.mxu0 0.0
        %1293 = vmatprep.subr.mxu0 0.0
        %1294 = vmatpush1.msra.mxu0 0.0
        %1295 = vmatprep.subr.mxu0 0.0
        %1296 = vmatpush1.msra.mxu0 0.0
        %1297 = vmatprep.subr.mxu0 0.0
        %1298 = vmatpush1.msra.mxu0 0.0
        %1299 = vmatprep.subr.mxu0 0.0
        %1300 = vmatpush1.msra.mxu0 0.0
        %1301 = vmatprep.subr.mxu0 0.0
        %1302 = vmatpush1.msra.mxu0 0.0
        %1303 = vmatprep.subr.mxu0 0.0
        %1304 = vmatpush1.msra.mxu0 0.0
        %1305 = vmatprep.subr.mxu0 0.0
        %1306 = vmatpush1.msra.mxu0 0.0
        %1307 = vmatprep.subr.mxu0 0.0
        %1308 = vmatpush1.msra.mxu0 0.0
        %1309 = vmatprep.subr.mxu0 0.0
        %1310 = vmatpush1.msra.mxu0 0.0
        %1311 = vmatprep.subr.mxu0 0.0
        %1312 = vmatpush1.msra.mxu0 0.0
        %1313 = vmatprep.subr.mxu0 0.0
        %1314 = vmatpush1.msra.mxu0 0.0
        %1315 = vmatprep.subr.mxu0 0.0
        %1316 = vmatpush1.msra.mxu0 0.0
        %1317 = vmatprep.subr.mxu0 0.0
        %1318 = vmatpush1.msra.mxu0 0.0
        %1319 = vmatprep.subr.mxu0 0.0
        %1320 = vmatpush1.msra.mxu0 0.0
        %1321 = vmatprep.subr.mxu0 0.0
        %1322 = vmatpush1.msra.mxu0 0.0
        %1323 = vmatprep.subr.mxu0 0.0
        %1324 = vmatpush1.msra.mxu0 0.0
        %1325 = vmatprep.subr.mxu0 0.0
        %1326 = vmatpush1.msra.mxu0 0.0
        %1327 = vmatprep.subr.mxu0 0.0
        %1328 = vmatpush1.msra.mxu0 0.0
        %1329 = vmatprep.subr.mxu0 0.0
        %1330 = vmatpush1.msra.mxu0 0.0
        %1331 = vmatprep.subr.mxu0 0.0
        %1332 = vmatpush1.msra.mxu0 0.0
        %1333 = vmatprep.subr.mxu0 0.0
        %1334 = vmatpush1.msra.mxu0 0.0
        %1335 = vmatprep.subr.mxu0 0.0
        %1336 = vmatpush1.msra.mxu0 0.0
        %1337 = vmatprep.subr.mxu0 0.0
        %1338 = vmatpush1.msra.mxu0 0.0
        %1339 = vmatprep.subr.mxu0 0.0
        %1340 = vmatpush1.msra.mxu0 0.0
        %1341 = vmatprep.subr.mxu0 0.0
        %1342 = vmatpush1.msra.mxu0 0.0
        %1343 = vmatprep.subr.mxu0 0.0
        %1344 = vmatpush1.msra.mxu0 0.0
        %1345 = vmatprep.mubr.f32.mxu0 0.0
        %1346 = vmatmul.mubr.f32.gmra.mrb[0].mxu0 %v1276
        %v1347 = vpop.f32.mrb[0].mxu0
        %v1348 = vadd.f32 0.0, %v1347
        %v1349 = vpop.f32.mrb[0].mxu0
        %1350 = vmatprep.mubr.f32.mxu0 0.0
        %1351 = vmatmul.mubr.f32.gmra.mrb[0].mxu0 %v1279
        %v1352 = vpop.f32.mrb[0].mxu0
        %v1353 = vadd.f32 0.0, %v1352
        %v1354 = vpop.f32.mrb[0].mxu0
        %1355 = vdwg.mxu0
        %1358 = vrot.lane.b32.xlu0 %v948, 8
        %v1359 = vpop.permute.xlu0 %1358
        %1360 = vrot.lane.b32.xlu0 %v953, 8
        %v1361 = vpop.permute.xlu0 %1360
        %1366 = vrot.lane.b32.xlu0 %v1148, 16
        %v1367 = vpop.permute.xlu0 %1366
        %1368 = vrot.lane.b32.xlu0 %v1153, 16
        %v1369 = vpop.permute.xlu0 %1368
        %1374 = vrot.lane.b32.xlu0 %v1348, 24
        %v1375 = vpop.permute.xlu0 %1374
        %1376 = vrot.lane.b32.xlu0 %v1353, 24
        %v1377 = vpop.permute.xlu0 %1376
        %v1380 = vsel %vm562, %v748, %v1359
        %v1381 = vsel %vm562, %v753, %v1361
        %v1382 = vsel %vm646, %v1380, %v1367
        %v1383 = vsel %vm646, %v1381, %v1369
        %vm1384 = vcmask 195584
        %v1385 = vsel %vm1384, %v1382, %v1375
        %v1386 = vsel %vm1384, %v1383, %v1377
        %v1387 = vld [vmem:[%s4] sm:$0xff]
        %v1388 = vld [vmem:[%s4 + $0x8] sm:$0xff]
        %v1389 = vld [vmem:[%s4 + $0x10] sm:$0xff]
        %v1390 = vld [vmem:[%s4 + $0x18] sm:$0xff]
        %v1391 = vlaneseq
        %v1392 = vshrl.u32 %v1391, 7
        %v1393 = vsub.s32 6, %v1392
        %v1394 = vrot.slane %v426, %v1393
        %v1396 = vsel %vm427, %v1385, 0
        %v1399 = vsel %vm427, %v1386, 0
        %1401 = vmatprep.subr.mxu0 0.0
        %1402 = vmatpush1.msra.mxu0 %v1387
        %1403 = vmatprep.subr.mxu0 0.0
        %1404 = vmatpush1.msra.mxu0 %v1388
        %1405 = vmatprep.subr.mxu0 0.0
        %1406 = vmatpush1.msra.mxu0 %v1389
        %1407 = vmatprep.subr.mxu0 0.0
        %1408 = vmatpush1.msra.mxu0 %v1390
        %1409 = vmatprep.subr.mxu0 0.0
        %1410 = vmatpush1.msra.mxu0 0.0
        %1411 = vmatprep.subr.mxu0 0.0
        %1412 = vmatpush1.msra.mxu0 0.0
        %1413 = vmatprep.subr.mxu0 0.0
        %1414 = vmatpush1.msra.mxu0 0.0
        %1415 = vmatprep.subr.mxu0 0.0
        %1416 = vmatpush1.msra.mxu0 0.0
        %1417 = vmatprep.subr.mxu0 0.0
        %1418 = vmatpush1.msra.mxu0 0.0
        %1419 = vmatprep.subr.mxu0 0.0
        %1420 = vmatpush1.msra.mxu0 0.0
        %1421 = vmatprep.subr.mxu0 0.0
        %1422 = vmatpush1.msra.mxu0 0.0
        %1423 = vmatprep.subr.mxu0 0.0
        %1424 = vmatpush1.msra.mxu0 0.0
        %1425 = vmatprep.subr.mxu0 0.0
        %1426 = vmatpush1.msra.mxu0 0.0
        %1427 = vmatprep.subr.mxu0 0.0
        %1428 = vmatpush1.msra.mxu0 0.0
        %1429 = vmatprep.subr.mxu0 0.0
        %1430 = vmatpush1.msra.mxu0 0.0
        %1431 = vmatprep.subr.mxu0 0.0
        %1432 = vmatpush1.msra.mxu0 0.0
        %1433 = vmatprep.subr.mxu0 0.0
        %1434 = vmatpush1.msra.mxu0 0.0
        %1435 = vmatprep.subr.mxu0 0.0
        %1436 = vmatpush1.msra.mxu0 0.0
        %1437 = vmatprep.subr.mxu0 0.0
        %1438 = vmatpush1.msra.mxu0 0.0
        %1439 = vmatprep.subr.mxu0 0.0
        %1440 = vmatpush1.msra.mxu0 0.0
        %1441 = vmatprep.subr.mxu0 0.0
        %1442 = vmatpush1.msra.mxu0 0.0
        %1443 = vmatprep.subr.mxu0 0.0
        %1444 = vmatpush1.msra.mxu0 0.0
        %1445 = vmatprep.subr.mxu0 0.0
        %1446 = vmatpush1.msra.mxu0 0.0
        %1447 = vmatprep.subr.mxu0 0.0
        %1448 = vmatpush1.msra.mxu0 0.0
        %1449 = vmatprep.subr.mxu0 0.0
        %1450 = vmatpush1.msra.mxu0 0.0
        %1451 = vmatprep.subr.mxu0 0.0
        %1452 = vmatpush1.msra.mxu0 0.0
        %1453 = vmatprep.subr.mxu0 0.0
        %1454 = vmatpush1.msra.mxu0 0.0
        %1455 = vmatprep.subr.mxu0 0.0
        %1456 = vmatpush1.msra.mxu0 0.0
        %1457 = vmatprep.subr.mxu0 0.0
        %1458 = vmatpush1.msra.mxu0 0.0
        %1459 = vmatprep.subr.mxu0 0.0
        %1460 = vmatpush1.msra.mxu0 0.0
        %1461 = vmatprep.subr.mxu0 0.0
        %1462 = vmatpush1.msra.mxu0 0.0
        %1463 = vmatprep.subr.mxu0 0.0
        %1464 = vmatpush1.msra.mxu0 0.0
        %1465 = vmatprep.mubr.f32.mxu0 0.0
        %1466 = vmatmul.mubr.f32.gmra.mrb[0].mxu0 %v1396
        %v1467 = vpop.f32.mrb[0].mxu0
        %v1468 = vadd.f32 %v1394, %v1467
        %v1469 = vpop.f32.mrb[0].mxu0
        %1470 = vmatprep.mubr.f32.mxu0 0.0
        %1471 = vmatmul.mubr.f32.gmra.mrb[0].mxu0 %v1399
        %v1472 = vpop.f32.mrb[0].mxu0
        %v1473 = vadd.f32 %v1394, %v1472
        %v1474 = vpop.f32.mrb[0].mxu0
        %1475 = vdwg.mxu0
        %v1476 = vadd.f32 %v1468, %v422
        %v1477 = vadd.f32 %v1473, %v423
        %v1478 = vsel %vm427, %v1476, 0.0
        %1479 = vadd.xlane.f32.xlu0 %v1478
        %v1480 = vpop.xlane.xlu0 %1479
        %v1481 = vsel %vm427, %v1477, 0.0
        %1482 = vadd.xlane.f32.xlu0 %v1481
        %v1483 = vpop.xlane.xlu0 %1482
        %v1484 = vmul.f32 %v1480, %v434
        %v1485 = vmul.f32 %v1483, %v434
        %v1486 = vsub.f32 %v1476, %v1484
        %v1487 = vsub.f32 %v1477, %v1485
        %v1488 = vmul.f32 %v1486, %v1486
        %v1489 = vmul.f32 %v1487, %v1487
        %v1490 = vsel %vm427, %v1488, 0.0
        %1491 = vadd.xlane.f32.xlu0 %v1490
        %v1492 = vpop.xlane.xlu0 %1491
        %v1493 = vsel %vm427, %v1489, 0.0
        %1494 = vadd.xlane.f32.xlu0 %v1493
        %v1495 = vpop.xlane.xlu0 %1494
        %v1496 = vmul.f32 %v1492, %v434
        %v1497 = vmul.f32 %v1495, %v434
        %v1498 = vadd.f32 %v1496, 1e-05
        %v1499 = vadd.f32 %v1497, 1e-05
        %v1500 = vrsqrt.pop %v1498
        %v1501 = vrsqrt.pop %v1499
        %v1502 = vmul.f32 %v1486, %v1500
        %v1503 = vmul.f32 %v1487, %v1501
        %v1504 = vlaneseq
        %v1505 = vshrl.u32 %v1504, 7
        %v1506 = vsub.s32 2, %v1505
        %v1507 = vrot.slane %v426, %v1506
        %v1508 = vmul.f32 %v1502, %v1507
        %v1509 = vmul.f32 %v1503, %v1507
        %v1510 = vlaneseq
        %v1511 = vshrl.u32 %v1510, 7
        %v1512 = vsub.s32 3, %v1511
        %v1513 = vrot.slane %v426, %v1512
        %v1514 = vadd.f32 %v1508, %v1513
        %v1515 = vadd.f32 %v1509, %v1513
        %v1516 = vld [vmem:[%s5] sm:$0xff]
        %v1517 = vld [vmem:[%s5 + $0x8] sm:$0xff]
        %v1518 = vld [vmem:[%s5 + $0x10] sm:$0xff]
        %v1519 = vld [vmem:[%s5 + $0x18] sm:$0xff]
        %v1520 = vlaneseq
        %v1521 = vshrl.u32 %v1520, 7
        %v1522 = vsub.s32 5, %v1521
        %v1523 = vrot.slane %v426, %v1522
        %v1525 = vsel %vm427, %v1514, 0
        %v1528 = vsel %vm427, %v1515, 0
        %1530 = vmatprep.subr.mxu0 0.0
        %1531 = vmatpush1.msra.mxu0 %v1516
        %1532 = vmatprep.subr.mxu0 0.0
        %1533 = vmatpush1.msra.mxu0 %v1517
        %1534 = vmatprep.subr.mxu0 0.0
        %1535 = vmatpush1.msra.mxu0 %v1518
        %1536 = vmatprep.subr.mxu0 0.0
        %1537 = vmatpush1.msra.mxu0 %v1519
        %1538 = vmatprep.subr.mxu0 0.0
        %1539 = vmatpush1.msra.mxu0 0.0
        %1540 = vmatprep.subr.mxu0 0.0
        %1541 = vmatpush1.msra.mxu0 0.0
        %1542 = vmatprep.subr.mxu0 0.0
        %1543 = vmatpush1.msra.mxu0 0.0
        %1544 = vmatprep.subr.mxu0 0.0
        %1545 = vmatpush1.msra.mxu0 0.0
        %1546 = vmatprep.subr.mxu0 0.0
        %1547 = vmatpush1.msra.mxu0 0.0
        %1548 = vmatprep.subr.mxu0 0.0
        %1549 = vmatpush1.msra.mxu0 0.0
        %1550 = vmatprep.subr.mxu0 0.0
        %1551 = vmatpush1.msra.mxu0 0.0
        %1552 = vmatprep.subr.mxu0 0.0
        %1553 = vmatpush1.msra.mxu0 0.0
        %1554 = vmatprep.subr.mxu0 0.0
        %1555 = vmatpush1.msra.mxu0 0.0
        %1556 = vmatprep.subr.mxu0 0.0
        %1557 = vmatpush1.msra.mxu0 0.0
        %1558 = vmatprep.subr.mxu0 0.0
        %1559 = vmatpush1.msra.mxu0 0.0
        %1560 = vmatprep.subr.mxu0 0.0
        %1561 = vmatpush1.msra.mxu0 0.0
        %1562 = vmatprep.subr.mxu0 0.0
        %1563 = vmatpush1.msra.mxu0 0.0
        %1564 = vmatprep.subr.mxu0 0.0
        %1565 = vmatpush1.msra.mxu0 0.0
        %1566 = vmatprep.subr.mxu0 0.0
        %1567 = vmatpush1.msra.mxu0 0.0
        %1568 = vmatprep.subr.mxu0 0.0
        %1569 = vmatpush1.msra.mxu0 0.0
        %1570 = vmatprep.subr.mxu0 0.0
        %1571 = vmatpush1.msra.mxu0 0.0
        %1572 = vmatprep.subr.mxu0 0.0
        %1573 = vmatpush1.msra.mxu0 0.0
        %1574 = vmatprep.subr.mxu0 0.0
        %1575 = vmatpush1.msra.mxu0 0.0
        %1576 = vmatprep.subr.mxu0 0.0
        %1577 = vmatpush1.msra.mxu0 0.0
        %1578 = vmatprep.subr.mxu0 0.0
        %1579 = vmatpush1.msra.mxu0 0.0
        %1580 = vmatprep.subr.mxu0 0.0
        %1581 = vmatpush1.msra.mxu0 0.0
        %1582 = vmatprep.subr.mxu0 0.0
        %1583 = vmatpush1.msra.mxu0 0.0
        %1584 = vmatprep.subr.mxu0 0.0
        %1585 = vmatpush1.msra.mxu0 0.0
        %1586 = vmatprep.subr.mxu0 0.0
        %1587 = vmatpush1.msra.mxu0 0.0
        %1588 = vmatprep.subr.mxu0 0.0
        %1589 = vmatpush1.msra.mxu0 0.0
        %1590 = vmatprep.subr.mxu0 0.0
        %1591 = vmatpush1.msra.mxu0 0.0
        %1592 = vmatprep.subr.mxu0 0.0
        %1593 = vmatpush1.msra.mxu0 0.0
        %1594 = vmatprep.mubr.f32.mxu0 0.0
        %1595 = vmatmul.mubr.f32.gmra.mrb[0].mxu0 %v1525
        %v1596 = vpop.f32.mrb[0].mxu0
        %v1597 = vadd.f32 %v1523, %v1596
        %v1598 = vpop.f32.mrb[0].mxu0
        %1599 = vmatprep.mubr.f32.mxu0 0.0
        %1600 = vmatmul.mubr.f32.gmra.mrb[0].mxu0 %v1528
        %v1601 = vpop.f32.mrb[0].mxu0
        %v1602 = vadd.f32 %v1523, %v1601
        %v1603 = vpop.f32.mrb[0].mxu0
        %1604 = vdwg.mxu0
        %v1605 = vmul.f32 %v1597, 0.5
        %v1606 = vmul.f32 %v1602, 0.5
        %v1607 = vmul.f32 %v1597, 0.70710677
        %v1608 = vmul.f32 %v1602, 0.70710677
        %v1609 = vand.u32 2147483647, %v1607
        %v1610 = vand.u32 2147483647, %v1608
        %v1611 = vmul.f32 %v1609, 0.3275911
        %v1612 = vmul.f32 %v1610, 0.3275911
        %v1613 = vadd.f32 %v1611, 1.0
        %v1614 = vadd.f32 %v1612, 1.0
        %v1615 = vrcp.pop %v1613
        %v1616 = vmul.f32 1.0, %v1615
        %v1617 = vrcp.pop %v1614
        %v1618 = vmul.f32 1.0, %v1617
        %v1619 = vmul.f32 %v1616, 1.0614054
        %v1620 = vmul.f32 %v1618, 1.0614054
        %v1621 = vadd.f32 %v1619, -1.4531521
        %v1622 = vadd.f32 %v1620, -1.4531521
        %v1623 = vmul.f32 %v1621, %v1616
        %v1624 = vmul.f32 %v1622, %v1618
        %v1625 = vadd.f32 %v1623, 1.4214138
        %v1626 = vadd.f32 %v1624, 1.4214138
        %v1627 = vmul.f32 %v1625, %v1616
        %v1628 = vmul.f32 %v1626, %v1618
        %v1629 = vadd.f32 %v1627, -0.28449672
        %v1630 = vadd.f32 %v1628, -0.28449672
        %v1631 = vmul.f32 %v1629, %v1616
        %v1632 = vmul.f32 %v1630, %v1618
        %v1633 = vadd.f32 %v1631, 0.2548296
        %v1634 = vadd.f32 %v1632, 0.2548296
        %v1635 = vmul.f32 %v1633, %v1616
        %v1636 = vmul.f32 %v1634, %v1618
        %v1637 = vsub.f32 0.0, %v1609
        %v1638 = vsub.f32 0.0, %v1610
        %v1639 = vmul.f32 %v1637, %v1609
        %v1640 = vmul.f32 %v1638, %v1610
        %v1641 = vmul.f32 %v1639, 1.442695
        %v1642 = vpow.pop %v1641
        %v1643 = vmul.f32 %v1640, 1.442695
        %v1644 = vpow.pop %v1643
        %v1645 = vmul.f32 %v1635, %v1642
        %v1646 = vmul.f32 %v1636, %v1644
        %v1647 = vsub.f32 1.0, %v1645
        %v1648 = vsub.f32 1.0, %v1646
        %vm1649 = vcmp.ge.f32.partialorder %v1607, 0.0
        %vm1650 = vcmp.ge.f32.partialorder %v1608, 0.0
        %v1651 = vsub.f32 0.0, %v1647
        %v1652 = vsub.f32 0.0, %v1648
        %v1653 = vsel %vm1649, %v1647, %v1651
        %v1654 = vsel %vm1650, %v1648, %v1652
        %v1655 = vadd.f32 %v1653, 1.0
        %v1656 = vadd.f32 %v1654, 1.0
        %v1657 = vmul.f32 %v1605, %v1655
        %v1658 = vmul.f32 %v1606, %v1656
        %v1659 = vld [vmem:[%s6] sm:$0xff]
        %v1660 = vld [vmem:[%s6 + $0x8] sm:$0xff]
        %v1661 = vld [vmem:[%s6 + $0x10] sm:$0xff]
        %v1662 = vld [vmem:[%s6 + $0x18] sm:$0xff]
        %v1663 = vld [vmem:[%s6 + $0x20] sm:$0xff]
        %v1664 = vld [vmem:[%s6 + $0x28] sm:$0xff]
        %v1665 = vld [vmem:[%s6 + $0x30] sm:$0xff]
        %v1666 = vld [vmem:[%s6 + $0x38] sm:$0xff]
        %v1667 = vlaneseq
        %v1668 = vshrl.u32 %v1667, 7
        %v1669 = vsub.s32 7, %v1668
        %v1670 = vrot.slane %v426, %v1669
        %vm1671 = vcmask 523264
        %v1673 = vsel %vm1671, %v1657, 0
        %v1676 = vsel %vm1671, %v1658, 0
        %1678 = vmatprep.subr.mxu0 0.0
        %1679 = vmatpush1.msra.mxu0 %v1659
        %1680 = vmatprep.subr.mxu0 0.0
        %1681 = vmatpush1.msra.mxu0 %v1660
        %1682 = vmatprep.subr.mxu0 0.0
        %1683 = vmatpush1.msra.mxu0 %v1661
        %1684 = vmatprep.subr.mxu0 0.0
        %1685 = vmatpush1.msra.mxu0 %v1662
        %1686 = vmatprep.subr.mxu0 0.0
        %1687 = vmatpush1.msra.mxu0 %v1663
        %1688 = vmatprep.subr.mxu0 0.0
        %1689 = vmatpush1.msra.mxu0 %v1664
        %1690 = vmatprep.subr.mxu0 0.0
        %1691 = vmatpush1.msra.mxu0 %v1665
        %1692 = vmatprep.subr.mxu0 0.0
        %1693 = vmatpush1.msra.mxu0 %v1666
        %1694 = vmatprep.subr.mxu0 0.0
        %1695 = vmatpush1.msra.mxu0 0.0
        %1696 = vmatprep.subr.mxu0 0.0
        %1697 = vmatpush1.msra.mxu0 0.0
        %1698 = vmatprep.subr.mxu0 0.0
        %1699 = vmatpush1.msra.mxu0 0.0
        %1700 = vmatprep.subr.mxu0 0.0
        %1701 = vmatpush1.msra.mxu0 0.0
        %1702 = vmatprep.subr.mxu0 0.0
        %1703 = vmatpush1.msra.mxu0 0.0
        %1704 = vmatprep.subr.mxu0 0.0
        %1705 = vmatpush1.msra.mxu0 0.0
        %1706 = vmatprep.subr.mxu0 0.0
        %1707 = vmatpush1.msra.mxu0 0.0
        %1708 = vmatprep.subr.mxu0 0.0
        %1709 = vmatpush1.msra.mxu0 0.0
        %1710 = vmatprep.subr.mxu0 0.0
        %1711 = vmatpush1.msra.mxu0 0.0
        %1712 = vmatprep.subr.mxu0 0.0
        %1713 = vmatpush1.msra.mxu0 0.0
        %1714 = vmatprep.subr.mxu0 0.0
        %1715 = vmatpush1.msra.mxu0 0.0
        %1716 = vmatprep.subr.mxu0 0.0
        %1717 = vmatpush1.msra.mxu0 0.0
        %1718 = vmatprep.subr.mxu0 0.0
        %1719 = vmatpush1.msra.mxu0 0.0
        %1720 = vmatprep.subr.mxu0 0.0
        %1721 = vmatpush1.msra.mxu0 0.0
        %1722 = vmatprep.subr.mxu0 0.0
        %1723 = vmatpush1.msra.mxu0 0.0
        %1724 = vmatprep.subr.mxu0 0.0
        %1725 = vmatpush1.msra.mxu0 0.0
        %1726 = vmatprep.subr.mxu0 0.0
        %1727 = vmatpush1.msra.mxu0 0.0
        %1728 = vmatprep.subr.mxu0 0.0
        %1729 = vmatpush1.msra.mxu0 0.0
        %1730 = vmatprep.subr.mxu0 0.0
        %1731 = vmatpush1.msra.mxu0 0.0
        %1732 = vmatprep.subr.mxu0 0.0
        %1733 = vmatpush1.msra.mxu0 0.0
        %1734 = vmatprep.subr.mxu0 0.0
        %1735 = vmatpush1.msra.mxu0 0.0
        %1736 = vmatprep.subr.mxu0 0.0
        %1737 = vmatpush1.msra.mxu0 0.0
        %1738 = vmatprep.subr.mxu0 0.0
        %1739 = vmatpush1.msra.mxu0 0.0
        %1740 = vmatprep.subr.mxu0 0.0
        %1741 = vmatpush1.msra.mxu0 0.0
        %1742 = vmatprep.mubr.f32.mxu0 0.0
        %1743 = vmatmul.mubr.f32.gmra.mrb[0].mxu0 %v1673
        %v1744 = vpop.f32.mrb[0].mxu0
        %v1745 = vadd.f32 %v1670, %v1744
        %v1746 = vpop.f32.mrb[0].mxu0
        %1747 = vmatprep.mubr.f32.mxu0 0.0
        %1748 = vmatmul.mubr.f32.gmra.mrb[0].mxu0 %v1676
        %v1749 = vpop.f32.mrb[0].mxu0
        %v1750 = vadd.f32 %v1670, %v1749
        %v1751 = vpop.f32.mrb[0].mxu0
        %1752 = vdwg.mxu0
        %v1753 = vadd.f32 %v1745, %v1476
        %v1754 = vadd.f32 %v1750, %v1477
        %1755 = vst.msk [vmem:[%s415] sm:$0xff] %vm427, %v1753
        %1756 = vst.msk [vmem:[%s415 + $0x8] sm:$0xff] %vm427, %v1754
        %s1757 = scalar_lea.vmem %s7, 8
        %v1758 = vld [vmem:[%s1757] sm:$0xff]
        %v1759 = vsel %vm427, %v1753, 0.0
        %1760 = vadd.xlane.f32.xlu0 %v1759
        %v1761 = vpop.xlane.xlu0 %1760
        %v1762 = vsel %vm427, %v1754, 0.0
        %1763 = vadd.xlane.f32.xlu0 %v1762
        %v1764 = vpop.xlane.xlu0 %1763
        %v1765 = vmul.f32 %v1761, %v434
        %v1766 = vmul.f32 %v1764, %v434
        %v1767 = vsub.f32 %v1753, %v1765
        %v1768 = vsub.f32 %v1754, %v1766
        %v1769 = vmul.f32 %v1767, %v1767
        %v1770 = vmul.f32 %v1768, %v1768
        %v1771 = vsel %vm427, %v1769, 0.0
        %1772 = vadd.xlane.f32.xlu0 %v1771
        %v1773 = vpop.xlane.xlu0 %1772
        %v1774 = vsel %vm427, %v1770, 0.0
        %1775 = vadd.xlane.f32.xlu0 %v1774
        %v1776 = vpop.xlane.xlu0 %1775
        %v1777 = vmul.f32 %v1773, %v434
        %v1778 = vmul.f32 %v1776, %v434
        %v1779 = vadd.f32 %v1777, 1e-05
        %v1780 = vadd.f32 %v1778, 1e-05
        %v1781 = vrsqrt.pop %v1779
        %v1782 = vrsqrt.pop %v1780
        %v1783 = vmul.f32 %v1767, %v1781
        %v1784 = vmul.f32 %v1768, %v1782
        %v1785 = vlaneseq
        %v1786 = vshrl.u32 %v1785, 7
        %v1787 = vsub.s32 0, %v1786
        %v1788 = vrot.slane %v1758, %v1787
        %v1789 = vmul.f32 %v1783, %v1788
        %v1790 = vmul.f32 %v1784, %v1788
        %v1791 = vlaneseq
        %v1792 = vshrl.u32 %v1791, 7
        %v1793 = vsub.s32 1, %v1792
        %v1794 = vrot.slane %v1758, %v1793
        %v1795 = vadd.f32 %v1789, %v1794
        %v1796 = vadd.f32 %v1790, %v1794
        %s1797 = scalar_lea.vmem %s3, 32
        %v1798 = vld [vmem:[%s1797] sm:$0xff]
        %v1799 = vld [vmem:[%s1797 + $0x8] sm:$0xff]
        %v1800 = vld [vmem:[%s1797 + $0x10] sm:$0xff]
        %v1801 = vld [vmem:[%s1797 + $0x18] sm:$0xff]
        %v1802 = vlaneseq
        %v1803 = vshrl.u32 %v1802, 7
        %v1804 = vsub.s32 4, %v1803
        %v1805 = vrot.slane %v1758, %v1804
        %v1807 = vsel %vm427, %v1795, 0
        %v1810 = vsel %vm427, %v1796, 0
        %1812 = vmatprep.subr.mxu0 0.0
        %1813 = vmatpush1.msra.mxu0 %v1798
        %1814 = vmatprep.subr.mxu0 0.0
        %1815 = vmatpush1.msra.mxu0 %v1799
        %1816 = vmatprep.subr.mxu0 0.0
        %1817 = vmatpush1.msra.mxu0 %v1800
        %1818 = vmatprep.subr.mxu0 0.0
        %1819 = vmatpush1.msra.mxu0 %v1801
        %1820 = vmatprep.subr.mxu0 0.0
        %1821 = vmatpush1.msra.mxu0 0.0
        %1822 = vmatprep.subr.mxu0 0.0
        %1823 = vmatpush1.msra.mxu0 0.0
        %1824 = vmatprep.subr.mxu0 0.0
        %1825 = vmatpush1.msra.mxu0 0.0
        %1826 = vmatprep.subr.mxu0 0.0
        %1827 = vmatpush1.msra.mxu0 0.0
        %1828 = vmatprep.subr.mxu0 0.0
        %1829 = vmatpush1.msra.mxu0 0.0
        %1830 = vmatprep.subr.mxu0 0.0
        %1831 = vmatpush1.msra.mxu0 0.0
        %1832 = vmatprep.subr.mxu0 0.0
        %1833 = vmatpush1.msra.mxu0 0.0
        %1834 = vmatprep.subr.mxu0 0.0
        %1835 = vmatpush1.msra.mxu0 0.0
        %1836 = vmatprep.subr.mxu0 0.0
        %1837 = vmatpush1.msra.mxu0 0.0
        %1838 = vmatprep.subr.mxu0 0.0
        %1839 = vmatpush1.msra.mxu0 0.0
        %1840 = vmatprep.subr.mxu0 0.0
        %1841 = vmatpush1.msra.mxu0 0.0
        %1842 = vmatprep.subr.mxu0 0.0
        %1843 = vmatpush1.msra.mxu0 0.0
        %1844 = vmatprep.subr.mxu0 0.0
        %1845 = vmatpush1.msra.mxu0 0.0
        %1846 = vmatprep.subr.mxu0 0.0
        %1847 = vmatpush1.msra.mxu0 0.0
        %1848 = vmatprep.subr.mxu0 0.0
        %1849 = vmatpush1.msra.mxu0 0.0
        %1850 = vmatprep.subr.mxu0 0.0
        %1851 = vmatpush1.msra.mxu0 0.0
        %1852 = vmatprep.subr.mxu0 0.0
        %1853 = vmatpush1.msra.mxu0 0.0
        %1854 = vmatprep.subr.mxu0 0.0
        %1855 = vmatpush1.msra.mxu0 0.0
        %1856 = vmatprep.subr.mxu0 0.0
        %1857 = vmatpush1.msra.mxu0 0.0
        %1858 = vmatprep.subr.mxu0 0.0
        %1859 = vmatpush1.msra.mxu0 0.0
        %1860 = vmatprep.subr.mxu0 0.0
        %1861 = vmatpush1.msra.mxu0 0.0
        %1862 = vmatprep.subr.mxu0 0.0
        %1863 = vmatpush1.msra.mxu0 0.0
        %1864 = vmatprep.subr.mxu0 0.0
        %1865 = vmatpush1.msra.mxu0 0.0
        %1866 = vmatprep.subr.mxu0 0.0
        %1867 = vmatpush1.msra.mxu0 0.0
        %1868 = vmatprep.subr.mxu0 0.0
        %1869 = vmatpush1.msra.mxu0 0.0
        %1870 = vmatprep.subr.mxu0 0.0
        %1871 = vmatpush1.msra.mxu0 0.0
        %1872 = vmatprep.subr.mxu0 0.0
        %1873 = vmatpush1.msra.mxu0 0.0
        %1874 = vmatprep.subr.mxu0 0.0
        %1875 = vmatpush1.msra.mxu0 0.0
        %1876 = vmatprep.mubr.f32.mxu0 0.0
        %1877 = vmatmul.mubr.f32.gmra.mrb[0].mxu0 %v1807
        %v1878 = vpop.f32.mrb[0].mxu0
        %v1879 = vadd.f32 %v1805, %v1878
        %v1880 = vpop.f32.mrb[0].mxu0
        %1881 = vmatprep.mubr.f32.mxu0 0.0
        %1882 = vmatmul.mubr.f32.gmra.mrb[0].mxu0 %v1810
        %v1883 = vpop.f32.mrb[0].mxu0
        %v1884 = vadd.f32 %v1805, %v1883
        %v1885 = vpop.f32.mrb[0].mxu0
        %1886 = vdwg.mxu0
        %1889 = vrot.lane.b32.xlu0 %v1879, 96
        %v1890 = vpop.permute.xlu0 %1889
        %1891 = vrot.lane.b32.xlu0 %v1884, 96
        %v1892 = vpop.permute.xlu0 %1891
        %v1893 = vsel %vm562, %v1879, 0
        %v1895 = vsel %vm562, %v1884, 0
        %v1897 = vsel %vm562, %v1890, 0
        %v1899 = vsel %vm562, %v1892, 0
        %1901 = vmatprep.subr.mxu0 0.0
        %1902 = vmatpush1.xpose.msra.mxu0 %v1897
        %1903 = vmatprep.subr.mxu0 0.0
        %1904 = vmatpush1.xpose.msra.mxu0 %v1899
        %1905 = vmatprep.subr.mxu0 0.0
        %1906 = vmatpush1.xpose.msra.mxu0 0.0
        %1907 = vmatprep.subr.mxu0 0.0
        %1908 = vmatpush1.xpose.msra.mxu0 0.0
        %1909 = vmatprep.subr.mxu0 0.0
        %1910 = vmatpush1.xpose.msra.mxu0 0.0
        %1911 = vmatprep.subr.mxu0 0.0
        %1912 = vmatpush1.xpose.msra.mxu0 0.0
        %1913 = vmatprep.subr.mxu0 0.0
        %1914 = vmatpush1.xpose.msra.mxu0 0.0
        %1915 = vmatprep.subr.mxu0 0.0
        %1916 = vmatpush1.xpose.msra.mxu0 0.0
        %1917 = vmatprep.subr.mxu0 0.0
        %1918 = vmatpush1.xpose.msra.mxu0 0.0
        %1919 = vmatprep.subr.mxu0 0.0
        %1920 = vmatpush1.xpose.msra.mxu0 0.0
        %1921 = vmatprep.subr.mxu0 0.0
        %1922 = vmatpush1.xpose.msra.mxu0 0.0
        %1923 = vmatprep.subr.mxu0 0.0
        %1924 = vmatpush1.xpose.msra.mxu0 0.0
        %1925 = vmatprep.subr.mxu0 0.0
        %1926 = vmatpush1.xpose.msra.mxu0 0.0
        %1927 = vmatprep.subr.mxu0 0.0
        %1928 = vmatpush1.xpose.msra.mxu0 0.0
        %1929 = vmatprep.subr.mxu0 0.0
        %1930 = vmatpush1.xpose.msra.mxu0 0.0
        %1931 = vmatprep.subr.mxu0 0.0
        %1932 = vmatpush1.xpose.msra.mxu0 0.0
        %1933 = vmatprep.subr.mxu0 0.0
        %1934 = vmatpush1.xpose.msra.mxu0 0.0
        %1935 = vmatprep.subr.mxu0 0.0
        %1936 = vmatpush1.xpose.msra.mxu0 0.0
        %1937 = vmatprep.subr.mxu0 0.0
        %1938 = vmatpush1.xpose.msra.mxu0 0.0
        %1939 = vmatprep.subr.mxu0 0.0
        %1940 = vmatpush1.xpose.msra.mxu0 0.0
        %1941 = vmatprep.subr.mxu0 0.0
        %1942 = vmatpush1.xpose.msra.mxu0 0.0
        %1943 = vmatprep.subr.mxu0 0.0
        %1944 = vmatpush1.xpose.msra.mxu0 0.0
        %1945 = vmatprep.subr.mxu0 0.0
        %1946 = vmatpush1.xpose.msra.mxu0 0.0
        %1947 = vmatprep.subr.mxu0 0.0
        %1948 = vmatpush1.xpose.msra.mxu0 0.0
        %1949 = vmatprep.subr.mxu0 0.0
        %1950 = vmatpush1.xpose.msra.mxu0 0.0
        %1951 = vmatprep.subr.mxu0 0.0
        %1952 = vmatpush1.xpose.msra.mxu0 0.0
        %1953 = vmatprep.subr.mxu0 0.0
        %1954 = vmatpush1.xpose.msra.mxu0 0.0
        %1955 = vmatprep.subr.mxu0 0.0
        %1956 = vmatpush1.xpose.msra.mxu0 0.0
        %1957 = vmatprep.subr.mxu0 0.0
        %1958 = vmatpush1.xpose.msra.mxu0 0.0
        %1959 = vmatprep.subr.mxu0 0.0
        %1960 = vmatpush1.xpose.msra.mxu0 0.0
        %1961 = vmatprep.subr.mxu0 0.0
        %1962 = vmatpush1.xpose.msra.mxu0 0.0
        %1963 = vmatprep.subr.mxu0 0.0
        %1964 = vmatpush1.xpose.msra.mxu0 0.0
        %1965 = vmatprep.mubr.f32.mxu0 0.0
        %1966 = vmatmul.mubr.f32.gmra.mrb[0].mxu0 %v1893
        %v1967 = vpop.f32.mrb[0].mxu0
        %v1968 = vadd.f32 %v424, %v1967
        %v1969 = vpop.f32.mrb[0].mxu0
        %1970 = vmatprep.mubr.f32.mxu0 0.0
        %1971 = vmatmul.mubr.f32.gmra.mrb[0].mxu0 %v1895
        %v1972 = vpop.f32.mrb[0].mxu0
        %v1973 = vadd.f32 %v425, %v1972
        %v1974 = vpop.f32.mrb[0].mxu0
        %1975 = vdwg.mxu0
        %v1976 = vsel %vm646, %v1968, -inf
        %1977 = vmax.xlane.f32.xlu0 %v1976
        %v1978 = vpop.xlane.xlu0 %1977
        %v1979 = vsel %vm646, %v1973, -inf
        %1980 = vmax.xlane.f32.xlu0 %v1979
        %v1981 = vpop.xlane.xlu0 %1980
        %v1982 = vsub.f32 %v1968, %v1978
        %v1983 = vsub.f32 %v1973, %v1981
        %v1984 = vmul.f32 %v1982, 1.442695
        %v1985 = vpow.pop %v1984
        %v1986 = vmul.f32 %v1983, 1.442695
        %v1987 = vpow.pop %v1986
        %v1988 = vsel %vm646, %v1985, 0.0
        %1989 = vadd.xlane.f32.xlu0 %v1988
        %v1990 = vpop.xlane.xlu0 %1989
        %v1991 = vsel %vm646, %v1987, 0.0
        %1992 = vadd.xlane.f32.xlu0 %v1991
        %v1993 = vpop.xlane.xlu0 %1992
        %v1994 = vrcp.pop %v1990
        %v1995 = vrcp.pop %v1993
        %v1996 = vmul.f32 %v1985, %v1994
        %v1997 = vmul.f32 %v1987, %v1995
        %1998 = vrot.lane.b32.xlu0 %v1879, 64
        %v1999 = vpop.permute.xlu0 %1998
        %2000 = vrot.lane.b32.xlu0 %v1884, 64
        %v2001 = vpop.permute.xlu0 %2000
        %v2005 = vsel %vm646, %v1996, 0
        %v2008 = vsel %vm646, %v1997, 0
        %2010 = vmatprep.subr.mxu0 0.0
        %2011 = vmatpush1.msra.mxu0 %v1999
        %2012 = vmatprep.subr.mxu0 0.0
        %2013 = vmatpush1.msra.mxu0 %v2001
        %2014 = vmatprep.subr.mxu0 0.0
        %2015 = vmatpush1.msra.mxu0 0.0
        %2016 = vmatprep.subr.mxu0 0.0
        %2017 = vmatpush1.msra.mxu0 0.0
        %2018 = vmatprep.subr.mxu0 0.0
        %2019 = vmatpush1.msra.mxu0 0.0
        %2020 = vmatprep.subr.mxu0 0.0
        %2021 = vmatpush1.msra.mxu0 0.0
        %2022 = vmatprep.subr.mxu0 0.0
        %2023 = vmatpush1.msra.mxu0 0.0
        %2024 = vmatprep.subr.mxu0 0.0
        %2025 = vmatpush1.msra.mxu0 0.0
        %2026 = vmatprep.subr.mxu0 0.0
        %2027 = vmatpush1.msra.mxu0 0.0
        %2028 = vmatprep.subr.mxu0 0.0
        %2029 = vmatpush1.msra.mxu0 0.0
        %2030 = vmatprep.subr.mxu0 0.0
        %2031 = vmatpush1.msra.mxu0 0.0
        %2032 = vmatprep.subr.mxu0 0.0
        %2033 = vmatpush1.msra.mxu0 0.0
        %2034 = vmatprep.subr.mxu0 0.0
        %2035 = vmatpush1.msra.mxu0 0.0
        %2036 = vmatprep.subr.mxu0 0.0
        %2037 = vmatpush1.msra.mxu0 0.0
        %2038 = vmatprep.subr.mxu0 0.0
        %2039 = vmatpush1.msra.mxu0 0.0
        %2040 = vmatprep.subr.mxu0 0.0
        %2041 = vmatpush1.msra.mxu0 0.0
        %2042 = vmatprep.subr.mxu0 0.0
        %2043 = vmatpush1.msra.mxu0 0.0
        %2044 = vmatprep.subr.mxu0 0.0
        %2045 = vmatpush1.msra.mxu0 0.0
        %2046 = vmatprep.subr.mxu0 0.0
        %2047 = vmatpush1.msra.mxu0 0.0
        %2048 = vmatprep.subr.mxu0 0.0
        %2049 = vmatpush1.msra.mxu0 0.0
        %2050 = vmatprep.subr.mxu0 0.0
        %2051 = vmatpush1.msra.mxu0 0.0
        %2052 = vmatprep.subr.mxu0 0.0
        %2053 = vmatpush1.msra.mxu0 0.0
        %2054 = vmatprep.subr.mxu0 0.0
        %2055 = vmatpush1.msra.mxu0 0.0
        %2056 = vmatprep.subr.mxu0 0.0
        %2057 = vmatpush1.msra.mxu0 0.0
        %2058 = vmatprep.subr.mxu0 0.0
        %2059 = vmatpush1.msra.mxu0 0.0
        %2060 = vmatprep.subr.mxu0 0.0
        %2061 = vmatpush1.msra.mxu0 0.0
        %2062 = vmatprep.subr.mxu0 0.0
        %2063 = vmatpush1.msra.mxu0 0.0
        %2064 = vmatprep.subr.mxu0 0.0
        %2065 = vmatpush1.msra.mxu0 0.0
        %2066 = vmatprep.subr.mxu0 0.0
        %2067 = vmatpush1.msra.mxu0 0.0
        %2068 = vmatprep.subr.mxu0 0.0
        %2069 = vmatpush1.msra.mxu0 0.0
        %2070 = vmatprep.subr.mxu0 0.0
        %2071 = vmatpush1.msra.mxu0 0.0
        %2072 = vmatprep.subr.mxu0 0.0
        %2073 = vmatpush1.msra.mxu0 0.0
        %2074 = vmatprep.mubr.f32.mxu0 0.0
        %2075 = vmatmul.mubr.f32.gmra.mrb[0].mxu0 %v2005
        %v2076 = vpop.f32.mrb[0].mxu0
        %v2077 = vadd.f32 0.0, %v2076
        %v2078 = vpop.f32.mrb[0].mxu0
        %2079 = vmatprep.mubr.f32.mxu0 0.0
        %2080 = vmatmul.mubr.f32.gmra.mrb[0].mxu0 %v2008
        %v2081 = vpop.f32.mrb[0].mxu0
        %v2082 = vadd.f32 0.0, %v2081
        %v2083 = vpop.f32.mrb[0].mxu0
        %2084 = vdwg.mxu0
        %2085 = vrot.lane.b32.xlu0 %v1879, 120
        %v2086 = vpop.permute.xlu0 %2085
        %2087 = vrot.lane.b32.xlu0 %v1884, 120
        %v2088 = vpop.permute.xlu0 %2087
        %2089 = vrot.lane.b32.xlu0 %v1879, 88
        %v2090 = vpop.permute.xlu0 %2089
        %2091 = vrot.lane.b32.xlu0 %v1884, 88
        %v2092 = vpop.permute.xlu0 %2091
        %v2093 = vsel %vm562, %v2086, 0
        %v2095 = vsel %vm562, %v2088, 0
        %v2097 = vsel %vm562, %v2090, 0
        %v2099 = vsel %vm562, %v2092, 0
        %2101 = vmatprep.subr.mxu0 0.0
        %2102 = vmatpush1.xpose.msra.mxu0 %v2097
        %2103 = vmatprep.subr.mxu0 0.0
        %2104 = vmatpush1.xpose.msra.mxu0 %v2099
        %2105 = vmatprep.subr.mxu0 0.0
        %2106 = vmatpush1.xpose.msra.mxu0 0.0
        %2107 = vmatprep.subr.mxu0 0.0
        %2108 = vmatpush1.xpose.msra.mxu0 0.0
        %2109 = vmatprep.subr.mxu0 0.0
        %2110 = vmatpush1.xpose.msra.mxu0 0.0
        %2111 = vmatprep.subr.mxu0 0.0
        %2112 = vmatpush1.xpose.msra.mxu0 0.0
        %2113 = vmatprep.subr.mxu0 0.0
        %2114 = vmatpush1.xpose.msra.mxu0 0.0
        %2115 = vmatprep.subr.mxu0 0.0
        %2116 = vmatpush1.xpose.msra.mxu0 0.0
        %2117 = vmatprep.subr.mxu0 0.0
        %2118 = vmatpush1.xpose.msra.mxu0 0.0
        %2119 = vmatprep.subr.mxu0 0.0
        %2120 = vmatpush1.xpose.msra.mxu0 0.0
        %2121 = vmatprep.subr.mxu0 0.0
        %2122 = vmatpush1.xpose.msra.mxu0 0.0
        %2123 = vmatprep.subr.mxu0 0.0
        %2124 = vmatpush1.xpose.msra.mxu0 0.0
        %2125 = vmatprep.subr.mxu0 0.0
        %2126 = vmatpush1.xpose.msra.mxu0 0.0
        %2127 = vmatprep.subr.mxu0 0.0
        %2128 = vmatpush1.xpose.msra.mxu0 0.0
        %2129 = vmatprep.subr.mxu0 0.0
        %2130 = vmatpush1.xpose.msra.mxu0 0.0
        %2131 = vmatprep.subr.mxu0 0.0
        %2132 = vmatpush1.xpose.msra.mxu0 0.0
        %2133 = vmatprep.subr.mxu0 0.0
        %2134 = vmatpush1.xpose.msra.mxu0 0.0
        %2135 = vmatprep.subr.mxu0 0.0
        %2136 = vmatpush1.xpose.msra.mxu0 0.0
        %2137 = vmatprep.subr.mxu0 0.0
        %2138 = vmatpush1.xpose.msra.mxu0 0.0
        %2139 = vmatprep.subr.mxu0 0.0
        %2140 = vmatpush1.xpose.msra.mxu0 0.0
        %2141 = vmatprep.subr.mxu0 0.0
        %2142 = vmatpush1.xpose.msra.mxu0 0.0
        %2143 = vmatprep.subr.mxu0 0.0
        %2144 = vmatpush1.xpose.msra.mxu0 0.0
        %2145 = vmatprep.subr.mxu0 0.0
        %2146 = vmatpush1.xpose.msra.mxu0 0.0
        %2147 = vmatprep.subr.mxu0 0.0
        %2148 = vmatpush1.xpose.msra.mxu0 0.0
        %2149 = vmatprep.subr.mxu0 0.0
        %2150 = vmatpush1.xpose.msra.mxu0 0.0
        %2151 = vmatprep.subr.mxu0 0.0
        %2152 = vmatpush1.xpose.msra.mxu0 0.0
        %2153 = vmatprep.subr.mxu0 0.0
        %2154 = vmatpush1.xpose.msra.mxu0 0.0
        %2155 = vmatprep.subr.mxu0 0.0
        %2156 = vmatpush1.xpose.msra.mxu0 0.0
        %2157 = vmatprep.subr.mxu0 0.0
        %2158 = vmatpush1.xpose.msra.mxu0 0.0
        %2159 = vmatprep.subr.mxu0 0.0
        %2160 = vmatpush1.xpose.msra.mxu0 0.0
        %2161 = vmatprep.subr.mxu0 0.0
        %2162 = vmatpush1.xpose.msra.mxu0 0.0
        %2163 = vmatprep.subr.mxu0 0.0
        %2164 = vmatpush1.xpose.msra.mxu0 0.0
        %2165 = vmatprep.mubr.f32.mxu0 0.0
        %2166 = vmatmul.mubr.f32.gmra.mrb[0].mxu0 %v2093
        %v2167 = vpop.f32.mrb[0].mxu0
        %v2168 = vadd.f32 %v424, %v2167
        %v2169 = vpop.f32.mrb[0].mxu0
        %2170 = vmatprep.mubr.f32.mxu0 0.0
        %2171 = vmatmul.mubr.f32.gmra.mrb[0].mxu0 %v2095
        %v2172 = vpop.f32.mrb[0].mxu0
        %v2173 = vadd.f32 %v425, %v2172
        %v2174 = vpop.f32.mrb[0].mxu0
        %2175 = vdwg.mxu0
        %v2176 = vsel %vm646, %v2168, -inf
        %2177 = vmax.xlane.f32.xlu0 %v2176
        %v2178 = vpop.xlane.xlu0 %2177
        %v2179 = vsel %vm646, %v2173, -inf
        %2180 = vmax.xlane.f32.xlu0 %v2179
        %v2181 = vpop.xlane.xlu0 %2180
        %v2182 = vsub.f32 %v2168, %v2178
        %v2183 = vsub.f32 %v2173, %v2181
        %v2184 = vmul.f32 %v2182, 1.442695
        %v2185 = vpow.pop %v2184
        %v2186 = vmul.f32 %v2183, 1.442695
        %v2187 = vpow.pop %v2186
        %v2188 = vsel %vm646, %v2185, 0.0
        %2189 = vadd.xlane.f32.xlu0 %v2188
        %v2190 = vpop.xlane.xlu0 %2189
        %v2191 = vsel %vm646, %v2187, 0.0
        %2192 = vadd.xlane.f32.xlu0 %v2191
        %v2193 = vpop.xlane.xlu0 %2192
        %v2194 = vrcp.pop %v2190
        %v2195 = vrcp.pop %v2193
        %v2196 = vmul.f32 %v2185, %v2194
        %v2197 = vmul.f32 %v2187, %v2195
        %2198 = vrot.lane.b32.xlu0 %v1879, 56
        %v2199 = vpop.permute.xlu0 %2198
        %2200 = vrot.lane.b32.xlu0 %v1884, 56
        %v2201 = vpop.permute.xlu0 %2200
        %v2205 = vsel %vm646, %v2196, 0
        %v2208 = vsel %vm646, %v2197, 0
        %2210 = vmatprep.subr.mxu0 0.0
        %2211 = vmatpush1.msra.mxu0 %v2199
        %2212 = vmatprep.subr.mxu0 0.0
        %2213 = vmatpush1.msra.mxu0 %v2201
        %2214 = vmatprep.subr.mxu0 0.0
        %2215 = vmatpush1.msra.mxu0 0.0
        %2216 = vmatprep.subr.mxu0 0.0
        %2217 = vmatpush1.msra.mxu0 0.0
        %2218 = vmatprep.subr.mxu0 0.0
        %2219 = vmatpush1.msra.mxu0 0.0
        %2220 = vmatprep.subr.mxu0 0.0
        %2221 = vmatpush1.msra.mxu0 0.0
        %2222 = vmatprep.subr.mxu0 0.0
        %2223 = vmatpush1.msra.mxu0 0.0
        %2224 = vmatprep.subr.mxu0 0.0
        %2225 = vmatpush1.msra.mxu0 0.0
        %2226 = vmatprep.subr.mxu0 0.0
        %2227 = vmatpush1.msra.mxu0 0.0
        %2228 = vmatprep.subr.mxu0 0.0
        %2229 = vmatpush1.msra.mxu0 0.0
        %2230 = vmatprep.subr.mxu0 0.0
        %2231 = vmatpush1.msra.mxu0 0.0
        %2232 = vmatprep.subr.mxu0 0.0
        %2233 = vmatpush1.msra.mxu0 0.0
        %2234 = vmatprep.subr.mxu0 0.0
        %2235 = vmatpush1.msra.mxu0 0.0
        %2236 = vmatprep.subr.mxu0 0.0
        %2237 = vmatpush1.msra.mxu0 0.0
        %2238 = vmatprep.subr.mxu0 0.0
        %2239 = vmatpush1.msra.mxu0 0.0
        %2240 = vmatprep.subr.mxu0 0.0
        %2241 = vmatpush1.msra.mxu0 0.0
        %2242 = vmatprep.subr.mxu0 0.0
        %2243 = vmatpush1.msra.mxu0 0.0
        %2244 = vmatprep.subr.mxu0 0.0
        %2245 = vmatpush1.msra.mxu0 0.0
        %2246 = vmatprep.subr.mxu0 0.0
        %2247 = vmatpush1.msra.mxu0 0.0
        %2248 = vmatprep.subr.mxu0 0.0
        %2249 = vmatpush1.msra.mxu0 0.0
        %2250 = vmatprep.subr.mxu0 0.0
        %2251 = vmatpush1.msra.mxu0 0.0
        %2252 = vmatprep.subr.mxu0 0.0
        %2253 = vmatpush1.msra.mxu0 0.0
        %2254 = vmatprep.subr.mxu0 0.0
        %2255 = vmatpush1.msra.mxu0 0.0
        %2256 = vmatprep.subr.mxu0 0.0
        %2257 = vmatpush1.msra.mxu0 0.0
        %2258 = vmatprep.subr.mxu0 0.0
        %2259 = vmatpush1.msra.mxu0 0.0
        %2260 = vmatprep.subr.mxu0 0.0
        %2261 = vmatpush1.msra.mxu0 0.0
        %2262 = vmatprep.subr.mxu0 0.0
        %2263 = vmatpush1.msra.mxu0 0.0
        %2264 = vmatprep.subr.mxu0 0.0
        %2265 = vmatpush1.msra.mxu0 0.0
        %2266 = vmatprep.subr.mxu0 0.0
        %2267 = vmatpush1.msra.mxu0 0.0
        %2268 = vmatprep.subr.mxu0 0.0
        %2269 = vmatpush1.msra.mxu0 0.0
        %2270 = vmatprep.subr.mxu0 0.0
        %2271 = vmatpush1.msra.mxu0 0.0
        %2272 = vmatprep.subr.mxu0 0.0
        %2273 = vmatpush1.msra.mxu0 0.0
        %2274 = vmatprep.mubr.f32.mxu0 0.0
        %2275 = vmatmul.mubr.f32.gmra.mrb[0].mxu0 %v2205
        %v2276 = vpop.f32.mrb[0].mxu0
        %v2277 = vadd.f32 0.0, %v2276
        %v2278 = vpop.f32.mrb[0].mxu0
        %2279 = vmatprep.mubr.f32.mxu0 0.0
        %2280 = vmatmul.mubr.f32.gmra.mrb[0].mxu0 %v2208
        %v2281 = vpop.f32.mrb[0].mxu0
        %v2282 = vadd.f32 0.0, %v2281
        %v2283 = vpop.f32.mrb[0].mxu0
        %2284 = vdwg.mxu0
        %2285 = vrot.lane.b32.xlu0 %v1879, 112
        %v2286 = vpop.permute.xlu0 %2285
        %2287 = vrot.lane.b32.xlu0 %v1884, 112
        %v2288 = vpop.permute.xlu0 %2287
        %2289 = vrot.lane.b32.xlu0 %v1879, 80
        %v2290 = vpop.permute.xlu0 %2289
        %2291 = vrot.lane.b32.xlu0 %v1884, 80
        %v2292 = vpop.permute.xlu0 %2291
        %v2293 = vsel %vm562, %v2286, 0
        %v2295 = vsel %vm562, %v2288, 0
        %v2297 = vsel %vm562, %v2290, 0
        %v2299 = vsel %vm562, %v2292, 0
        %2301 = vmatprep.subr.mxu0 0.0
        %2302 = vmatpush1.xpose.msra.mxu0 %v2297
        %2303 = vmatprep.subr.mxu0 0.0
        %2304 = vmatpush1.xpose.msra.mxu0 %v2299
        %2305 = vmatprep.subr.mxu0 0.0
        %2306 = vmatpush1.xpose.msra.mxu0 0.0
        %2307 = vmatprep.subr.mxu0 0.0
        %2308 = vmatpush1.xpose.msra.mxu0 0.0
        %2309 = vmatprep.subr.mxu0 0.0
        %2310 = vmatpush1.xpose.msra.mxu0 0.0
        %2311 = vmatprep.subr.mxu0 0.0
        %2312 = vmatpush1.xpose.msra.mxu0 0.0
        %2313 = vmatprep.subr.mxu0 0.0
        %2314 = vmatpush1.xpose.msra.mxu0 0.0
        %2315 = vmatprep.subr.mxu0 0.0
        %2316 = vmatpush1.xpose.msra.mxu0 0.0
        %2317 = vmatprep.subr.mxu0 0.0
        %2318 = vmatpush1.xpose.msra.mxu0 0.0
        %2319 = vmatprep.subr.mxu0 0.0
        %2320 = vmatpush1.xpose.msra.mxu0 0.0
        %2321 = vmatprep.subr.mxu0 0.0
        %2322 = vmatpush1.xpose.msra.mxu0 0.0
        %2323 = vmatprep.subr.mxu0 0.0
        %2324 = vmatpush1.xpose.msra.mxu0 0.0
        %2325 = vmatprep.subr.mxu0 0.0
        %2326 = vmatpush1.xpose.msra.mxu0 0.0
        %2327 = vmatprep.subr.mxu0 0.0
        %2328 = vmatpush1.xpose.msra.mxu0 0.0
        %2329 = vmatprep.subr.mxu0 0.0
        %2330 = vmatpush1.xpose.msra.mxu0 0.0
        %2331 = vmatprep.subr.mxu0 0.0
        %2332 = vmatpush1.xpose.msra.mxu0 0.0
        %2333 = vmatprep.subr.mxu0 0.0
        %2334 = vmatpush1.xpose.msra.mxu0 0.0
        %2335 = vmatprep.subr.mxu0 0.0
        %2336 = vmatpush1.xpose.msra.mxu0 0.0
        %2337 = vmatprep.subr.mxu0 0.0
        %2338 = vmatpush1.xpose.msra.mxu0 0.0
        %2339 = vmatprep.subr.mxu0 0.0
        %2340 = vmatpush1.xpose.msra.mxu0 0.0
        %2341 = vmatprep.subr.mxu0 0.0
        %2342 = vmatpush1.xpose.msra.mxu0 0.0
        %2343 = vmatprep.subr.mxu0 0.0
        %2344 = vmatpush1.xpose.msra.mxu0 0.0
        %2345 = vmatprep.subr.mxu0 0.0
        %2346 = vmatpush1.xpose.msra.mxu0 0.0
        %2347 = vmatprep.subr.mxu0 0.0
        %2348 = vmatpush1.xpose.msra.mxu0 0.0
        %2349 = vmatprep.subr.mxu0 0.0
        %2350 = vmatpush1.xpose.msra.mxu0 0.0
        %2351 = vmatprep.subr.mxu0 0.0
        %2352 = vmatpush1.xpose.msra.mxu0 0.0
        %2353 = vmatprep.subr.mxu0 0.0
        %2354 = vmatpush1.xpose.msra.mxu0 0.0
        %2355 = vmatprep.subr.mxu0 0.0
        %2356 = vmatpush1.xpose.msra.mxu0 0.0
        %2357 = vmatprep.subr.mxu0 0.0
        %2358 = vmatpush1.xpose.msra.mxu0 0.0
        %2359 = vmatprep.subr.mxu0 0.0
        %2360 = vmatpush1.xpose.msra.mxu0 0.0
        %2361 = vmatprep.subr.mxu0 0.0
        %2362 = vmatpush1.xpose.msra.mxu0 0.0
        %2363 = vmatprep.subr.mxu0 0.0
        %2364 = vmatpush1.xpose.msra.mxu0 0.0
        %2365 = vmatprep.mubr.f32.mxu0 0.0
        %2366 = vmatmul.mubr.f32.gmra.mrb[0].mxu0 %v2293
        %v2367 = vpop.f32.mrb[0].mxu0
        %v2368 = vadd.f32 %v424, %v2367
        %v2369 = vpop.f32.mrb[0].mxu0
        %2370 = vmatprep.mubr.f32.mxu0 0.0
        %2371 = vmatmul.mubr.f32.gmra.mrb[0].mxu0 %v2295
        %v2372 = vpop.f32.mrb[0].mxu0
        %v2373 = vadd.f32 %v425, %v2372
        %v2374 = vpop.f32.mrb[0].mxu0
        %2375 = vdwg.mxu0
        %v2376 = vsel %vm646, %v2368, -inf
        %2377 = vmax.xlane.f32.xlu0 %v2376
        %v2378 = vpop.xlane.xlu0 %2377
        %v2379 = vsel %vm646, %v2373, -inf
        %2380 = vmax.xlane.f32.xlu0 %v2379
        %v2381 = vpop.xlane.xlu0 %2380
        %v2382 = vsub.f32 %v2368, %v2378
        %v2383 = vsub.f32 %v2373, %v2381
        %v2384 = vmul.f32 %v2382, 1.442695
        %v2385 = vpow.pop %v2384
        %v2386 = vmul.f32 %v2383, 1.442695
        %v2387 = vpow.pop %v2386
        %v2388 = vsel %vm646, %v2385, 0.0
        %2389 = vadd.xlane.f32.xlu0 %v2388
        %v2390 = vpop.xlane.xlu0 %2389
        %v2391 = vsel %vm646, %v2387, 0.0
        %2392 = vadd.xlane.f32.xlu0 %v2391
        %v2393 = vpop.xlane.xlu0 %2392
        %v2394 = vrcp.pop %v2390
        %v2395 = vrcp.pop %v2393
        %v2396 = vmul.f32 %v2385, %v2394
        %v2397 = vmul.f32 %v2387, %v2395
        %2398 = vrot.lane.b32.xlu0 %v1879, 48
        %v2399 = vpop.permute.xlu0 %2398
        %2400 = vrot.lane.b32.xlu0 %v1884, 48
        %v2401 = vpop.permute.xlu0 %2400
        %v2405 = vsel %vm646, %v2396, 0
        %v2408 = vsel %vm646, %v2397, 0
        %2410 = vmatprep.subr.mxu0 0.0
        %2411 = vmatpush1.msra.mxu0 %v2399
        %2412 = vmatprep.subr.mxu0 0.0
        %2413 = vmatpush1.msra.mxu0 %v2401
        %2414 = vmatprep.subr.mxu0 0.0
        %2415 = vmatpush1.msra.mxu0 0.0
        %2416 = vmatprep.subr.mxu0 0.0
        %2417 = vmatpush1.msra.mxu0 0.0
        %2418 = vmatprep.subr.mxu0 0.0
        %2419 = vmatpush1.msra.mxu0 0.0
        %2420 = vmatprep.subr.mxu0 0.0
        %2421 = vmatpush1.msra.mxu0 0.0
        %2422 = vmatprep.subr.mxu0 0.0
        %2423 = vmatpush1.msra.mxu0 0.0
        %2424 = vmatprep.subr.mxu0 0.0
        %2425 = vmatpush1.msra.mxu0 0.0
        %2426 = vmatprep.subr.mxu0 0.0
        %2427 = vmatpush1.msra.mxu0 0.0
        %2428 = vmatprep.subr.mxu0 0.0
        %2429 = vmatpush1.msra.mxu0 0.0
        %2430 = vmatprep.subr.mxu0 0.0
        %2431 = vmatpush1.msra.mxu0 0.0
        %2432 = vmatprep.subr.mxu0 0.0
        %2433 = vmatpush1.msra.mxu0 0.0
        %2434 = vmatprep.subr.mxu0 0.0
        %2435 = vmatpush1.msra.mxu0 0.0
        %2436 = vmatprep.subr.mxu0 0.0
        %2437 = vmatpush1.msra.mxu0 0.0
        %2438 = vmatprep.subr.mxu0 0.0
        %2439 = vmatpush1.msra.mxu0 0.0
        %2440 = vmatprep.subr.mxu0 0.0
        %2441 = vmatpush1.msra.mxu0 0.0
        %2442 = vmatprep.subr.mxu0 0.0
        %2443 = vmatpush1.msra.mxu0 0.0
        %2444 = vmatprep.subr.mxu0 0.0
        %2445 = vmatpush1.msra.mxu0 0.0
        %2446 = vmatprep.subr.mxu0 0.0
        %2447 = vmatpush1.msra.mxu0 0.0
        %2448 = vmatprep.subr.mxu0 0.0
        %2449 = vmatpush1.msra.mxu0 0.0
        %2450 = vmatprep.subr.mxu0 0.0
        %2451 = vmatpush1.msra.mxu0 0.0
        %2452 = vmatprep.subr.mxu0 0.0
        %2453 = vmatpush1.msra.mxu0 0.0
        %2454 = vmatprep.subr.mxu0 0.0
        %2455 = vmatpush1.msra.mxu0 0.0
        %2456 = vmatprep.subr.mxu0 0.0
        %2457 = vmatpush1.msra.mxu0 0.0
        %2458 = vmatprep.subr.mxu0 0.0
        %2459 = vmatpush1.msra.mxu0 0.0
        %2460 = vmatprep.subr.mxu0 0.0
        %2461 = vmatpush1.msra.mxu0 0.0
        %2462 = vmatprep.subr.mxu0 0.0
        %2463 = vmatpush1.msra.mxu0 0.0
        %2464 = vmatprep.subr.mxu0 0.0
        %2465 = vmatpush1.msra.mxu0 0.0
        %2466 = vmatprep.subr.mxu0 0.0
        %2467 = vmatpush1.msra.mxu0 0.0
        %2468 = vmatprep.subr.mxu0 0.0
        %2469 = vmatpush1.msra.mxu0 0.0
        %2470 = vmatprep.subr.mxu0 0.0
        %2471 = vmatpush1.msra.mxu0 0.0
        %2472 = vmatprep.subr.mxu0 0.0
        %2473 = vmatpush1.msra.mxu0 0.0
        %2474 = vmatprep.mubr.f32.mxu0 0.0
        %2475 = vmatmul.mubr.f32.gmra.mrb[0].mxu0 %v2405
        %v2476 = vpop.f32.mrb[0].mxu0
        %v2477 = vadd.f32 0.0, %v2476
        %v2478 = vpop.f32.mrb[0].mxu0
        %2479 = vmatprep.mubr.f32.mxu0 0.0
        %2480 = vmatmul.mubr.f32.gmra.mrb[0].mxu0 %v2408
        %v2481 = vpop.f32.mrb[0].mxu0
        %v2482 = vadd.f32 0.0, %v2481
        %v2483 = vpop.f32.mrb[0].mxu0
        %2484 = vdwg.mxu0
        %2485 = vrot.lane.b32.xlu0 %v1879, 104
        %v2486 = vpop.permute.xlu0 %2485
        %2487 = vrot.lane.b32.xlu0 %v1884, 104
        %v2488 = vpop.permute.xlu0 %2487
        %2489 = vrot.lane.b32.xlu0 %v1879, 72
        %v2490 = vpop.permute.xlu0 %2489
        %2491 = vrot.lane.b32.xlu0 %v1884, 72
        %v2492 = vpop.permute.xlu0 %2491
        %v2493 = vsel %vm562, %v2486, 0
        %v2495 = vsel %vm562, %v2488, 0
        %v2497 = vsel %vm562, %v2490, 0
        %v2499 = vsel %vm562, %v2492, 0
        %2501 = vmatprep.subr.mxu0 0.0
        %2502 = vmatpush1.xpose.msra.mxu0 %v2497
        %2503 = vmatprep.subr.mxu0 0.0
        %2504 = vmatpush1.xpose.msra.mxu0 %v2499
        %2505 = vmatprep.subr.mxu0 0.0
        %2506 = vmatpush1.xpose.msra.mxu0 0.0
        %2507 = vmatprep.subr.mxu0 0.0
        %2508 = vmatpush1.xpose.msra.mxu0 0.0
        %2509 = vmatprep.subr.mxu0 0.0
        %2510 = vmatpush1.xpose.msra.mxu0 0.0
        %2511 = vmatprep.subr.mxu0 0.0
        %2512 = vmatpush1.xpose.msra.mxu0 0.0
        %2513 = vmatprep.subr.mxu0 0.0
        %2514 = vmatpush1.xpose.msra.mxu0 0.0
        %2515 = vmatprep.subr.mxu0 0.0
        %2516 = vmatpush1.xpose.msra.mxu0 0.0
        %2517 = vmatprep.subr.mxu0 0.0
        %2518 = vmatpush1.xpose.msra.mxu0 0.0
        %2519 = vmatprep.subr.mxu0 0.0
        %2520 = vmatpush1.xpose.msra.mxu0 0.0
        %2521 = vmatprep.subr.mxu0 0.0
        %2522 = vmatpush1.xpose.msra.mxu0 0.0
        %2523 = vmatprep.subr.mxu0 0.0
        %2524 = vmatpush1.xpose.msra.mxu0 0.0
        %2525 = vmatprep.subr.mxu0 0.0
        %2526 = vmatpush1.xpose.msra.mxu0 0.0
        %2527 = vmatprep.subr.mxu0 0.0
        %2528 = vmatpush1.xpose.msra.mxu0 0.0
        %2529 = vmatprep.subr.mxu0 0.0
        %2530 = vmatpush1.xpose.msra.mxu0 0.0
        %2531 = vmatprep.subr.mxu0 0.0
        %2532 = vmatpush1.xpose.msra.mxu0 0.0
        %2533 = vmatprep.subr.mxu0 0.0
        %2534 = vmatpush1.xpose.msra.mxu0 0.0
        %2535 = vmatprep.subr.mxu0 0.0
        %2536 = vmatpush1.xpose.msra.mxu0 0.0
        %2537 = vmatprep.subr.mxu0 0.0
        %2538 = vmatpush1.xpose.msra.mxu0 0.0
        %2539 = vmatprep.subr.mxu0 0.0
        %2540 = vmatpush1.xpose.msra.mxu0 0.0
        %2541 = vmatprep.subr.mxu0 0.0
        %2542 = vmatpush1.xpose.msra.mxu0 0.0
        %2543 = vmatprep.subr.mxu0 0.0
        %2544 = vmatpush1.xpose.msra.mxu0 0.0
        %2545 = vmatprep.subr.mxu0 0.0
        %2546 = vmatpush1.xpose.msra.mxu0 0.0
        %2547 = vmatprep.subr.mxu0 0.0
        %2548 = vmatpush1.xpose.msra.mxu0 0.0
        %2549 = vmatprep.subr.mxu0 0.0
        %2550 = vmatpush1.xpose.msra.mxu0 0.0
        %2551 = vmatprep.subr.mxu0 0.0
        %2552 = vmatpush1.xpose.msra.mxu0 0.0
        %2553 = vmatprep.subr.mxu0 0.0
        %2554 = vmatpush1.xpose.msra.mxu0 0.0
        %2555 = vmatprep.subr.mxu0 0.0
        %2556 = vmatpush1.xpose.msra.mxu0 0.0
        %2557 = vmatprep.subr.mxu0 0.0
        %2558 = vmatpush1.xpose.msra.mxu0 0.0
        %2559 = vmatprep.subr.mxu0 0.0
        %2560 = vmatpush1.xpose.msra.mxu0 0.0
        %2561 = vmatprep.subr.mxu0 0.0
        %2562 = vmatpush1.xpose.msra.mxu0 0.0
        %2563 = vmatprep.subr.mxu0 0.0
        %2564 = vmatpush1.xpose.msra.mxu0 0.0
        %2565 = vmatprep.mubr.f32.mxu0 0.0
        %2566 = vmatmul.mubr.f32.gmra.mrb[0].mxu0 %v2493
        %v2567 = vpop.f32.mrb[0].mxu0
        %v2568 = vadd.f32 %v424, %v2567
        %v2569 = vpop.f32.mrb[0].mxu0
        %2570 = vmatprep.mubr.f32.mxu0 0.0
        %2571 = vmatmul.mubr.f32.gmra.mrb[0].mxu0 %v2495
        %v2572 = vpop.f32.mrb[0].mxu0
        %v2573 = vadd.f32 %v425, %v2572
        %v2574 = vpop.f32.mrb[0].mxu0
        %2575 = vdwg.mxu0
        %v2576 = vsel %vm646, %v2568, -inf
        %2577 = vmax.xlane.f32.xlu0 %v2576
        %v2578 = vpop.xlane.xlu0 %2577
        %v2579 = vsel %vm646, %v2573, -inf
        %2580 = vmax.xlane.f32.xlu0 %v2579
        %v2581 = vpop.xlane.xlu0 %2580
        %v2582 = vsub.f32 %v2568, %v2578
        %v2583 = vsub.f32 %v2573, %v2581
        %v2584 = vmul.f32 %v2582, 1.442695
        %v2585 = vpow.pop %v2584
        %v2586 = vmul.f32 %v2583, 1.442695
        %v2587 = vpow.pop %v2586
        %v2588 = vsel %vm646, %v2585, 0.0
        %2589 = vadd.xlane.f32.xlu0 %v2588
        %v2590 = vpop.xlane.xlu0 %2589
        %v2591 = vsel %vm646, %v2587, 0.0
        %2592 = vadd.xlane.f32.xlu0 %v2591
        %v2593 = vpop.xlane.xlu0 %2592
        %v2594 = vrcp.pop %v2590
        %v2595 = vrcp.pop %v2593
        %v2596 = vmul.f32 %v2585, %v2594
        %v2597 = vmul.f32 %v2587, %v2595
        %2598 = vrot.lane.b32.xlu0 %v1879, 40
        %v2599 = vpop.permute.xlu0 %2598
        %2600 = vrot.lane.b32.xlu0 %v1884, 40
        %v2601 = vpop.permute.xlu0 %2600
        %v2605 = vsel %vm646, %v2596, 0
        %v2608 = vsel %vm646, %v2597, 0
        %2610 = vmatprep.subr.mxu0 0.0
        %2611 = vmatpush1.msra.mxu0 %v2599
        %2612 = vmatprep.subr.mxu0 0.0
        %2613 = vmatpush1.msra.mxu0 %v2601
        %2614 = vmatprep.subr.mxu0 0.0
        %2615 = vmatpush1.msra.mxu0 0.0
        %2616 = vmatprep.subr.mxu0 0.0
        %2617 = vmatpush1.msra.mxu0 0.0
        %2618 = vmatprep.subr.mxu0 0.0
        %2619 = vmatpush1.msra.mxu0 0.0
        %2620 = vmatprep.subr.mxu0 0.0
        %2621 = vmatpush1.msra.mxu0 0.0
        %2622 = vmatprep.subr.mxu0 0.0
        %2623 = vmatpush1.msra.mxu0 0.0
        %2624 = vmatprep.subr.mxu0 0.0
        %2625 = vmatpush1.msra.mxu0 0.0
        %2626 = vmatprep.subr.mxu0 0.0
        %2627 = vmatpush1.msra.mxu0 0.0
        %2628 = vmatprep.subr.mxu0 0.0
        %2629 = vmatpush1.msra.mxu0 0.0
        %2630 = vmatprep.subr.mxu0 0.0
        %2631 = vmatpush1.msra.mxu0 0.0
        %2632 = vmatprep.subr.mxu0 0.0
        %2633 = vmatpush1.msra.mxu0 0.0
        %2634 = vmatprep.subr.mxu0 0.0
        %2635 = vmatpush1.msra.mxu0 0.0
        %2636 = vmatprep.subr.mxu0 0.0
        %2637 = vmatpush1.msra.mxu0 0.0
        %2638 = vmatprep.subr.mxu0 0.0
        %2639 = vmatpush1.msra.mxu0 0.0
        %2640 = vmatprep.subr.mxu0 0.0
        %2641 = vmatpush1.msra.mxu0 0.0
        %2642 = vmatprep.subr.mxu0 0.0
        %2643 = vmatpush1.msra.mxu0 0.0
        %2644 = vmatprep.subr.mxu0 0.0
        %2645 = vmatpush1.msra.mxu0 0.0
        %2646 = vmatprep.subr.mxu0 0.0
        %2647 = vmatpush1.msra.mxu0 0.0
        %2648 = vmatprep.subr.mxu0 0.0
        %2649 = vmatpush1.msra.mxu0 0.0
        %2650 = vmatprep.subr.mxu0 0.0
        %2651 = vmatpush1.msra.mxu0 0.0
        %2652 = vmatprep.subr.mxu0 0.0
        %2653 = vmatpush1.msra.mxu0 0.0
        %2654 = vmatprep.subr.mxu0 0.0
        %2655 = vmatpush1.msra.mxu0 0.0
        %2656 = vmatprep.subr.mxu0 0.0
        %2657 = vmatpush1.msra.mxu0 0.0
        %2658 = vmatprep.subr.mxu0 0.0
        %2659 = vmatpush1.msra.mxu0 0.0
        %2660 = vmatprep.subr.mxu0 0.0
        %2661 = vmatpush1.msra.mxu0 0.0
        %2662 = vmatprep.subr.mxu0 0.0
        %2663 = vmatpush1.msra.mxu0 0.0
        %2664 = vmatprep.subr.mxu0 0.0
        %2665 = vmatpush1.msra.mxu0 0.0
        %2666 = vmatprep.subr.mxu0 0.0
        %2667 = vmatpush1.msra.mxu0 0.0
        %2668 = vmatprep.subr.mxu0 0.0
        %2669 = vmatpush1.msra.mxu0 0.0
        %2670 = vmatprep.subr.mxu0 0.0
        %2671 = vmatpush1.msra.mxu0 0.0
        %2672 = vmatprep.subr.mxu0 0.0
        %2673 = vmatpush1.msra.mxu0 0.0
        %2674 = vmatprep.mubr.f32.mxu0 0.0
        %2675 = vmatmul.mubr.f32.gmra.mrb[0].mxu0 %v2605
        %v2676 = vpop.f32.mrb[0].mxu0
        %v2677 = vadd.f32 0.0, %v2676
        %v2678 = vpop.f32.mrb[0].mxu0
        %2679 = vmatprep.mubr.f32.mxu0 0.0
        %2680 = vmatmul.mubr.f32.gmra.mrb[0].mxu0 %v2608
        %v2681 = vpop.f32.mrb[0].mxu0
        %v2682 = vadd.f32 0.0, %v2681
        %v2683 = vpop.f32.mrb[0].mxu0
        %2684 = vdwg.mxu0
        %2687 = vrot.lane.b32.xlu0 %v2277, 8
        %v2688 = vpop.permute.xlu0 %2687
        %2689 = vrot.lane.b32.xlu0 %v2282, 8
        %v2690 = vpop.permute.xlu0 %2689
        %2695 = vrot.lane.b32.xlu0 %v2477, 16
        %v2696 = vpop.permute.xlu0 %2695
        %2697 = vrot.lane.b32.xlu0 %v2482, 16
        %v2698 = vpop.permute.xlu0 %2697
        %2703 = vrot.lane.b32.xlu0 %v2677, 24
        %v2704 = vpop.permute.xlu0 %2703
        %2705 = vrot.lane.b32.xlu0 %v2682, 24
        %v2706 = vpop.permute.xlu0 %2705
        %v2709 = vsel %vm562, %v2077, %v2688
        %v2710 = vsel %vm562, %v2082, %v2690
        %v2711 = vsel %vm646, %v2709, %v2696
        %v2712 = vsel %vm646, %v2710, %v2698
        %v2713 = vsel %vm1384, %v2711, %v2704
        %v2714 = vsel %vm1384, %v2712, %v2706
        %s2715 = scalar_lea.vmem %s4, 32
        %v2716 = vld [vmem:[%s2715] sm:$0xff]
        %v2717 = vld [vmem:[%s2715 + $0x8] sm:$0xff]
        %v2718 = vld [vmem:[%s2715 + $0x10] sm:$0xff]
        %v2719 = vld [vmem:[%s2715 + $0x18] sm:$0xff]
        %v2720 = vlaneseq
        %v2721 = vshrl.u32 %v2720, 7
        %v2722 = vsub.s32 6, %v2721
        %v2723 = vrot.slane %v1758, %v2722
        %v2725 = vsel %vm427, %v2713, 0
        %v2728 = vsel %vm427, %v2714, 0
        %2730 = vmatprep.subr.mxu0 0.0
        %2731 = vmatpush1.msra.mxu0 %v2716
        %2732 = vmatprep.subr.mxu0 0.0
        %2733 = vmatpush1.msra.mxu0 %v2717
        %2734 = vmatprep.subr.mxu0 0.0
        %2735 = vmatpush1.msra.mxu0 %v2718
        %2736 = vmatprep.subr.mxu0 0.0
        %2737 = vmatpush1.msra.mxu0 %v2719
        %2738 = vmatprep.subr.mxu0 0.0
        %2739 = vmatpush1.msra.mxu0 0.0
        %2740 = vmatprep.subr.mxu0 0.0
        %2741 = vmatpush1.msra.mxu0 0.0
        %2742 = vmatprep.subr.mxu0 0.0
        %2743 = vmatpush1.msra.mxu0 0.0
        %2744 = vmatprep.subr.mxu0 0.0
        %2745 = vmatpush1.msra.mxu0 0.0
        %2746 = vmatprep.subr.mxu0 0.0
        %2747 = vmatpush1.msra.mxu0 0.0
        %2748 = vmatprep.subr.mxu0 0.0
        %2749 = vmatpush1.msra.mxu0 0.0
        %2750 = vmatprep.subr.mxu0 0.0
        %2751 = vmatpush1.msra.mxu0 0.0
        %2752 = vmatprep.subr.mxu0 0.0
        %2753 = vmatpush1.msra.mxu0 0.0
        %2754 = vmatprep.subr.mxu0 0.0
        %2755 = vmatpush1.msra.mxu0 0.0
        %2756 = vmatprep.subr.mxu0 0.0
        %2757 = vmatpush1.msra.mxu0 0.0
        %2758 = vmatprep.subr.mxu0 0.0
        %2759 = vmatpush1.msra.mxu0 0.0
        %2760 = vmatprep.subr.mxu0 0.0
        %2761 = vmatpush1.msra.mxu0 0.0
        %2762 = vmatprep.subr.mxu0 0.0
        %2763 = vmatpush1.msra.mxu0 0.0
        %2764 = vmatprep.subr.mxu0 0.0
        %2765 = vmatpush1.msra.mxu0 0.0
        %2766 = vmatprep.subr.mxu0 0.0
        %2767 = vmatpush1.msra.mxu0 0.0
        %2768 = vmatprep.subr.mxu0 0.0
        %2769 = vmatpush1.msra.mxu0 0.0
        %2770 = vmatprep.subr.mxu0 0.0
        %2771 = vmatpush1.msra.mxu0 0.0
        %2772 = vmatprep.subr.mxu0 0.0
        %2773 = vmatpush1.msra.mxu0 0.0
        %2774 = vmatprep.subr.mxu0 0.0
        %2775 = vmatpush1.msra.mxu0 0.0
        %2776 = vmatprep.subr.mxu0 0.0
        %2777 = vmatpush1.msra.mxu0 0.0
        %2778 = vmatprep.subr.mxu0 0.0
        %2779 = vmatpush1.msra.mxu0 0.0
        %2780 = vmatprep.subr.mxu0 0.0
        %2781 = vmatpush1.msra.mxu0 0.0
        %2782 = vmatprep.subr.mxu0 0.0
        %2783 = vmatpush1.msra.mxu0 0.0
        %2784 = vmatprep.subr.mxu0 0.0
        %2785 = vmatpush1.msra.mxu0 0.0
        %2786 = vmatprep.subr.mxu0 0.0
        %2787 = vmatpush1.msra.mxu0 0.0
        %2788 = vmatprep.subr.mxu0 0.0
        %2789 = vmatpush1.msra.mxu0 0.0
        %2790 = vmatprep.subr.mxu0 0.0
        %2791 = vmatpush1.msra.mxu0 0.0
        %2792 = vmatprep.subr.mxu0 0.0
        %2793 = vmatpush1.msra.mxu0 0.0
        %2794 = vmatprep.mubr.f32.mxu0 0.0
        %2795 = vmatmul.mubr.f32.gmra.mrb[0].mxu0 %v2725
        %v2796 = vpop.f32.mrb[0].mxu0
        %v2797 = vadd.f32 %v2723, %v2796
        %v2798 = vpop.f32.mrb[0].mxu0
        %2799 = vmatprep.mubr.f32.mxu0 0.0
        %2800 = vmatmul.mubr.f32.gmra.mrb[0].mxu0 %v2728
        %v2801 = vpop.f32.mrb[0].mxu0
        %v2802 = vadd.f32 %v2723, %v2801
        %v2803 = vpop.f32.mrb[0].mxu0
        %2804 = vdwg.mxu0
        %v2805 = vadd.f32 %v2797, %v1753
        %v2806 = vadd.f32 %v2802, %v1754
        %v2807 = vsel %vm427, %v2805, 0.0
        %2808 = vadd.xlane.f32.xlu0 %v2807
        %v2809 = vpop.xlane.xlu0 %2808
        %v2810 = vsel %vm427, %v2806, 0.0
        %2811 = vadd.xlane.f32.xlu0 %v2810
        %v2812 = vpop.xlane.xlu0 %2811
        %v2813 = vmul.f32 %v2809, %v434
        %v2814 = vmul.f32 %v2812, %v434
        %v2815 = vsub.f32 %v2805, %v2813
        %v2816 = vsub.f32 %v2806, %v2814
        %v2817 = vmul.f32 %v2815, %v2815
        %v2818 = vmul.f32 %v2816, %v2816
        %v2819 = vsel %vm427, %v2817, 0.0
        %2820 = vadd.xlane.f32.xlu0 %v2819
        %v2821 = vpop.xlane.xlu0 %2820
        %v2822 = vsel %vm427, %v2818, 0.0
        %2823 = vadd.xlane.f32.xlu0 %v2822
        %v2824 = vpop.xlane.xlu0 %2823
        %v2825 = vmul.f32 %v2821, %v434
        %v2826 = vmul.f32 %v2824, %v434
        %v2827 = vadd.f32 %v2825, 1e-05
        %v2828 = vadd.f32 %v2826, 1e-05
        %v2829 = vrsqrt.pop %v2827
        %v2830 = vrsqrt.pop %v2828
        %v2831 = vmul.f32 %v2815, %v2829
        %v2832 = vmul.f32 %v2816, %v2830
        %v2833 = vlaneseq
        %v2834 = vshrl.u32 %v2833, 7
        %v2835 = vsub.s32 2, %v2834
        %v2836 = vrot.slane %v1758, %v2835
        %v2837 = vmul.f32 %v2831, %v2836
        %v2838 = vmul.f32 %v2832, %v2836
        %v2839 = vlaneseq
        %v2840 = vshrl.u32 %v2839, 7
        %v2841 = vsub.s32 3, %v2840
        %v2842 = vrot.slane %v1758, %v2841
        %v2843 = vadd.f32 %v2837, %v2842
        %v2844 = vadd.f32 %v2838, %v2842
        %s2845 = scalar_lea.vmem %s5, 32
        %v2846 = vld [vmem:[%s2845] sm:$0xff]
        %v2847 = vld [vmem:[%s2845 + $0x8] sm:$0xff]
        %v2848 = vld [vmem:[%s2845 + $0x10] sm:$0xff]
        %v2849 = vld [vmem:[%s2845 + $0x18] sm:$0xff]
        %v2850 = vlaneseq
        %v2851 = vshrl.u32 %v2850, 7
        %v2852 = vsub.s32 5, %v2851
        %v2853 = vrot.slane %v1758, %v2852
        %v2855 = vsel %vm427, %v2843, 0
        %v2858 = vsel %vm427, %v2844, 0
        %2860 = vmatprep.subr.mxu0 0.0
        %2861 = vmatpush1.msra.mxu0 %v2846
        %2862 = vmatprep.subr.mxu0 0.0
        %2863 = vmatpush1.msra.mxu0 %v2847
        %2864 = vmatprep.subr.mxu0 0.0
        %2865 = vmatpush1.msra.mxu0 %v2848
        %2866 = vmatprep.subr.mxu0 0.0
        %2867 = vmatpush1.msra.mxu0 %v2849
        %2868 = vmatprep.subr.mxu0 0.0
        %2869 = vmatpush1.msra.mxu0 0.0
        %2870 = vmatprep.subr.mxu0 0.0
        %2871 = vmatpush1.msra.mxu0 0.0
        %2872 = vmatprep.subr.mxu0 0.0
        %2873 = vmatpush1.msra.mxu0 0.0
        %2874 = vmatprep.subr.mxu0 0.0
        %2875 = vmatpush1.msra.mxu0 0.0
        %2876 = vmatprep.subr.mxu0 0.0
        %2877 = vmatpush1.msra.mxu0 0.0
        %2878 = vmatprep.subr.mxu0 0.0
        %2879 = vmatpush1.msra.mxu0 0.0
        %2880 = vmatprep.subr.mxu0 0.0
        %2881 = vmatpush1.msra.mxu0 0.0
        %2882 = vmatprep.subr.mxu0 0.0
        %2883 = vmatpush1.msra.mxu0 0.0
        %2884 = vmatprep.subr.mxu0 0.0
        %2885 = vmatpush1.msra.mxu0 0.0
        %2886 = vmatprep.subr.mxu0 0.0
        %2887 = vmatpush1.msra.mxu0 0.0
        %2888 = vmatprep.subr.mxu0 0.0
        %2889 = vmatpush1.msra.mxu0 0.0
        %2890 = vmatprep.subr.mxu0 0.0
        %2891 = vmatpush1.msra.mxu0 0.0
        %2892 = vmatprep.subr.mxu0 0.0
        %2893 = vmatpush1.msra.mxu0 0.0
        %2894 = vmatprep.subr.mxu0 0.0
        %2895 = vmatpush1.msra.mxu0 0.0
        %2896 = vmatprep.subr.mxu0 0.0
        %2897 = vmatpush1.msra.mxu0 0.0
        %2898 = vmatprep.subr.mxu0 0.0
        %2899 = vmatpush1.msra.mxu0 0.0
        %2900 = vmatprep.subr.mxu0 0.0
        %2901 = vmatpush1.msra.mxu0 0.0
        %2902 = vmatprep.subr.mxu0 0.0
        %2903 = vmatpush1.msra.mxu0 0.0
        %2904 = vmatprep.subr.mxu0 0.0
        %2905 = vmatpush1.msra.mxu0 0.0
        %2906 = vmatprep.subr.mxu0 0.0
        %2907 = vmatpush1.msra.mxu0 0.0
        %2908 = vmatprep.subr.mxu0 0.0
        %2909 = vmatpush1.msra.mxu0 0.0
        %2910 = vmatprep.subr.mxu0 0.0
        %2911 = vmatpush1.msra.mxu0 0.0
        %2912 = vmatprep.subr.mxu0 0.0
        %2913 = vmatpush1.msra.mxu0 0.0
        %2914 = vmatprep.subr.mxu0 0.0
        %2915 = vmatpush1.msra.mxu0 0.0
        %2916 = vmatprep.subr.mxu0 0.0
        %2917 = vmatpush1.msra.mxu0 0.0
        %2918 = vmatprep.subr.mxu0 0.0
        %2919 = vmatpush1.msra.mxu0 0.0
        %2920 = vmatprep.subr.mxu0 0.0
        %2921 = vmatpush1.msra.mxu0 0.0
        %2922 = vmatprep.subr.mxu0 0.0
        %2923 = vmatpush1.msra.mxu0 0.0
        %2924 = vmatprep.mubr.f32.mxu0 0.0
        %2925 = vmatmul.mubr.f32.gmra.mrb[0].mxu0 %v2855
        %v2926 = vpop.f32.mrb[0].mxu0
        %v2927 = vadd.f32 %v2853, %v2926
        %v2928 = vpop.f32.mrb[0].mxu0
        %2929 = vmatprep.mubr.f32.mxu0 0.0
        %2930 = vmatmul.mubr.f32.gmra.mrb[0].mxu0 %v2858
        %v2931 = vpop.f32.mrb[0].mxu0
        %v2932 = vadd.f32 %v2853, %v2931
        %v2933 = vpop.f32.mrb[0].mxu0
        %2934 = vdwg.mxu0
        %v2935 = vmul.f32 %v2927, 0.5
        %v2936 = vmul.f32 %v2932, 0.5
        %v2937 = vmul.f32 %v2927, 0.70710677
        %v2938 = vmul.f32 %v2932, 0.70710677
        %v2939 = vand.u32 2147483647, %v2937
        %v2940 = vand.u32 2147483647, %v2938
        %v2941 = vmul.f32 %v2939, 0.3275911
        %v2942 = vmul.f32 %v2940, 0.3275911
        %v2943 = vadd.f32 %v2941, 1.0
        %v2944 = vadd.f32 %v2942, 1.0
        %v2945 = vrcp.pop %v2943
        %v2946 = vmul.f32 1.0, %v2945
        %v2947 = vrcp.pop %v2944
        %v2948 = vmul.f32 1.0, %v2947
        %v2949 = vmul.f32 %v2946, 1.0614054
        %v2950 = vmul.f32 %v2948, 1.0614054
        %v2951 = vadd.f32 %v2949, -1.4531521
        %v2952 = vadd.f32 %v2950, -1.4531521
        %v2953 = vmul.f32 %v2951, %v2946
        %v2954 = vmul.f32 %v2952, %v2948
        %v2955 = vadd.f32 %v2953, 1.4214138
        %v2956 = vadd.f32 %v2954, 1.4214138
        %v2957 = vmul.f32 %v2955, %v2946
        %v2958 = vmul.f32 %v2956, %v2948
        %v2959 = vadd.f32 %v2957, -0.28449672
        %v2960 = vadd.f32 %v2958, -0.28449672
        %v2961 = vmul.f32 %v2959, %v2946
        %v2962 = vmul.f32 %v2960, %v2948
        %v2963 = vadd.f32 %v2961, 0.2548296
        %v2964 = vadd.f32 %v2962, 0.2548296
        %v2965 = vmul.f32 %v2963, %v2946
        %v2966 = vmul.f32 %v2964, %v2948
        %v2967 = vsub.f32 0.0, %v2939
        %v2968 = vsub.f32 0.0, %v2940
        %v2969 = vmul.f32 %v2967, %v2939
        %v2970 = vmul.f32 %v2968, %v2940
        %v2971 = vmul.f32 %v2969, 1.442695
        %v2972 = vpow.pop %v2971
        %v2973 = vmul.f32 %v2970, 1.442695
        %v2974 = vpow.pop %v2973
        %v2975 = vmul.f32 %v2965, %v2972
        %v2976 = vmul.f32 %v2966, %v2974
        %v2977 = vsub.f32 1.0, %v2975
        %v2978 = vsub.f32 1.0, %v2976
        %vm2979 = vcmp.ge.f32.partialorder %v2937, 0.0
        %vm2980 = vcmp.ge.f32.partialorder %v2938, 0.0
        %v2981 = vsub.f32 0.0, %v2977
        %v2982 = vsub.f32 0.0, %v2978
        %v2983 = vsel %vm2979, %v2977, %v2981
        %v2984 = vsel %vm2980, %v2978, %v2982
        %v2985 = vadd.f32 %v2983, 1.0
        %v2986 = vadd.f32 %v2984, 1.0
        %v2987 = vmul.f32 %v2935, %v2985
        %v2988 = vmul.f32 %v2936, %v2986
        %s2989 = scalar_lea.vmem %s6, 64
        %v2990 = vld [vmem:[%s2989] sm:$0xff]
        %v2991 = vld [vmem:[%s2989 + $0x8] sm:$0xff]
        %v2992 = vld [vmem:[%s2989 + $0x10] sm:$0xff]
        %v2993 = vld [vmem:[%s2989 + $0x18] sm:$0xff]
        %v2994 = vld [vmem:[%s2989 + $0x20] sm:$0xff]
        %v2995 = vld [vmem:[%s2989 + $0x28] sm:$0xff]
        %v2996 = vld [vmem:[%s2989 + $0x30] sm:$0xff]
        %v2997 = vld [vmem:[%s2989 + $0x38] sm:$0xff]
        %v2998 = vlaneseq
        %v2999 = vshrl.u32 %v2998, 7
        %v3000 = vsub.s32 7, %v2999
        %v3001 = vrot.slane %v1758, %v3000
        %v3003 = vsel %vm1671, %v2987, 0
        %v3006 = vsel %vm1671, %v2988, 0
        %3008 = vmatprep.subr.mxu0 0.0
        %3009 = vmatpush1.msra.mxu0 %v2990
        %3010 = vmatprep.subr.mxu0 0.0
        %3011 = vmatpush1.msra.mxu0 %v2991
        %3012 = vmatprep.subr.mxu0 0.0
        %3013 = vmatpush1.msra.mxu0 %v2992
        %3014 = vmatprep.subr.mxu0 0.0
        %3015 = vmatpush1.msra.mxu0 %v2993
        %3016 = vmatprep.subr.mxu0 0.0
        %3017 = vmatpush1.msra.mxu0 %v2994
        %3018 = vmatprep.subr.mxu0 0.0
        %3019 = vmatpush1.msra.mxu0 %v2995
        %3020 = vmatprep.subr.mxu0 0.0
        %3021 = vmatpush1.msra.mxu0 %v2996
        %3022 = vmatprep.subr.mxu0 0.0
        %3023 = vmatpush1.msra.mxu0 %v2997
        %3024 = vmatprep.subr.mxu0 0.0
        %3025 = vmatpush1.msra.mxu0 0.0
        %3026 = vmatprep.subr.mxu0 0.0
        %3027 = vmatpush1.msra.mxu0 0.0
        %3028 = vmatprep.subr.mxu0 0.0
        %3029 = vmatpush1.msra.mxu0 0.0
        %3030 = vmatprep.subr.mxu0 0.0
        %3031 = vmatpush1.msra.mxu0 0.0
        %3032 = vmatprep.subr.mxu0 0.0
        %3033 = vmatpush1.msra.mxu0 0.0
        %3034 = vmatprep.subr.mxu0 0.0
        %3035 = vmatpush1.msra.mxu0 0.0
        %3036 = vmatprep.subr.mxu0 0.0
        %3037 = vmatpush1.msra.mxu0 0.0
        %3038 = vmatprep.subr.mxu0 0.0
        %3039 = vmatpush1.msra.mxu0 0.0
        %3040 = vmatprep.subr.mxu0 0.0
        %3041 = vmatpush1.msra.mxu0 0.0
        %3042 = vmatprep.subr.mxu0 0.0
        %3043 = vmatpush1.msra.mxu0 0.0
        %3044 = vmatprep.subr.mxu0 0.0
        %3045 = vmatpush1.msra.mxu0 0.0
        %3046 = vmatprep.subr.mxu0 0.0
        %3047 = vmatpush1.msra.mxu0 0.0
        %3048 = vmatprep.subr.mxu0 0.0
        %3049 = vmatpush1.msra.mxu0 0.0
        %3050 = vmatprep.subr.mxu0 0.0
        %3051 = vmatpush1.msra.mxu0 0.0
        %3052 = vmatprep.subr.mxu0 0.0
        %3053 = vmatpush1.msra.mxu0 0.0
        %3054 = vmatprep.subr.mxu0 0.0
        %3055 = vmatpush1.msra.mxu0 0.0
        %3056 = vmatprep.subr.mxu0 0.0
        %3057 = vmatpush1.msra.mxu0 0.0
        %3058 = vmatprep.subr.mxu0 0.0
        %3059 = vmatpush1.msra.mxu0 0.0
        %3060 = vmatprep.subr.mxu0 0.0
        %3061 = vmatpush1.msra.mxu0 0.0
        %3062 = vmatprep.subr.mxu0 0.0
        %3063 = vmatpush1.msra.mxu0 0.0
        %3064 = vmatprep.subr.mxu0 0.0
        %3065 = vmatpush1.msra.mxu0 0.0
        %3066 = vmatprep.subr.mxu0 0.0
        %3067 = vmatpush1.msra.mxu0 0.0
        %3068 = vmatprep.subr.mxu0 0.0
        %3069 = vmatpush1.msra.mxu0 0.0
        %3070 = vmatprep.subr.mxu0 0.0
        %3071 = vmatpush1.msra.mxu0 0.0
        %3072 = vmatprep.mubr.f32.mxu0 0.0
        %3073 = vmatmul.mubr.f32.gmra.mrb[0].mxu0 %v3003
        %v3074 = vpop.f32.mrb[0].mxu0
        %v3075 = vadd.f32 %v3001, %v3074
        %v3076 = vpop.f32.mrb[0].mxu0
        %3077 = vmatprep.mubr.f32.mxu0 0.0
        %3078 = vmatmul.mubr.f32.gmra.mrb[0].mxu0 %v3006
        %v3079 = vpop.f32.mrb[0].mxu0
        %v3080 = vadd.f32 %v3001, %v3079
        %v3081 = vpop.f32.mrb[0].mxu0
        %3082 = vdwg.mxu0
        %v3083 = vadd.f32 %v3075, %v2805
        %v3084 = vadd.f32 %v3080, %v2806
        %s3085 = scalar_lea.vmem %s415, 16 [#allocation9]
        %3086 = vst.msk [vmem:[%s3085] sm:$0xff] %vm427, %v3083
        %3087 = vst.msk [vmem:[%s3085 + $0x8] sm:$0xff] %vm427, %v3084
        %s3088 = scalar_lea.vmem %s7, 16
        %v3089 = vld [vmem:[%s3088] sm:$0xff]
        %v3090 = vsel %vm427, %v3083, 0.0
        %3091 = vadd.xlane.f32.xlu0 %v3090
        %v3092 = vpop.xlane.xlu0 %3091
        %v3093 = vsel %vm427, %v3084, 0.0
        %3094 = vadd.xlane.f32.xlu0 %v3093
        %v3095 = vpop.xlane.xlu0 %3094
        %v3096 = vmul.f32 %v3092, %v434
        %v3097 = vmul.f32 %v3095, %v434
        %v3098 = vsub.f32 %v3083, %v3096
        %v3099 = vsub.f32 %v3084, %v3097
        %v3100 = vmul.f32 %v3098, %v3098
        %v3101 = vmul.f32 %v3099, %v3099
        %v3102 = vsel %vm427, %v3100, 0.0
        %3103 = vadd.xlane.f32.xlu0 %v3102
        %v3104 = vpop.xlane.xlu0 %3103
        %v3105 = vsel %vm427, %v3101, 0.0
        %3106 = vadd.xlane.f32.xlu0 %v3105
        %v3107 = vpop.xlane.xlu0 %3106
        %v3108 = vmul.f32 %v3104, %v434
        %v3109 = vmul.f32 %v3107, %v434
        %v3110 = vadd.f32 %v3108, 1e-05
        %v3111 = vadd.f32 %v3109, 1e-05
        %v3112 = vrsqrt.pop %v3110
        %v3113 = vrsqrt.pop %v3111
        %v3114 = vmul.f32 %v3098, %v3112
        %v3115 = vmul.f32 %v3099, %v3113
        %v3116 = vlaneseq
        %v3117 = vshrl.u32 %v3116, 7
        %v3118 = vsub.s32 0, %v3117
        %v3119 = vrot.slane %v3089, %v3118
        %v3120 = vmul.f32 %v3114, %v3119
        %v3121 = vmul.f32 %v3115, %v3119
        %v3122 = vlaneseq
        %v3123 = vshrl.u32 %v3122, 7
        %v3124 = vsub.s32 1, %v3123
        %v3125 = vrot.slane %v3089, %v3124
        %v3126 = vadd.f32 %v3120, %v3125
        %v3127 = vadd.f32 %v3121, %v3125
        %3128 = vst.msk [vmem:[%s408] sm:$0xff] %vm427, %v3126
        %3129 = vst.msk [vmem:[%s408 + $0x8] sm:$0xff] %vm427, %v3127
        %s3130 = sand.u32 %s219, 1
        %s3131 = scalar_lea.sflag [#allocation4], %s3130
        %s3132 = sand.u32 %s219, 1
        %s3133 = smul.addr %s3132, 16
        %s3134 = scalar_lea.vmem [#allocation8], %s3133
        %s3135 = sand.u32 %s245, 1
        %s3136 = scalar_lea.sflag [#allocation10], %s3135
        %s3137 = sand.u32 %s245, 1
        %s3138 = smul.addr %s3137, 32
        %s3139 = scalar_lea.vmem [#allocation9], %s3138
        // Predicated region
        $region65: #{tpu_custom_call.1} parent=51 // pred_check
          %p3140 = pneg %p229
        $region66: #{tpu_custom_call.1} parent=51 // pred_check_branch
          %3142 = sbr.rel (%p3140) target = $region68
        $region67: #{tpu_custom_call.1} parent=51 // pred_region
          %s3144 = ssub.s32 256, 256
          %3145 = vsyncadd %s3131, %s3144
          %s3146 = smul.addr %s33, 2
          %s3147 = smul.addr %s3146, 128
          %s3148 = scalar_lea.hbm %s8, %s3147
          %s3149 = sshll.u32 %s3134, 4
          %s3150 = int_to_ptr.vmem [resolvable:$true] %s3149
          %3155 = dma.vmem_to_hbm [thread:$0]  %s3150, 256, %s3148, %s3131, 128, 128, 8
        $region68: #{tpu_custom_call.1} parent=51 // pred_fallthru
          _
        // Predicated region
        $region69: #{tpu_custom_call.1} parent=51 // pred_check
          %p3156 = pneg %p255
        $region70: #{tpu_custom_call.1} parent=51 // pred_check_branch
          %3158 = sbr.rel (%p3156) target = $region72
        $region71: #{tpu_custom_call.1} parent=51 // pred_region
          #allocation12 [shape = 'u32[6]{0}', space=smem, size = 0x18, scoped, tag = 'DMA stride descriptor']
          %s3160 = ssub.s32 512, 512
          %3161 = vsyncadd %s3136, %s3160
          %s3162 = smul.addr %s33, 2
          %s3163 = smul.addr %s3162, 128
          %s3164 = scalar_lea.hbm %s9, %s3163
          %s3166 = sshll.u32 1, 14
          %s3167 = sxor.u32 4294967295, %s3166
          %s3170 = sshll.u32 7, 18
          %s3171 = sxor.u32 4294967295, %s3170
          %s3172 = sand.u32 0, %s3171
          %s3174 = sor.u32 %s3172, 0
          %s3176 = sshll.u32 3, 24
          %s3177 = sxor.u32 4294967295, %s3176
          %s3178 = sand.u32 %s3174, %s3177
          %s3180 = sor.u32 %s3178, 0
          %s3181 = sshll.u32 %s3139, 4
          %s3182 = int_to_ptr.vmem [resolvable:$true] %s3181
          %3188 = sst [smem:[#allocation12]] 256
          %s3189 = scalar_lea.smem [#allocation12], 1
          %3190 = sst [smem:[%s3189]] 512
          %s3191 = scalar_lea.smem [#allocation12], 2
          %3192 = sst [smem:[%s3191]] 2
          %s3193 = scalar_lea.smem [#allocation12], 3
          %3194 = sst [smem:[%s3193]] 128
          %s3195 = scalar_lea.smem [#allocation12], 4
          %3196 = sst [smem:[%s3195]] 128
          %s3197 = scalar_lea.smem [#allocation12], 5
          %3198 = sst [smem:[%s3197]] 8
          %3200 = dma.general %s3182, 512, %s3164, %s3136, [#allocation11], [#allocation12], %s3180, 0
        $region72: #{tpu_custom_call.1} parent=51 // pred_fallthru
          _
      $region52: #{tpu_custom_call.1} parent=5 // pred_fallthru
        _
      %p3201 = scmp.le.s32.totalorder 2, %s28
      // Predicated region
      $region73: #{tpu_custom_call.1} parent=5 // pred_check
        %p3202 = pneg %p3201
      $region74: #{tpu_custom_call.1} parent=5 // pred_check_branch
        %3204 = sbr.rel (%p3202) target = $region76
      $region75: #{tpu_custom_call.1} parent=5 // pred_region
        %s3205 = ssub.s32 %s28, 2
        // Predicated region
        $region77: #{tpu_custom_call.1} parent=75 // pred_check
          %p3206 = pneg %p235
        $region78: #{tpu_custom_call.1} parent=75 // pred_check_branch
          %3208 = sbr.rel (%p3206) target = $region80
        $region79: #{tpu_custom_call.1} parent=75 // pred_region
          %s3209 = sand.u32 %s220, 1
          %s3210 = scalar_lea.sflag [#allocation4], %s3209
          %s3211 = sand.u32 %s220, 1
          %s3212 = smul.addr %s3211, 16
          %s3213 = scalar_lea.vmem [#allocation8], %s3212
          %3214 = dma.done %s3210, 256
        $region80: #{tpu_custom_call.1} parent=75 // pred_fallthru
          _
        // Predicated region
        $region81: #{tpu_custom_call.1} parent=75 // pred_check
          %p3215 = pneg %p261
        $region82: #{tpu_custom_call.1} parent=75 // pred_check_branch
          %3217 = sbr.rel (%p3215) target = $region84
        $region83: #{tpu_custom_call.1} parent=75 // pred_region
          %s3218 = sand.u32 %s246, 1
          %s3219 = scalar_lea.sflag [#allocation10], %s3218
          %s3220 = sand.u32 %s246, 1
          %s3221 = smul.addr %s3220, 32
          %s3222 = scalar_lea.vmem [#allocation9], %s3221
          %3223 = dma.done %s3219, 512
        $region84: #{tpu_custom_call.1} parent=75 // pred_fallthru
          _
      $region76: #{tpu_custom_call.1} parent=5 // pred_fallthru
        _
    $region6: #{tpu_custom_call.1} parent=1 // loop_footer
      %s32 = sadd.s32 1, %s28
    $region7: #{tpu_custom_call.1} parent=1 // loop_footer_branch
      %27 = sbr.rel target = $region3
    $region8: #{tpu_custom_call.1} parent=1 // loop_exit
      _
    %3224 = vsyncpa [#allocation3], 1
    %s3225 = scalar_lea.sflag [#allocation3], 1
    %3226 = vsyncpa %s3225, 1
    %3227 = vsyncpa [#allocation6], 1
    %s3228 = scalar_lea.sflag [#allocation6], 1
    %3229 = vsyncpa %s3228, 1
    %3230 = vsyncpa [#allocation4], 1
    %s3231 = scalar_lea.sflag [#allocation4], 1
    %3232 = vsyncpa %s3231, 1
    %3233 = vsyncpa [#allocation10], 1
    %s3234 = scalar_lea.sflag [#allocation10], 1
    %3235 = vsyncpa %s3234, 1

</llo_original>
